<compile_context>
chip_gen: v7x
topology: tpu7x:2x2x1
jax: 0.10.0
libtpu: 0.0.40
codegen_flags: <defaults>
</compile_context>

<pallas_src>
import jax
import jax.numpy as jnp
from jax import lax
from jax.experimental import pallas as pl
from jax.experimental.pallas import tpu as pltpu

STATE_DIM = 10
NUM_ROUNDS = 3
NUM_FEATURES = 3
H1, H2 = 48, 96
HOUT = 100
OUT_DIM = 2
BN_EPS = 1e-5
SOFTPLUS_THRESHOLD = 20.0

# lane-padded (128) feature dims used inside the kernel
SD_P = 128
H1_P = 128
H2_P = 128
HO_P = 128
FEAT_COLS = 4          # [edge_len, coord_diff, dot_diff, 1(bias)]


def _round_up(x, m):
    return (x + m - 1) // m * m


def _pad2(a, rows, cols):
    r, c = a.shape
    return jnp.pad(a, ((0, rows - r), (0, cols - c)))


def _tile_bytes(rows, cols, itemsize):
    # VMEM footprint of one (rows, cols) tile of the given dtype width.
    sub = 8 * (4 // itemsize)          # f32->8, bf16->16, int8->32 sublanes
    return _round_up(max(rows, 1), sub) * _round_up(max(cols, 1), 128) * itemsize


def _vmem_capacity_bytes():
    try:
        cap = getattr(pltpu.get_tpu_info(), "vmem_capacity_bytes", None)
        if cap:
            return int(cap)
    except Exception:
        pass
    return 64 * 1024 * 1024            # conservative default (v7x per-core VMEM)


def _softplus(x):
    # torch.nn.Softplus(beta=1, threshold=20).  log1p via Kahan's trick
    # (exp/log/where only) so the negative tail keeps full f32 precision.
    y = jnp.exp(jnp.minimum(x, SOFTPLUS_THRESHOLD))
    u = 1.0 + y
    d = jnp.where(u == 1.0, jnp.ones_like(u), u - 1.0)
    log1p_y = jnp.where(u == 1.0, y, jnp.log(u) * (y / d))
    return jnp.where(x > SOFTPLUS_THRESHOLD, x, log1p_y)


# ----------------------------------------------------------------------------
# Pallas kernel: one (round, edge-tile) grid step of the forward pass
# ----------------------------------------------------------------------------
def _gnn_kernel(
    gf_ref,            # (TE, Np)   int8 one-hot of node_from (edge tile)
    gt_ref,            # (TE, Np)   int8 one-hot of node_to   (edge tile)
    feat_ref,          # (TE, 4)    f32 [edge_len, coord_diff, dot_diff, 1]
    pool_ref,          # (G,  Np)   bf16 one-hot(node_graph_index).T
    w1a_ref, w1b_ref,                      # message net L1 (state part / feat part, b1 folded)
    w2_ref, b2_ref, w3_ref, b3_ref, w4_ref, b4_ref,
    v1_ref, c1_ref, v2_ref, c2_ref, v3_ref, c3_ref, v4_ref, c4_ref, v5_ref, c5_ref,
    out_ref,           # (G, OUT_DIM)
    state_ref,         # (Np, SD_P) f32 scratch: state snapshot for current round
    acc_ref,           # (Np, SD_P) f32 scratch: this round's scatter-add accumulator
):
    f32 = jnp.float32
    r = pl.program_id(0)   # message-passing round
    t = pl.program_id(1)   # edge tile

    @pl.when(jnp.logical_and(r == 0, t == 0))
    def _init():
        state_ref[...] = jnp.zeros_like(state_ref)
        acc_ref[...] = jnp.zeros_like(acc_ref)
        out_ref[...] = jnp.zeros_like(out_ref)       # defensive init of the output block

    @pl.when(jnp.logical_and(r > 0, t == 0))
    def _next_round():
        # previous round's state.index_add_ is complete: merge and restart acc.
        state_ref[...] = state_ref[...] + acc_ref[...]
        acc_ref[...] = jnp.zeros_like(acc_ref)

    # int8 one-hots (exact 0/1) -> f32 once per tile; all math stays f32.
    gf = gf_ref[...].astype(f32)                     # (TE, Np)
    gt = gt_ref[...].astype(f32)                     # (TE, Np)

    # --- message net (BatchNorm folded; Dropout = eval identity) ----------------
    sf = jnp.dot(gf, state_ref[...], preferred_element_type=f32)        # state[node_from]
    ef = jnp.dot(feat_ref[...], w1b_ref[...], preferred_element_type=f32)  # feat@W1b + b1 (folded)
    h = jnp.maximum(jnp.dot(sf, w1a_ref[...], preferred_element_type=f32) + ef, 0.0)
    h = jnp.maximum(jnp.dot(h, w2_ref[...], preferred_element_type=f32) + b2_ref[...], 0.0)
    h = jnp.maximum(jnp.dot(h, w3_ref[...], preferred_element_type=f32) + b3_ref[...], 0.0)
    msg = jnp.dot(h, w4_ref[...], preferred_element_type=f32) + b4_ref[...]    # (TE, SD_P)

    # state.index_add_(0, node_to, message):  acc += gather_to^T @ msg
    # TODO(synk): verify in the bundle dump that Mosaic does not XLU-transpose the
    # big gt tile here; if it does, transpose the small msg instead.
    acc_ref[...] += lax.dot_general(
        gt, msg, dimension_numbers=(((0,), (0,)), ((), ())),
        preferred_element_type=f32)

    # --- final step: graph pooling + output net + softplus on column 1 ----------
    @pl.when(jnp.logical_and(r == pl.num_programs(0) - 1,
                             t == pl.num_programs(1) - 1))
    def _finish():
        final_state = state_ref[...] + acc_ref[...]                             # (Np, SD_P)
        gs = jnp.dot(pool_ref[...].astype(f32), final_state,
                     preferred_element_type=f32)                               # (G, SD_P)
        g = jnp.maximum(jnp.dot(gs, v1_ref[...], preferred_element_type=f32) + c1_ref[...], 0.0)
        g = jnp.maximum(jnp.dot(g, v2_ref[...], preferred_element_type=f32) + c2_ref[...], 0.0)
        g = jnp.maximum(jnp.dot(g, v3_ref[...], preferred_element_type=f32) + c3_ref[...], 0.0)
        g = jnp.maximum(jnp.dot(g, v4_ref[...], preferred_element_type=f32) + c4_ref[...], 0.0)
        ev = jnp.dot(g, v5_ref[...], preferred_element_type=f32) + c5_ref[...]  # (G, 2)
        col = lax.broadcasted_iota(jnp.int32, ev.shape, 1)
        out_ref[...] = jnp.where(col < 1, ev, _softplus(ev))


# ----------------------------------------------------------------------------
# Wrapper
# ----------------------------------------------------------------------------
def gnn_forward(params, coords, edge_vectors, edge_lengths,
                node_from, node_to, node_graph_index, num_graphs,
                edge_tile=None):
    (w1a, w1b, b1, w2, b2, w3, b3, w4, b4,
     v1, c1, v2, c2, v3, c3, v4, c4, v5, c5) = params

    f32 = jnp.float32
    n_nodes = coords.shape[0]
    n_edges = node_from.shape[0]

    # --- node padding: multiple of 128 (lane dim / MXU K dim of the one-hots) ---
    n_pad = _round_up(n_nodes, 128)

    # --- lane-pad narrow weights to 128 with zeros (mathematically exact);
    #     fold b1 into the feature weight via the constant-1 feature column. ------
    w1b_ext = jnp.concatenate([w1b, b1], axis=0)          # (4, H1)
    pparams = (
        _pad2(w1a, SD_P, H1_P), _pad2(w1b_ext, FEAT_COLS, H1_P),
        _pad2(w2, H1_P, H2_P), _pad2(b2, 1, H2_P),
        _pad2(w3, H2_P, H2_P), _pad2(b3, 1, H2_P),
        _pad2(w4, H2_P, SD_P), _pad2(b4, 1, SD_P),
        _pad2(v1, SD_P, HO_P), _pad2(c1, 1, HO_P),
        _pad2(v2, HO_P, HO_P), _pad2(c2, 1, HO_P),
        _pad2(v3, HO_P, HO_P), _pad2(c3, 1, HO_P),
        _pad2(v4, HO_P, HO_P), _pad2(c4, 1, HO_P),
        _pad2(v5, HO_P, OUT_DIM), c5.astype(f32),
    )

    # --- graph-pool one-hot (bf16 = exact 0/1, half the resident bytes) ---------
    pool = jnp.pad(jax.nn.one_hot(node_graph_index, num_graphs, dtype=jnp.bfloat16).T,
                   ((0, 0), (0, n_pad - n_nodes)))

    # --- generation-aware VMEM budget & resident-buffer accounting --------------
    vmem_cap = _vmem_capacity_bytes()
    vmem_budget = int(vmem_cap * 0.75)

    weight_bytes = sum(_tile_bytes(p.shape[0], p.shape[1], 4) for p in pparams)
    pool_bytes = _tile_bytes(num_graphs, n_pad, 2)
    out_bytes = _tile_bytes(num_graphs, OUT_DIM, 4)
    scratch_bytes = 2 * _tile_bytes(n_pad, SD_P, 4)   # state + acc (f32)
    resident_bytes = weight_bytes + pool_bytes + out_bytes + scratch_bytes
    # TODO(synk): for very large n_pad the (Np,128) f32 scratch dominates; switch
    # to a transposed (16, Np) layout before it exceeds the VMEM budget.

    # per-edge VMEM of one streamed buffer: two int8 one-hot rows + lane-padded feat row
    stream_per_edge = 2 * n_pad * 1 + 128 * 4

    # --- edge tile selection (resident-slab fast path when it fits) -------------
    e32 = _round_up(max(n_edges, 1), 32)              # int8 sublane packing = 32 rows
    if edge_tile is None:
        if 2 * e32 * stream_per_edge + resident_bytes <= vmem_budget:
            edge_tile = e32                           # whole slab resident: DMA once, reused 3 rounds
        else:
            avail = max(vmem_budget - resident_bytes, 2 * 32 * stream_per_edge)
            cap = max(32, avail // (2 * stream_per_edge))
            cap = int(min(cap, 2048))
            edge_tile = (cap // 256) * 256 if cap >= 256 else (cap // 32) * 32
            edge_tile = max(32, edge_tile)
    else:
        edge_tile = max(32, min(_round_up(int(edge_tile), 32), e32))

    e_pad = _round_up(n_edges, edge_tile)
    n_tiles = e_pad // edge_tile

    # --- one-hot gather matrices in int8 (0/1 exact; minimal DMA + VMEM bytes) ---
    gf = jnp.pad(jax.nn.one_hot(node_from, n_pad, dtype=jnp.int8),
                 ((0, e_pad - n_edges), (0, 0)))
    gt = jnp.pad(jax.nn.one_hot(node_to, n_pad, dtype=jnp.int8),
                 ((0, e_pad - n_edges), (0, 0)))

    # --- precomputed edge geometric features (coords gathers done in the wrapper)
    cd = coords[node_from].astype(f32) - coords[node_to].astype(f32)          # (E, 3)
    coord_diff = jnp.sum(jnp.abs(cd), axis=1, keepdims=True)
    dot_diff = jnp.sum(cd * edge_vectors.astype(f32), axis=1, keepdims=True)  # dot3D
    feat = jnp.concatenate([edge_lengths.reshape(n_edges, 1).astype(f32),
                            coord_diff, dot_diff,
                            jnp.ones((n_edges, 1), f32)], axis=1)             # (E, 4)
    feat_p = jnp.pad(feat, ((0, e_pad - n_edges), (0, 0)))

    # --- VMEM limit: streamed (double-buffered) + resident, no double counting --
    streamed_bytes = 2 * (2 * _tile_bytes(edge_tile, n_pad, 1)
                          + _tile_bytes(edge_tile, FEAT_COLS, 4))
    need = int(1.25 * (streamed_bytes + resident_bytes)) + (2 << 20)
    vmem_limit = int(min(max(need, 16 << 20), vmem_budget))

    edge_specs = [
        pl.BlockSpec((edge_tile, n_pad), lambda r, t: (t, 0)),     # gather_from (int8)
        pl.BlockSpec((edge_tile, n_pad), lambda r, t: (t, 0)),     # gather_to   (int8)
        pl.BlockSpec((edge_tile, FEAT_COLS), lambda r, t: (t, 0)), # edge features
        pl.BlockSpec((num_graphs, n_pad), lambda r, t: (0, 0)),    # pool (loaded once)
    ]
    param_specs = [pl.BlockSpec(p.shape, lambda r, t: (0, 0)) for p in pparams]

    grid_spec = pltpu.PrefetchScalarGridSpec(
        num_scalar_prefetch=0,
        grid=(NUM_ROUNDS, n_tiles),          # rounds outer, edge tiles inner
        in_specs=edge_specs + param_specs,
        out_specs=pl.BlockSpec((num_graphs, OUT_DIM), lambda r, t: (0, 0)),
        scratch_shapes=[pltpu.VMEM((n_pad, SD_P), f32),   # state
                        pltpu.VMEM((n_pad, SD_P), f32)],  # scatter-add accumulator
    )

    # TODO(synk): on v7x, split the edge-tile axis across the two TensorCores
    # (core_parallel) with per-core acc scratch reduced before each round merge.
    return pl.pallas_call(
        _gnn_kernel,
        out_shape=jax.ShapeDtypeStruct((num_graphs, OUT_DIM), f32),
        grid_spec=grid_spec,
        compiler_params=pltpu.CompilerParams(
            dimension_semantics=("arbitrary", "arbitrary"),
            vmem_limit_bytes=vmem_limit,
        ),
    )(gf, gt, feat_p, pool, *pparams)


# ----------------------------------------------------------------------------
# Deterministic parameter construction (xavier-normal weights, small biases)
# ----------------------------------------------------------------------------
def make_params(key):
    def xavier(k, shape):
        fan_in, fan_out = shape
        std = (2.0 / (fan_in + fan_out)) ** 0.5
        return std * jax.random.normal(k, shape, dtype=jnp.float32)

    keys = jax.random.split(key, 20)
    bn_scale = 1.0 / jnp.sqrt(1.0 + BN_EPS)   # folded eval-mode BatchNorm

    # message net
    w1 = xavier(keys[0], (STATE_DIM + NUM_FEATURES, H1)) * bn_scale
    w1a, w1b = w1[:STATE_DIM], w1[STATE_DIM:]
    b1 = 0.01 * jax.random.normal(keys[1], (1, H1), jnp.float32) * bn_scale
    w2 = xavier(keys[2], (H1, H2)) * bn_scale
    b2 = 0.01 * jax.random.normal(keys[3], (1, H2), jnp.float32) * bn_scale
    w3 = xavier(keys[4], (H2, H2)) * bn_scale
    b3 = 0.01 * jax.random.normal(keys[5], (1, H2), jnp.float32) * bn_scale
    w4 = xavier(keys[6], (H2, STATE_DIM))
    b4 = 0.01 * jax.random.normal(keys[7], (1, STATE_DIM), jnp.float32)

    # output net
    v1 = xavier(keys[8], (STATE_DIM, HOUT)); c1 = 0.01 * jax.random.normal(keys[9], (1, HOUT), jnp.float32)
    v2 = xavier(keys[10], (HOUT, HOUT));     c2 = 0.01 * jax.random.normal(keys[11], (1, HOUT), jnp.float32)
    v3 = xavier(keys[12], (HOUT, HOUT));     c3 = 0.01 * jax.random.normal(keys[13], (1, HOUT), jnp.float32)
    v4 = xavier(keys[14], (HOUT, HOUT));     c4 = 0.01 * jax.random.normal(keys[15], (1, HOUT), jnp.float32)
    v5 = xavier(keys[16], (HOUT, OUT_DIM));  c5 = 0.01 * jax.random.normal(keys[17], (1, OUT_DIM), jnp.float32)

    return (w1a, w1b, b1, w2, b2, w3, b3, w4, b4,
            v1, c1, v2, c2, v3, c3, v4, c4, v5, c5)


# ----------------------------------------------------------------------------
# Pure-JAX reference (mirrors the PyTorch forward) for a sanity check
# ----------------------------------------------------------------------------
def reference(params, coords, edge_vectors, edge_lengths,
              node_from, node_to, node_graph_index, num_graphs):
    (w1a, w1b, b1, w2, b2, w3, b3, w4, b4,
     v1, c1, v2, c2, v3, c3, v4, c4, v5, c5) = params
    w1 = jnp.concatenate([w1a, w1b], axis=0)
    n_nodes = coords.shape[0]
    e_len = edge_lengths.reshape(-1, 1)
    cd = coords[node_from] - coords[node_to]
    coord_diff = jnp.sum(jnp.abs(cd), axis=1, keepdims=True)
    dot_diff = jnp.sum(cd * edge_vectors, axis=1, keepdims=True)

    state = jnp.zeros((n_nodes, STATE_DIM), jnp.float32)
    for _ in range(NUM_ROUNDS):
        inp = jnp.concatenate([state[node_from], e_len, coord_diff, dot_diff], axis=1)
        h = jax.nn.relu(inp @ w1 + b1)
        h = jax.nn.relu(h @ w2 + b2)
        h = jax.nn.relu(h @ w3 + b3)
        msg = h @ w4 + b4
        state = state.at[node_to].add(msg)

    gs = jnp.zeros((num_graphs, STATE_DIM), jnp.float32).at[node_graph_index].add(state)
    g = jax.nn.relu(gs @ v1 + c1)
    g = jax.nn.relu(g @ v2 + c2)
    g = jax.nn.relu(g @ v3 + c3)
    g = jax.nn.relu(g @ v4 + c4)
    ev = g @ v5 + c5
    mu, sigma = ev[:, :1], ev[:, 1:]
    sp = jnp.where(sigma > SOFTPLUS_THRESHOLD, sigma,
                   jnp.log1p(jnp.exp(jnp.minimum(sigma, SOFTPLUS_THRESHOLD))))
    return jnp.concatenate([mu, sp], axis=1)


# ----------------------------------------------------------------------------
if __name__ == "__main__":
    key = jax.random.PRNGKey(0)
    k_coord, k_param = jax.random.split(key)

    # Small synthetic graph batch: 2 graphs x 8 nodes, 16 edges per graph.
    NUM_GRAPHS = 2
    NODES_PER_GRAPH = 8
    N = NUM_GRAPHS * NODES_PER_GRAPH

    coords = jax.random.normal(k_coord, (N, 3), jnp.float32)
    node_graph_index = jnp.repeat(jnp.arange(NUM_GRAPHS, dtype=jnp.int32), NODES_PER_GRAPH)

    edges = []
    for gi in range(NUM_GRAPHS):
        base = gi * NODES_PER_GRAPH
        for i in range(NODES_PER_GRAPH):
            edges.append((base + i, base + (i + 1) % NODES_PER_GRAPH))   # (to, from)
            edges.append((base + i, base + (i + 3) % NODES_PER_GRAPH))
    edge_list = jnp.array(edges, dtype=jnp.int32)                        # (E, 2)
    node_to, node_from = edge_list[:, 0], edge_list[:, 1]
    edge_vectors = coords[node_to] - coords[node_from]                   # (E, 3)
    edge_lengths = jnp.linalg.norm(edge_vectors, axis=1, keepdims=True)  # (E, 1)

    params = make_params(k_param)

    out = gnn_forward(params, coords, edge_vectors, edge_lengths,
                      node_from, node_to, node_graph_index, NUM_GRAPHS)  # auto edge_tile
    out = jax.block_until_ready(out)

    ref = reference(params, coords, edge_vectors, edge_lengths,
                    node_from, node_to, node_graph_index, NUM_GRAPHS)

    assert out.shape == (NUM_GRAPHS, OUT_DIM)
    assert jnp.allclose(out, ref, rtol=2e-3, atol=1e-3), (out, ref)
    print("KERNEL_OK")
</pallas_src>

<mosaic_0001>
module attributes {stable_mosaic.version = 11 : i64} {
  func.func @_gnn_kernel(%arg0: i32, %arg1: i32, %arg2: memref<32x128xi8, #tpu.memory_space<vmem>>, %arg3: memref<32x128xi8, #tpu.memory_space<vmem>>, %arg4: memref<32x4xf32, #tpu.memory_space<vmem>>, %arg5: memref<2x128xbf16, #tpu.memory_space<vmem>>, %arg6: memref<128x128xf32, #tpu.memory_space<vmem>>, %arg7: memref<4x128xf32, #tpu.memory_space<vmem>>, %arg8: memref<128x128xf32, #tpu.memory_space<vmem>>, %arg9: memref<1x128xf32, #tpu.memory_space<vmem>>, %arg10: memref<128x128xf32, #tpu.memory_space<vmem>>, %arg11: memref<1x128xf32, #tpu.memory_space<vmem>>, %arg12: memref<128x128xf32, #tpu.memory_space<vmem>>, %arg13: memref<1x128xf32, #tpu.memory_space<vmem>>, %arg14: memref<128x128xf32, #tpu.memory_space<vmem>>, %arg15: memref<1x128xf32, #tpu.memory_space<vmem>>, %arg16: memref<128x128xf32, #tpu.memory_space<vmem>>, %arg17: memref<1x128xf32, #tpu.memory_space<vmem>>, %arg18: memref<128x128xf32, #tpu.memory_space<vmem>>, %arg19: memref<1x128xf32, #tpu.memory_space<vmem>>, %arg20: memref<128x128xf32, #tpu.memory_space<vmem>>, %arg21: memref<1x128xf32, #tpu.memory_space<vmem>>, %arg22: memref<128x2xf32, #tpu.memory_space<vmem>>, %arg23: memref<1x2xf32, #tpu.memory_space<vmem>>, %arg24: memref<2x2xf32, #tpu.memory_space<vmem>>, %arg25: memref<128x128xf32, #tpu.memory_space<vmem>>, %arg26: memref<128x128xf32, #tpu.memory_space<vmem>>) attributes {dimension_semantics = [#tpu.dimension_semantics<arbitrary>, #tpu.dimension_semantics<arbitrary>], iteration_bounds = array<i64: 3, 1>, scalar_prefetch = 0 : i64, scratch_operands = 2 : i64, tpu.core_type = #tpu.core_type<tc>, window_params = [{transform_indices = @transform_0, window_bounds = array<i64: 32, 128>}, {transform_indices = @transform_1, window_bounds = array<i64: 32, 128>}, {transform_indices = @transform_2, window_bounds = array<i64: 32, 4>}, {pipeline_mode = #tpu.pipeline_mode<synchronous>, transform_indices = @transform_3, window_bounds = array<i64: 2, 128>}, {pipeline_mode = #tpu.pipeline_mode<synchronous>, transform_indices = @transform_4, window_bounds = array<i64: 128, 128>}, {pipeline_mode = #tpu.pipeline_mode<synchronous>, transform_indices = @transform_5, window_bounds = array<i64: 4, 128>}, {pipeline_mode = #tpu.pipeline_mode<synchronous>, transform_indices = @transform_6, window_bounds = array<i64: 128, 128>}, {pipeline_mode = #tpu.pipeline_mode<synchronous>, transform_indices = @transform_7, window_bounds = array<i64: 1, 128>}, {pipeline_mode = #tpu.pipeline_mode<synchronous>, transform_indices = @transform_8, window_bounds = array<i64: 128, 128>}, {pipeline_mode = #tpu.pipeline_mode<synchronous>, transform_indices = @transform_9, window_bounds = array<i64: 1, 128>}, {pipeline_mode = #tpu.pipeline_mode<synchronous>, transform_indices = @transform_10, window_bounds = array<i64: 128, 128>}, {pipeline_mode = #tpu.pipeline_mode<synchronous>, transform_indices = @transform_11, window_bounds = array<i64: 1, 128>}, {pipeline_mode = #tpu.pipeline_mode<synchronous>, transform_indices = @transform_12, window_bounds = array<i64: 128, 128>}, {pipeline_mode = #tpu.pipeline_mode<synchronous>, transform_indices = @transform_13, window_bounds = array<i64: 1, 128>}, {pipeline_mode = #tpu.pipeline_mode<synchronous>, transform_indices = @transform_14, window_bounds = array<i64: 128, 128>}, {pipeline_mode = #tpu.pipeline_mode<synchronous>, transform_indices = @transform_15, window_bounds = array<i64: 1, 128>}, {pipeline_mode = #tpu.pipeline_mode<synchronous>, transform_indices = @transform_16, window_bounds = array<i64: 128, 128>}, {pipeline_mode = #tpu.pipeline_mode<synchronous>, transform_indices = @transform_17, window_bounds = array<i64: 1, 128>}, {pipeline_mode = #tpu.pipeline_mode<synchronous>, transform_indices = @transform_18, window_bounds = array<i64: 128, 128>}, {pipeline_mode = #tpu.pipeline_mode<synchronous>, transform_indices = @transform_19, window_bounds = array<i64: 1, 128>}, {pipeline_mode = #tpu.pipeline_mode<synchronous>, transform_indices = @transform_20, window_bounds = array<i64: 128, 2>}, {pipeline_mode = #tpu.pipeline_mode<synchronous>, transform_indices = @transform_21, window_bounds = array<i64: 1, 2>}, {pipeline_mode = #tpu.pipeline_mode<synchronous>, transform_indices = @transform_22, window_bounds = array<i64: 2, 2>}]} {
    %c0_i32 = arith.constant 0 : i32
    %0 = arith.cmpi eq, %arg0, %c0_i32 : i32
    %c0_i32_0 = arith.constant 0 : i32
    %1 = arith.cmpi eq, %arg1, %c0_i32_0 : i32
    %2 = arith.andi %0, %1 : i1
    %3 = arith.extui %2 : i1 to i32
    %c0_i32_1 = arith.constant 0 : i32
    %4 = arith.cmpi ne, %3, %c0_i32_1 : i32
    scf.if %4 {
      %cst_43 = arith.constant 0.000000e+00 : f32
      %52 = vector.broadcast %cst_43 : f32 to vector<128x128xf32>
      %c0_44 = arith.constant 0 : index
      %c0_45 = arith.constant 0 : index
      %53 = vector.load %arg25[%c0_44, %c0_45] : memref<128x128xf32, #tpu.memory_space<vmem>>, vector<128x128xf32>
      tpu.vector_store %arg25[%c0_44, %c0_45], %52 {strides = array<i32>} : memref<128x128xf32, #tpu.memory_space<vmem>>, vector<128x128xf32>,
      %cst_46 = arith.constant 0.000000e+00 : f32
      %54 = vector.broadcast %cst_46 : f32 to vector<128x128xf32>
      %c0_47 = arith.constant 0 : index
      %c0_48 = arith.constant 0 : index
      %55 = vector.load %arg26[%c0_47, %c0_48] : memref<128x128xf32, #tpu.memory_space<vmem>>, vector<128x128xf32>
      tpu.vector_store %arg26[%c0_47, %c0_48], %54 {strides = array<i32>} : memref<128x128xf32, #tpu.memory_space<vmem>>, vector<128x128xf32>,
      %cst_49 = arith.constant 0.000000e+00 : f32
      %56 = vector.broadcast %cst_49 : f32 to vector<2x2xf32>
      %c0_50 = arith.constant 0 : index
      %c0_51 = arith.constant 0 : index
      %57 = vector.load %arg24[%c0_50, %c0_51] : memref<2x2xf32, #tpu.memory_space<vmem>>, vector<2x2xf32>
      tpu.vector_store %arg24[%c0_50, %c0_51], %56 {strides = array<i32>} : memref<2x2xf32, #tpu.memory_space<vmem>>, vector<2x2xf32>,
    } else {
    }
    %c0_i32_2 = arith.constant 0 : i32
    %5 = arith.cmpi sgt, %arg0, %c0_i32_2 : i32
    %c0_i32_3 = arith.constant 0 : i32
    %6 = arith.cmpi eq, %arg1, %c0_i32_3 : i32
    %7 = arith.andi %5, %6 : i1
    %8 = arith.extui %7 : i1 to i32
    %c0_i32_4 = arith.constant 0 : i32
    %9 = arith.cmpi ne, %8, %c0_i32_4 : i32
    scf.if %9 {
      %c0_43 = arith.constant 0 : index
      %c0_44 = arith.constant 0 : index
      %52 = vector.load %arg25[%c0_43, %c0_44] : memref<128x128xf32, #tpu.memory_space<vmem>>, vector<128x128xf32>
      %c0_45 = arith.constant 0 : index
      %c0_46 = arith.constant 0 : index
      %53 = vector.load %arg26[%c0_45, %c0_46] : memref<128x128xf32, #tpu.memory_space<vmem>>, vector<128x128xf32>
      %54 = arith.addf %52, %53 : vector<128x128xf32>
      %c0_47 = arith.constant 0 : index
      %c0_48 = arith.constant 0 : index
      %55 = vector.load %arg25[%c0_47, %c0_48] : memref<128x128xf32, #tpu.memory_space<vmem>>, vector<128x128xf32>
      tpu.vector_store %arg25[%c0_47, %c0_48], %54 {strides = array<i32>} : memref<128x128xf32, #tpu.memory_space<vmem>>, vector<128x128xf32>,
      %cst_49 = arith.constant 0.000000e+00 : f32
      %56 = vector.broadcast %cst_49 : f32 to vector<128x128xf32>
      %c0_50 = arith.constant 0 : index
      %c0_51 = arith.constant 0 : index
      %57 = vector.load %arg26[%c0_50, %c0_51] : memref<128x128xf32, #tpu.memory_space<vmem>>, vector<128x128xf32>
      tpu.vector_store %arg26[%c0_50, %c0_51], %56 {strides = array<i32>} : memref<128x128xf32, #tpu.memory_space<vmem>>, vector<128x128xf32>,
    } else {
    }
    %c0 = arith.constant 0 : index
    %c0_5 = arith.constant 0 : index
    %10 = vector.load %arg2[%c0, %c0_5] : memref<32x128xi8, #tpu.memory_space<vmem>>, vector<32x128xi8>
    %11 = arith.sitofp %10 : vector<32x128xi8> to vector<32x128xf32>
    %c0_6 = arith.constant 0 : index
    %c0_7 = arith.constant 0 : index
    %12 = vector.load %arg3[%c0_6, %c0_7] : memref<32x128xi8, #tpu.memory_space<vmem>>, vector<32x128xi8>
    %13 = arith.sitofp %12 : vector<32x128xi8> to vector<32x128xf32>
    %c0_8 = arith.constant 0 : index
    %c0_9 = arith.constant 0 : index
    %14 = vector.load %arg25[%c0_8, %c0_9] : memref<128x128xf32, #tpu.memory_space<vmem>>, vector<128x128xf32>
    %cst = arith.constant dense<0.000000e+00> : vector<32x128xf32>
    %15 = tpu.matmul %11, %14, %cst {dimension_numbers = #tpu.dot_dimension_numbers<[1], [0], [0], [1], [0, 0, 1, 1], [], []>} : vector<32x128xf32>, vector<128x128xf32>, vector<32x128xf32> -> vector<32x128xf32>
    %c0_10 = arith.constant 0 : index
    %c0_11 = arith.constant 0 : index
    %16 = vector.load %arg4[%c0_10, %c0_11] : memref<32x4xf32, #tpu.memory_space<vmem>>, vector<32x4xf32>
    %c0_12 = arith.constant 0 : index
    %c0_13 = arith.constant 0 : index
    %17 = vector.load %arg7[%c0_12, %c0_13] : memref<4x128xf32, #tpu.memory_space<vmem>>, vector<4x128xf32>
    %cst_14 = arith.constant dense<0.000000e+00> : vector<32x128xf32>
    %18 = tpu.matmul %16, %17, %cst_14 {dimension_numbers = #tpu.dot_dimension_numbers<[1], [0], [0], [1], [0, 0, 1, 1], [], []>} : vector<32x4xf32>, vector<4x128xf32>, vector<32x128xf32> -> vector<32x128xf32>
    %c0_15 = arith.constant 0 : index
    %c0_16 = arith.constant 0 : index
    %19 = vector.load %arg6[%c0_15, %c0_16] : memref<128x128xf32, #tpu.memory_space<vmem>>, vector<128x128xf32>
    %cst_17 = arith.constant dense<0.000000e+00> : vector<32x128xf32>
    %20 = tpu.matmul %15, %19, %cst_17 {dimension_numbers = #tpu.dot_dimension_numbers<[1], [0], [0], [1], [0, 0, 1, 1], [], []>} : vector<32x128xf32>, vector<128x128xf32>, vector<32x128xf32> -> vector<32x128xf32>
    %21 = arith.addf %20, %18 : vector<32x128xf32>
    %cst_18 = arith.constant 0.000000e+00 : f32
    %22 = vector.broadcast %cst_18 : f32 to vector<32x128xf32>
    %23 = arith.maximumf %21, %22 : vector<32x128xf32>
    %c0_19 = arith.constant 0 : index
    %c0_20 = arith.constant 0 : index
    %24 = vector.load %arg8[%c0_19, %c0_20] : memref<128x128xf32, #tpu.memory_space<vmem>>, vector<128x128xf32>
    %cst_21 = arith.constant dense<0.000000e+00> : vector<32x128xf32>
    %25 = tpu.matmul %23, %24, %cst_21 {dimension_numbers = #tpu.dot_dimension_numbers<[1], [0], [0], [1], [0, 0, 1, 1], [], []>} : vector<32x128xf32>, vector<128x128xf32>, vector<32x128xf32> -> vector<32x128xf32>
    %c0_22 = arith.constant 0 : index
    %c0_23 = arith.constant 0 : index
    %26 = vector.load %arg9[%c0_22, %c0_23] : memref<1x128xf32, #tpu.memory_space<vmem>>, vector<1x128xf32>
    %27 = vector.broadcast %26 : vector<1x128xf32> to vector<32x128xf32>
    %28 = arith.addf %25, %27 : vector<32x128xf32>
    %cst_24 = arith.constant 0.000000e+00 : f32
    %29 = vector.broadcast %cst_24 : f32 to vector<32x128xf32>
    %30 = arith.maximumf %28, %29 : vector<32x128xf32>
    %c0_25 = arith.constant 0 : index
    %c0_26 = arith.constant 0 : index
    %31 = vector.load %arg10[%c0_25, %c0_26] : memref<128x128xf32, #tpu.memory_space<vmem>>, vector<128x128xf32>
    %cst_27 = arith.constant dense<0.000000e+00> : vector<32x128xf32>
    %32 = tpu.matmul %30, %31, %cst_27 {dimension_numbers = #tpu.dot_dimension_numbers<[1], [0], [0], [1], [0, 0, 1, 1], [], []>} : vector<32x128xf32>, vector<128x128xf32>, vector<32x128xf32> -> vector<32x128xf32>
    %c0_28 = arith.constant 0 : index
    %c0_29 = arith.constant 0 : index
    %33 = vector.load %arg11[%c0_28, %c0_29] : memref<1x128xf32, #tpu.memory_space<vmem>>, vector<1x128xf32>
    %34 = vector.broadcast %33 : vector<1x128xf32> to vector<32x128xf32>
    %35 = arith.addf %32, %34 : vector<32x128xf32>
    %cst_30 = arith.constant 0.000000e+00 : f32
    %36 = vector.broadcast %cst_30 : f32 to vector<32x128xf32>
    %37 = arith.maximumf %35, %36 : vector<32x128xf32>
    %c0_31 = arith.constant 0 : index
    %c0_32 = arith.constant 0 : index
    %38 = vector.load %arg12[%c0_31, %c0_32] : memref<128x128xf32, #tpu.memory_space<vmem>>, vector<128x128xf32>
    %cst_33 = arith.constant dense<0.000000e+00> : vector<32x128xf32>
    %39 = tpu.matmul %37, %38, %cst_33 {dimension_numbers = #tpu.dot_dimension_numbers<[1], [0], [0], [1], [0, 0, 1, 1], [], []>} : vector<32x128xf32>, vector<128x128xf32>, vector<32x128xf32> -> vector<32x128xf32>
    %c0_34 = arith.constant 0 : index
    %c0_35 = arith.constant 0 : index
    %40 = vector.load %arg13[%c0_34, %c0_35] : memref<1x128xf32, #tpu.memory_space<vmem>>, vector<1x128xf32>
    %41 = vector.broadcast %40 : vector<1x128xf32> to vector<32x128xf32>
    %42 = arith.addf %39, %41 : vector<32x128xf32>
    %c0_36 = arith.constant 0 : index
    %c0_37 = arith.constant 0 : index
    %43 = vector.load %arg26[%c0_36, %c0_37] : memref<128x128xf32, #tpu.memory_space<vmem>>, vector<128x128xf32>
    %cst_38 = arith.constant dense<0.000000e+00> : vector<128x128xf32>
    %44 = tpu.matmul %13, %42, %cst_38 {dimension_numbers = #tpu.dot_dimension_numbers<[0], [0], [1], [1], [0, 1, 1, 1], [], []>} : vector<32x128xf32>, vector<32x128xf32>, vector<128x128xf32> -> vector<128x128xf32>
    %45 = arith.addf %43, %44 : vector<128x128xf32>
    %c0_39 = arith.constant 0 : index
    %c0_40 = arith.constant 0 : index
    %46 = vector.load %arg26[%c0_39, %c0_40] : memref<128x128xf32, #tpu.memory_space<vmem>>, vector<128x128xf32>
    tpu.vector_store %arg26[%c0_39, %c0_40], %45 {strides = array<i32>} : memref<128x128xf32, #tpu.memory_space<vmem>>, vector<128x128xf32>,
    %c2_i32 = arith.constant 2 : i32
    %47 = arith.cmpi eq, %arg0, %c2_i32 : i32
    %c0_i32_41 = arith.constant 0 : i32
    %48 = arith.cmpi eq, %arg1, %c0_i32_41 : i32
    %49 = arith.andi %47, %48 : i1
    %50 = arith.extui %49 : i1 to i32
    %c0_i32_42 = arith.constant 0 : i32
    %51 = arith.cmpi ne, %50, %c0_i32_42 : i32
    scf.if %51 {
      %c0_43 = arith.constant 0 : index
      %c0_44 = arith.constant 0 : index
      %52 = vector.load %arg25[%c0_43, %c0_44] : memref<128x128xf32, #tpu.memory_space<vmem>>, vector<128x128xf32>
      %c0_45 = arith.constant 0 : index
      %c0_46 = arith.constant 0 : index
      %53 = vector.load %arg26[%c0_45, %c0_46] : memref<128x128xf32, #tpu.memory_space<vmem>>, vector<128x128xf32>
      %54 = arith.addf %52, %53 : vector<128x128xf32>
      %c0_47 = arith.constant 0 : index
      %c0_48 = arith.constant 0 : index
      %55 = vector.load %arg5[%c0_47, %c0_48] : memref<2x128xbf16, #tpu.memory_space<vmem>>, vector<2x128xbf16>
      %56 = arith.extf %55 : vector<2x128xbf16> to vector<2x128xf32>
      %cst_49 = arith.constant dense<0.000000e+00> : vector<2x128xf32>
      %57 = tpu.matmul %56, %54, %cst_49 {dimension_numbers = #tpu.dot_dimension_numbers<[1], [0], [0], [1], [0, 0, 1, 1], [], []>} : vector<2x128xf32>, vector<128x128xf32>, vector<2x128xf32> -> vector<2x128xf32>
      %c0_50 = arith.constant 0 : index
      %c0_51 = arith.constant 0 : index
      %58 = vector.load %arg14[%c0_50, %c0_51] : memref<128x128xf32, #tpu.memory_space<vmem>>, vector<128x128xf32>
      %cst_52 = arith.constant dense<0.000000e+00> : vector<2x128xf32>
      %59 = tpu.matmul %57, %58, %cst_52 {dimension_numbers = #tpu.dot_dimension_numbers<[1], [0], [0], [1], [0, 0, 1, 1], [], []>} : vector<2x128xf32>, vector<128x128xf32>, vector<2x128xf32> -> vector<2x128xf32>
      %c0_53 = arith.constant 0 : index
      %c0_54 = arith.constant 0 : index
      %60 = vector.load %arg15[%c0_53, %c0_54] : memref<1x128xf32, #tpu.memory_space<vmem>>, vector<1x128xf32>
      %61 = vector.broadcast %60 : vector<1x128xf32> to vector<2x128xf32>
      %62 = arith.addf %59, %61 : vector<2x128xf32>
      %cst_55 = arith.constant 0.000000e+00 : f32
      %63 = vector.broadcast %cst_55 : f32 to vector<2x128xf32>
      %64 = arith.maximumf %62, %63 : vector<2x128xf32>
      %c0_56 = arith.constant 0 : index
      %c0_57 = arith.constant 0 : index
      %65 = vector.load %arg16[%c0_56, %c0_57] : memref<128x128xf32, #tpu.memory_space<vmem>>, vector<128x128xf32>
      %cst_58 = arith.constant dense<0.000000e+00> : vector<2x128xf32>
      %66 = tpu.matmul %64, %65, %cst_58 {dimension_numbers = #tpu.dot_dimension_numbers<[1], [0], [0], [1], [0, 0, 1, 1], [], []>} : vector<2x128xf32>, vector<128x128xf32>, vector<2x128xf32> -> vector<2x128xf32>
      %c0_59 = arith.constant 0 : index
      %c0_60 = arith.constant 0 : index
      %67 = vector.load %arg17[%c0_59, %c0_60] : memref<1x128xf32, #tpu.memory_space<vmem>>, vector<1x128xf32>
      %68 = vector.broadcast %67 : vector<1x128xf32> to vector<2x128xf32>
      %69 = arith.addf %66, %68 : vector<2x128xf32>
      %cst_61 = arith.constant 0.000000e+00 : f32
      %70 = vector.broadcast %cst_61 : f32 to vector<2x128xf32>
      %71 = arith.maximumf %69, %70 : vector<2x128xf32>
      %c0_62 = arith.constant 0 : index
      %c0_63 = arith.constant 0 : index
      %72 = vector.load %arg18[%c0_62, %c0_63] : memref<128x128xf32, #tpu.memory_space<vmem>>, vector<128x128xf32>
      %cst_64 = arith.constant dense<0.000000e+00> : vector<2x128xf32>
      %73 = tpu.matmul %71, %72, %cst_64 {dimension_numbers = #tpu.dot_dimension_numbers<[1], [0], [0], [1], [0, 0, 1, 1], [], []>} : vector<2x128xf32>, vector<128x128xf32>, vector<2x128xf32> -> vector<2x128xf32>
      %c0_65 = arith.constant 0 : index
      %c0_66 = arith.constant 0 : index
      %74 = vector.load %arg19[%c0_65, %c0_66] : memref<1x128xf32, #tpu.memory_space<vmem>>, vector<1x128xf32>
      %75 = vector.broadcast %74 : vector<1x128xf32> to vector<2x128xf32>
      %76 = arith.addf %73, %75 : vector<2x128xf32>
      %cst_67 = arith.constant 0.000000e+00 : f32
      %77 = vector.broadcast %cst_67 : f32 to vector<2x128xf32>
      %78 = arith.maximumf %76, %77 : vector<2x128xf32>
      %c0_68 = arith.constant 0 : index
      %c0_69 = arith.constant 0 : index
      %79 = vector.load %arg20[%c0_68, %c0_69] : memref<128x128xf32, #tpu.memory_space<vmem>>, vector<128x128xf32>
      %cst_70 = arith.constant dense<0.000000e+00> : vector<2x128xf32>
      %80 = tpu.matmul %78, %79, %cst_70 {dimension_numbers = #tpu.dot_dimension_numbers<[1], [0], [0], [1], [0, 0, 1, 1], [], []>} : vector<2x128xf32>, vector<128x128xf32>, vector<2x128xf32> -> vector<2x128xf32>
      %c0_71 = arith.constant 0 : index
      %c0_72 = arith.constant 0 : index
      %81 = vector.load %arg21[%c0_71, %c0_72] : memref<1x128xf32, #tpu.memory_space<vmem>>, vector<1x128xf32>
      %82 = vector.broadcast %81 : vector<1x128xf32> to vector<2x128xf32>
      %83 = arith.addf %80, %82 : vector<2x128xf32>
      %cst_73 = arith.constant 0.000000e+00 : f32
      %84 = vector.broadcast %cst_73 : f32 to vector<2x128xf32>
      %85 = arith.maximumf %83, %84 : vector<2x128xf32>
      %c0_74 = arith.constant 0 : index
      %c0_75 = arith.constant 0 : index
      %86 = vector.load %arg22[%c0_74, %c0_75] : memref<128x2xf32, #tpu.memory_space<vmem>>, vector<128x2xf32>
      %cst_76 = arith.constant dense<0.000000e+00> : vector<2x2xf32>
      %87 = tpu.matmul %85, %86, %cst_76 {dimension_numbers = #tpu.dot_dimension_numbers<[1], [0], [0], [1], [0, 0, 1, 1], [], []>} : vector<2x128xf32>, vector<128x2xf32>, vector<2x2xf32> -> vector<2x2xf32>
      %c0_77 = arith.constant 0 : index
      %c0_78 = arith.constant 0 : index
      %88 = vector.load %arg23[%c0_77, %c0_78] : memref<1x2xf32, #tpu.memory_space<vmem>>, vector<1x2xf32>
      %89 = vector.broadcast %88 : vector<1x2xf32> to vector<2x2xf32>
      %90 = arith.addf %87, %89 : vector<2x2xf32>
      %91 = tpu.iota {dimensions = array<i32: 1>} : vector<2x2xi32>
      %c1_i32 = arith.constant 1 : i32
      %92 = vector.broadcast %c1_i32 : i32 to vector<2x2xi32>
      %93 = arith.cmpi slt, %91, %92 : vector<2x2xi32>
      %cst_79 = arith.constant 2.000000e+01 : f32
      %94 = vector.broadcast %cst_79 : f32 to vector<2x2xf32>
      %95 = arith.minimumf %90, %94 : vector<2x2xf32>
      %96 = math.exp %95 : vector<2x2xf32>
      %cst_80 = arith.constant 1.000000e+00 : f32
      %97 = vector.broadcast %cst_80 : f32 to vector<2x2xf32>
      %98 = arith.addf %97, %96 : vector<2x2xf32>
      %cst_81 = arith.constant 1.000000e+00 : f32
      %99 = vector.broadcast %cst_81 : f32 to vector<2x2xf32>
      %100 = arith.cmpf oeq, %98, %99 : vector<2x2xf32>
      %cst_82 = arith.constant 1.000000e+00 : f32
      %101 = vector.broadcast %cst_82 : f32 to vector<2x2xf32>
      %cst_83 = arith.constant 1.000000e+00 : f32
      %102 = vector.broadcast %cst_83 : f32 to vector<2x2xf32>
      %103 = arith.subf %98, %102 : vector<2x2xf32>
      %104 = arith.select %100, %101, %103 : vector<2x2xi1>, vector<2x2xf32>
      %cst_84 = arith.constant 1.000000e+00 : f32
      %105 = vector.broadcast %cst_84 : f32 to vector<2x2xf32>
      %106 = arith.cmpf oeq, %98, %105 : vector<2x2xf32>
      %107 = math.log %98 : vector<2x2xf32>
      %108 = arith.divf %96, %104 : vector<2x2xf32>
      %109 = arith.mulf %107, %108 : vector<2x2xf32>
      %110 = arith.select %106, %96, %109 : vector<2x2xi1>, vector<2x2xf32>
      %cst_85 = arith.constant 2.000000e+01 : f32
      %111 = vector.broadcast %cst_85 : f32 to vector<2x2xf32>
      %112 = arith.cmpf ogt, %90, %111 : vector<2x2xf32>
      %113 = arith.select %112, %90, %110 : vector<2x2xi1>, vector<2x2xf32>
      %114 = arith.select %93, %90, %113 : vector<2x2xi1>, vector<2x2xf32>
      %c0_86 = arith.constant 0 : index
      %c0_87 = arith.constant 0 : index
      %115 = vector.load %arg24[%c0_86, %c0_87] : memref<2x2xf32, #tpu.memory_space<vmem>>, vector<2x2xf32>
      tpu.vector_store %arg24[%c0_86, %c0_87], %114 {strides = array<i32>} : memref<2x2xf32, #tpu.memory_space<vmem>>, vector<2x2xf32>,
    } else {
    }
    return
  }
  func.func @transform_0(%arg0: i32, %arg1: i32) -> (i32, i32) {
    %c0_i32 = arith.constant 0 : i32
    %c0_i32_0 = arith.constant 0 : i32
    return %arg1, %c0_i32 : i32, i32
  }
  func.func @transform_1(%arg0: i32, %arg1: i32) -> (i32, i32) {
    %c0_i32 = arith.constant 0 : i32
    %c0_i32_0 = arith.constant 0 : i32
    return %arg1, %c0_i32 : i32, i32
  }
  func.func @transform_2(%arg0: i32, %arg1: i32) -> (i32, i32) {
    %c0_i32 = arith.constant 0 : i32
    %c0_i32_0 = arith.constant 0 : i32
    return %arg1, %c0_i32 : i32, i32
  }
  func.func @transform_3(%arg0: i32, %arg1: i32) -> (i32, i32) {
    %c0_i32 = arith.constant 0 : i32
    %c0_i32_0 = arith.constant 0 : i32
    %c0_i32_1 = arith.constant 0 : i32
    return %c0_i32, %c0_i32_0 : i32, i32
  }
  func.func @transform_4(%arg0: i32, %arg1: i32) -> (i32, i32) {
    %c0_i32 = arith.constant 0 : i32
    %c0_i32_0 = arith.constant 0 : i32
    %c0_i32_1 = arith.constant 0 : i32
    return %c0_i32, %c0_i32_0 : i32, i32
  }
  func.func @transform_5(%arg0: i32, %arg1: i32) -> (i32, i32) {
    %c0_i32 = arith.constant 0 : i32
    %c0_i32_0 = arith.constant 0 : i32
    %c0_i32_1 = arith.constant 0 : i32
    return %c0_i32, %c0_i32_0 : i32, i32
  }
  func.func @transform_6(%arg0: i32, %arg1: i32) -> (i32, i32) {
    %c0_i32 = arith.constant 0 : i32
    %c0_i32_0 = arith.constant 0 : i32
    %c0_i32_1 = arith.constant 0 : i32
    return %c0_i32, %c0_i32_0 : i32, i32
  }
  func.func @transform_7(%arg0: i32, %arg1: i32) -> (i32, i32) {
    %c0_i32 = arith.constant 0 : i32
    %c0_i32_0 = arith.constant 0 : i32
    %c0_i32_1 = arith.constant 0 : i32
    return %c0_i32, %c0_i32_0 : i32, i32
  }
  func.func @transform_8(%arg0: i32, %arg1: i32) -> (i32, i32) {
    %c0_i32 = arith.constant 0 : i32
    %c0_i32_0 = arith.constant 0 : i32
    %c0_i32_1 = arith.constant 0 : i32
    return %c0_i32, %c0_i32_0 : i32, i32
  }
  func.func @transform_9(%arg0: i32, %arg1: i32) -> (i32, i32) {
    %c0_i32 = arith.constant 0 : i32
    %c0_i32_0 = arith.constant 0 : i32
    %c0_i32_1 = arith.constant 0 : i32
    return %c0_i32, %c0_i32_0 : i32, i32
  }
  func.func @transform_10(%arg0: i32, %arg1: i32) -> (i32, i32) {
    %c0_i32 = arith.constant 0 : i32
    %c0_i32_0 = arith.constant 0 : i32
    %c0_i32_1 = arith.constant 0 : i32
    return %c0_i32, %c0_i32_0 : i32, i32
  }
  func.func @transform_11(%arg0: i32, %arg1: i32) -> (i32, i32) {
    %c0_i32 = arith.constant 0 : i32
    %c0_i32_0 = arith.constant 0 : i32
    %c0_i32_1 = arith.constant 0 : i32
    return %c0_i32, %c0_i32_0 : i32, i32
  }
  func.func @transform_12(%arg0: i32, %arg1: i32) -> (i32, i32) {
    %c0_i32 = arith.constant 0 : i32
    %c0_i32_0 = arith.constant 0 : i32
    %c0_i32_1 = arith.constant 0 : i32
    return %c0_i32, %c0_i32_0 : i32, i32
  }
  func.func @transform_13(%arg0: i32, %arg1: i32) -> (i32, i32) {
    %c0_i32 = arith.constant 0 : i32
    %c0_i32_0 = arith.constant 0 : i32
    %c0_i32_1 = arith.constant 0 : i32
    return %c0_i32, %c0_i32_0 : i32, i32
  }
  func.func @transform_14(%arg0: i32, %arg1: i32) -> (i32, i32) {
    %c0_i32 = arith.constant 0 : i32
    %c0_i32_0 = arith.constant 0 : i32
    %c0_i32_1 = arith.constant 0 : i32
    return %c0_i32, %c0_i32_0 : i32, i32
  }
  func.func @transform_15(%arg0: i32, %arg1: i32) -> (i32, i32) {
    %c0_i32 = arith.constant 0 : i32
    %c0_i32_0 = arith.constant 0 : i32
    %c0_i32_1 = arith.constant 0 : i32
    return %c0_i32, %c0_i32_0 : i32, i32
  }
  func.func @transform_16(%arg0: i32, %arg1: i32) -> (i32, i32) {
    %c0_i32 = arith.constant 0 : i32
    %c0_i32_0 = arith.constant 0 : i32
    %c0_i32_1 = arith.constant 0 : i32
    return %c0_i32, %c0_i32_0 : i32, i32
  }
  func.func @transform_17(%arg0: i32, %arg1: i32) -> (i32, i32) {
    %c0_i32 = arith.constant 0 : i32
    %c0_i32_0 = arith.constant 0 : i32
    %c0_i32_1 = arith.constant 0 : i32
    return %c0_i32, %c0_i32_0 : i32, i32
  }
  func.func @transform_18(%arg0: i32, %arg1: i32) -> (i32, i32) {
    %c0_i32 = arith.constant 0 : i32
    %c0_i32_0 = arith.constant 0 : i32
    %c0_i32_1 = arith.constant 0 : i32
    return %c0_i32, %c0_i32_0 : i32, i32
  }
  func.func @transform_19(%arg0: i32, %arg1: i32) -> (i32, i32) {
    %c0_i32 = arith.constant 0 : i32
    %c0_i32_0 = arith.constant 0 : i32
    %c0_i32_1 = arith.constant 0 : i32
    return %c0_i32, %c0_i32_0 : i32, i32
  }
  func.func @transform_20(%arg0: i32, %arg1: i32) -> (i32, i32) {
    %c0_i32 = arith.constant 0 : i32
    %c0_i32_0 = arith.constant 0 : i32
    %c0_i32_1 = arith.constant 0 : i32
    return %c0_i32, %c0_i32_0 : i32, i32
  }
  func.func @transform_21(%arg0: i32, %arg1: i32) -> (i32, i32) {
    %c0_i32 = arith.constant 0 : i32
    %c0_i32_0 = arith.constant 0 : i32
    %c0_i32_1 = arith.constant 0 : i32
    return %c0_i32, %c0_i32_0 : i32, i32
  }
  func.func @transform_22(%arg0: i32, %arg1: i32) -> (i32, i32) {
    %c0_i32 = arith.constant 0 : i32
    %c0_i32_0 = arith.constant 0 : i32
    %c0_i32_1 = arith.constant 0 : i32
    return %c0_i32, %c0_i32_0 : i32, i32
  }
}

</mosaic_0001>

<llo_original>
// kernel: tpu_custom_call.1
$region0: #{tpu_custom_call.1}
  #allocation0 [shape = 'u32[]', space=smem, size = 0x4, offset = 0x4, fixed_abs, tag = 'smem constant byte address 0x4 - core index']
  #allocation1 [shape = 'u32[144,128]{1,0:T(1,128)}', space=vmem, size = 0x12000, scoped, tag = 'internal scratch']
  #allocation2 [shape = 'f32[128,128]{1,0:T(8,128)}', space=vmem, size = 0x10000, scoped, tag = 'scratch operand']
  #allocation3 [shape = 'f32[128,128]{1,0:T(8,128)}', space=vmem, size = 0x10000, scoped, tag = 'scratch operand']
  %s0 = inlined_call_operand.vmem [shape: s8[32,128], index: 0, kind: input, shape index: {}]
  %s1 = inlined_call_operand.vmem [shape: s8[32,128], index: 1, kind: input, shape index: {}]
  %s2 = inlined_call_operand.vmem [shape: f32[32,4], index: 2, kind: input, shape index: {}]
  %s3 = inlined_call_operand.vmem [shape: bf16[2,128], index: 3, kind: input, shape index: {}]
  %s4 = inlined_call_operand.vmem [shape: f32[128,128], index: 4, kind: input, shape index: {}]
  %s5 = inlined_call_operand.vmem [shape: f32[4,128], index: 5, kind: input, shape index: {}]
  %s6 = inlined_call_operand.hbm [shape: f32[128,128], index: 6, kind: input, shape index: {}]
  %s7 = inlined_call_operand.vmem [shape: f32[1,128], index: 7, kind: input, shape index: {}]
  %s8 = inlined_call_operand.hbm [shape: f32[128,128], index: 8, kind: input, shape index: {}]
  %s9 = inlined_call_operand.vmem [shape: f32[1,128], index: 9, kind: input, shape index: {}]
  %s10 = inlined_call_operand.hbm [shape: f32[128,128], index: 10, kind: input, shape index: {}]
  %s11 = inlined_call_operand.vmem [shape: f32[1,128], index: 11, kind: input, shape index: {}]
  %s12 = inlined_call_operand.hbm [shape: f32[128,128], index: 12, kind: input, shape index: {}]
  %s13 = inlined_call_operand.vmem [shape: f32[1,128], index: 13, kind: input, shape index: {}]
  %s14 = inlined_call_operand.hbm [shape: f32[128,128], index: 14, kind: input, shape index: {}]
  %s15 = inlined_call_operand.vmem [shape: f32[1,128], index: 15, kind: input, shape index: {}]
  %s16 = inlined_call_operand.hbm [shape: f32[128,128], index: 16, kind: input, shape index: {}]
  %s17 = inlined_call_operand.vmem [shape: f32[1,128], index: 17, kind: input, shape index: {}]
  %s18 = inlined_call_operand.hbm [shape: f32[128,128], index: 18, kind: input, shape index: {}]
  %s19 = inlined_call_operand.vmem [shape: f32[1,128], index: 19, kind: input, shape index: {}]
  %s20 = inlined_call_operand.vmem [shape: f32[128,2], index: 20, kind: input, shape index: {}]
  %s21 = inlined_call_operand.vmem [shape: f32[1,2], index: 21, kind: input, shape index: {}]
  %s22 = inlined_call_operand.hbm [shape: f32[2,2], index: 22, kind: output, shape index: {}]
  %s23 = sld [smem:[#allocation0]]
  $region161: #{tpu_custom_call.1} parent=0
    _
  %s25 = ssub.s32 1, %s23
  %s26 = scalar_select 0, %s25, %s23
  $region1: #{tpu_custom_call.1} parent=0
    #allocation4 [shape = 'u8[65536]{0}', space=vmem, size = 0x10000, scoped, tag = 'input window, operand 6, single buffered']
    #allocation5 [shape = 's32[2]{0}', space=sflag, size = 0x8, scoped, tag = 'scoped memory for tpu_custom_call.1']
    #allocation6 [shape = 's32[2]{0}', space=sflag, size = 0x8, scoped, tag = 'scoped memory for tpu_custom_call.1']
    #allocation7 [shape = 'u8[65536]{0}', space=vmem, size = 0x10000, scoped, tag = 'input window, operand 8, single buffered']
    #allocation8 [shape = 's32[1]{0}', space=sflag, size = 0x4, scoped, tag = 'scoped memory for tpu_custom_call.1']
    #allocation9 [shape = 'u8[65536]{0}', space=vmem, size = 0x10000, scoped, tag = 'input window, operand 10, single buffered']
    #allocation10 [shape = 'u8[65536]{0}', space=vmem, size = 0x10000, scoped, tag = 'input window, operand 12, single buffered']
    #allocation11 [shape = 's32[1]{0}', space=sflag, size = 0x4, scoped, tag = 'scoped memory for tpu_custom_call.1']
    #allocation12 [shape = 'u8[65536]{0}', space=vmem, size = 0x10000, scoped, tag = 'input window, operand 14, single buffered']
    #allocation13 [shape = 'u8[65536]{0}', space=vmem, size = 0x10000, scoped, tag = 'input window, operand 16, single buffered']
    #allocation14 [shape = 's32[1]{0}', space=sflag, size = 0x4, scoped, tag = 'scoped memory for tpu_custom_call.1']
    #allocation15 [shape = 'u8[65536]{0}', space=vmem, size = 0x10000, scoped, tag = 'input window, operand 18, single buffered']
    #allocation16 [shape = 'u8[1024]{0}', space=vmem, size = 0x400, scoped, tag = 'output window, operand 0, single buffered']
    %27 = vsyncpa [#allocation5], 0
    %28 = vsyncpa [#allocation8], 0
    %29 = vsyncpa [#allocation11], 0
    %30 = vsyncpa [#allocation14], 0
    %31 = vsyncpa [#allocation6], 0
    loop: start=0, step=1, limit=5
    $region2: #{tpu_custom_call.1} parent=1 // loop_pre_header
      _
    $region3: #{tpu_custom_call.1} parent=1 // loop_header
      %s33 = sphi 0, %s37
      %p34 = scmp.ge.s32.totalorder %s33, 5
      %s40 = sphi 0, %s52
      %s41 = sphi 0, %s48
      %s42 = sphi 0, %s40
      %s43 = sphi 0, %s41
      %s44 = sphi 0, %s42
      %s45 = sphi 0, %s43
      %s55 = sphi 0, %s57
      %s58 = sphi 0, %s55
      %s59 = sphi 0, %s58
      %s75 = sphi 0, %s59
      %s81 = sphi 0, %s83
      %s84 = sphi 0, %s81
      %s85 = sphi 0, %s84
      %s101 = sphi 0, %s85
      %s107 = sphi 0, %s109
      %s110 = sphi 0, %s107
      %s111 = sphi 0, %s110
      %s127 = sphi 0, %s111
      %s131 = sphi 0, %s131
      %s133 = sphi 0, %s131
      %s134 = sphi 0, %s133
      %s148 = sphi 0, %s134
      %s152 = sphi 0, %s152
      %s154 = sphi 0, %s152
      %s155 = sphi 0, %s154
      %s169 = sphi 0, %s155
      %s173 = sphi 0, %s173
      %s175 = sphi 0, %s173
      %s176 = sphi 0, %s175
      %s190 = sphi 0, %s176
      %s194 = sphi 0, %s194
      %s196 = sphi 0, %s194
      %s197 = sphi 0, %s196
      %s211 = sphi 0, %s197
      %s215 = sphi 0, %s215
      %s217 = sphi 0, %s215
      %s218 = sphi 0, %s217
      %s232 = sphi 0, %s218
      %s236 = sphi 0, %s236
      %s238 = sphi 0, %s236
      %s239 = sphi 0, %s238
      %s253 = sphi 0, %s239
      %s257 = sphi 0, %s257
      %s259 = sphi 0, %s257
      %s260 = sphi 0, %s259
      %s274 = sphi 0, %s260
      %s278 = sphi 0, %s278
      %s280 = sphi 0, %s278
      %s281 = sphi 0, %s280
      %s295 = sphi 0, %s281
      %s299 = sphi 0, %s299
      %s301 = sphi 0, %s299
      %s302 = sphi 0, %s301
      %s316 = sphi 0, %s302
      %s320 = sphi 0, %s320
      %s322 = sphi 0, %s320
      %s323 = sphi 0, %s322
      %s337 = sphi 0, %s323
      %s341 = sphi 0, %s341
      %s343 = sphi 0, %s341
      %s344 = sphi 0, %s343
      %s358 = sphi 0, %s344
      %s362 = sphi 0, %s362
      %s364 = sphi 0, %s362
      %s365 = sphi 0, %s364
      %s379 = sphi 0, %s365
      %s383 = sphi 0, %s383
      %s385 = sphi 0, %s383
      %s386 = sphi 0, %s385
      %s400 = sphi 0, %s386
      %s404 = sphi 0, %s404
      %s406 = sphi 0, %s404
      %s407 = sphi 0, %s406
      %s421 = sphi 0, %s407
      %s425 = sphi 0, %s425
      %s427 = sphi 0, %s425
      %s428 = sphi 0, %s427
      %s442 = sphi 0, %s428
      %s446 = sphi 0, %s446
      %s448 = sphi 0, %s446
      %s449 = sphi 0, %s448
      %s463 = sphi 0, %s449
      %s467 = sphi 0, %s467
      %s469 = sphi 0, %s467
      %s470 = sphi 0, %s469
      %s484 = sphi 0, %s470
      %s488 = sphi 0, %s488
      %s490 = sphi 0, %s488
      %s491 = sphi 0, %s490
      %s505 = sphi 0, %s491
      %s509 = sphi 0, %s509
      %s511 = sphi 0, %s509
      %s512 = sphi 0, %s511
      %s526 = sphi 0, %s512
      %s530 = sphi 0, %s530
      %s532 = sphi 0, %s530
      %s533 = sphi 0, %s532
      %s547 = sphi 0, %s533
    $region4: #{tpu_custom_call.1} parent=1 // loop_header_branch
      %36 = sbr.rel (%p34) target = $region8
    $region5: #{tpu_custom_call.1} parent=1 // loop_body
      %s38 = ssub.s32 %s33, 1
      %s39 = ssub.s32 %s33, 2
      %s46 = sadd.s32 1, %s41
      %p47 = scmp.ge.s32.totalorder %s46, 1
      %s48 = scalar_select %p47, 0, %s46
      %s49 = sadd.s32 1, %s40
      %s50 = scalar_select %p47, %s49, %s40
      %p51 = scmp.ge.s32.totalorder %s50, 3
      %s52 = scalar_select %p51, 0, %s50
      %s53 = ssub.s32 %s41, %s48
      %p54 = scmp.eq.s32.totalorder %s53, 0
      %s56 = sadd.s32 %s55, 1
      %s57 = scalar_select %p54, %s55, %s56
      %p60 = pneg %p54
      %p61 = scmp.eq.s32.totalorder %s33, 2
      %p62 = por %p60, %p61
      %p63 = scmp.ne.s32.totalorder %s55, %s58
      %p64 = scmp.eq.s32.totalorder %s33, 0
      %p65 = por %p63, %p64
      %p66 = scmp.ne.s32.totalorder %s55, %s58
      %p67 = scmp.eq.s32.totalorder %s38, 2
      %p68 = por %p66, %p67
      %p69 = scmp.ne.s32.totalorder %s58, %s59
      %p70 = scmp.eq.s32.totalorder %s38, 0
      %p71 = por %p69, %p70
      %p72 = scmp.ne.s32.totalorder %s58, %s59
      %p73 = scmp.eq.s32.totalorder %s39, 2
      %p74 = por %p72, %p73
      %p76 = scmp.ne.s32.totalorder %s59, %s75
      %p77 = scmp.eq.s32.totalorder %s39, 0
      %p78 = por %p76, %p77
      %s79 = ssub.s32 %s41, %s48
      %p80 = scmp.eq.s32.totalorder %s79, 0
      %s82 = sadd.s32 %s81, 1
      %s83 = scalar_select %p80, %s81, %s82
      %p86 = pneg %p80
      %p87 = scmp.eq.s32.totalorder %s33, 2
      %p88 = por %p86, %p87
      %p89 = scmp.ne.s32.totalorder %s81, %s84
      %p90 = scmp.eq.s32.totalorder %s33, 0
      %p91 = por %p89, %p90
      %p92 = scmp.ne.s32.totalorder %s81, %s84
      %p93 = scmp.eq.s32.totalorder %s38, 2
      %p94 = por %p92, %p93
      %p95 = scmp.ne.s32.totalorder %s84, %s85
      %p96 = scmp.eq.s32.totalorder %s38, 0
      %p97 = por %p95, %p96
      %p98 = scmp.ne.s32.totalorder %s84, %s85
      %p99 = scmp.eq.s32.totalorder %s39, 2
      %p100 = por %p98, %p99
      %p102 = scmp.ne.s32.totalorder %s85, %s101
      %p103 = scmp.eq.s32.totalorder %s39, 0
      %p104 = por %p102, %p103
      %s105 = ssub.s32 %s41, %s48
      %p106 = scmp.eq.s32.totalorder %s105, 0
      %s108 = sadd.s32 %s107, 1
      %s109 = scalar_select %p106, %s107, %s108
      %p112 = pneg %p106
      %p113 = scmp.eq.s32.totalorder %s33, 2
      %p114 = por %p112, %p113
      %p115 = scmp.ne.s32.totalorder %s107, %s110
      %p116 = scmp.eq.s32.totalorder %s33, 0
      %p117 = por %p115, %p116
      %p118 = scmp.ne.s32.totalorder %s107, %s110
      %p119 = scmp.eq.s32.totalorder %s38, 2
      %p120 = por %p118, %p119
      %p121 = scmp.ne.s32.totalorder %s110, %s111
      %p122 = scmp.eq.s32.totalorder %s38, 0
      %p123 = por %p121, %p122
      %p124 = scmp.ne.s32.totalorder %s110, %s111
      %p125 = scmp.eq.s32.totalorder %s39, 2
      %p126 = por %p124, %p125
      %p128 = scmp.ne.s32.totalorder %s111, %s127
      %p129 = scmp.eq.s32.totalorder %s39, 0
      %p130 = por %p128, %p129
      %s132 = sadd.s32 %s131, 1
      %p135 = scmp.eq.s32.totalorder %s33, 2
      %p136 = scmp.ne.s32.totalorder %s131, %s133
      %p137 = scmp.eq.s32.totalorder %s33, 0
      %p138 = por %p136, %p137
      %p139 = scmp.ne.s32.totalorder %s131, %s133
      %p140 = scmp.eq.s32.totalorder %s38, 2
      %p141 = por %p139, %p140
      %p142 = scmp.ne.s32.totalorder %s133, %s134
      %p143 = scmp.eq.s32.totalorder %s38, 0
      %p144 = por %p142, %p143
      %p145 = scmp.ne.s32.totalorder %s133, %s134
      %p146 = scmp.eq.s32.totalorder %s39, 2
      %p147 = por %p145, %p146
      %p149 = scmp.ne.s32.totalorder %s134, %s148
      %p150 = scmp.eq.s32.totalorder %s39, 0
      %p151 = por %p149, %p150
      %s153 = sadd.s32 %s152, 1
      %p156 = scmp.eq.s32.totalorder %s33, 2
      %p157 = scmp.ne.s32.totalorder %s152, %s154
      %p158 = scmp.eq.s32.totalorder %s33, 0
      %p159 = por %p157, %p158
      %p160 = scmp.ne.s32.totalorder %s152, %s154
      %p161 = scmp.eq.s32.totalorder %s38, 2
      %p162 = por %p160, %p161
      %p163 = scmp.ne.s32.totalorder %s154, %s155
      %p164 = scmp.eq.s32.totalorder %s38, 0
      %p165 = por %p163, %p164
      %p166 = scmp.ne.s32.totalorder %s154, %s155
      %p167 = scmp.eq.s32.totalorder %s39, 2
      %p168 = por %p166, %p167
      %p170 = scmp.ne.s32.totalorder %s155, %s169
      %p171 = scmp.eq.s32.totalorder %s39, 0
      %p172 = por %p170, %p171
      %s174 = sadd.s32 %s173, 1
      %p177 = scmp.eq.s32.totalorder %s33, 2
      %p178 = scmp.ne.s32.totalorder %s173, %s175
      %p179 = scmp.eq.s32.totalorder %s33, 0
      %p180 = por %p178, %p179
      %p181 = scmp.ne.s32.totalorder %s173, %s175
      %p182 = scmp.eq.s32.totalorder %s38, 2
      %p183 = por %p181, %p182
      %p184 = scmp.ne.s32.totalorder %s175, %s176
      %p185 = scmp.eq.s32.totalorder %s38, 0
      %p186 = por %p184, %p185
      %p187 = scmp.ne.s32.totalorder %s175, %s176
      %p188 = scmp.eq.s32.totalorder %s39, 2
      %p189 = por %p187, %p188
      %p191 = scmp.ne.s32.totalorder %s176, %s190
      %p192 = scmp.eq.s32.totalorder %s39, 0
      %p193 = por %p191, %p192
      %s195 = sadd.s32 %s194, 1
      %p198 = scmp.eq.s32.totalorder %s33, 2
      %p199 = scmp.ne.s32.totalorder %s194, %s196
      %p200 = scmp.eq.s32.totalorder %s33, 0
      %p201 = por %p199, %p200
      %p202 = scmp.ne.s32.totalorder %s194, %s196
      %p203 = scmp.eq.s32.totalorder %s38, 2
      %p204 = por %p202, %p203
      %p205 = scmp.ne.s32.totalorder %s196, %s197
      %p206 = scmp.eq.s32.totalorder %s38, 0
      %p207 = por %p205, %p206
      %p208 = scmp.ne.s32.totalorder %s196, %s197
      %p209 = scmp.eq.s32.totalorder %s39, 2
      %p210 = por %p208, %p209
      %p212 = scmp.ne.s32.totalorder %s197, %s211
      %p213 = scmp.eq.s32.totalorder %s39, 0
      %p214 = por %p212, %p213
      %s216 = sadd.s32 %s215, 1
      %p219 = scmp.eq.s32.totalorder %s33, 2
      %p220 = scmp.ne.s32.totalorder %s215, %s217
      %p221 = scmp.eq.s32.totalorder %s33, 0
      %p222 = por %p220, %p221
      %p223 = scmp.ne.s32.totalorder %s215, %s217
      %p224 = scmp.eq.s32.totalorder %s38, 2
      %p225 = por %p223, %p224
      %p226 = scmp.ne.s32.totalorder %s217, %s218
      %p227 = scmp.eq.s32.totalorder %s38, 0
      %p228 = por %p226, %p227
      %p229 = scmp.ne.s32.totalorder %s217, %s218
      %p230 = scmp.eq.s32.totalorder %s39, 2
      %p231 = por %p229, %p230
      %p233 = scmp.ne.s32.totalorder %s218, %s232
      %p234 = scmp.eq.s32.totalorder %s39, 0
      %p235 = por %p233, %p234
      %s237 = sadd.s32 %s236, 1
      %p240 = scmp.eq.s32.totalorder %s33, 2
      %p241 = scmp.ne.s32.totalorder %s236, %s238
      %p242 = scmp.eq.s32.totalorder %s33, 0
      %p243 = por %p241, %p242
      %p244 = scmp.ne.s32.totalorder %s236, %s238
      %p245 = scmp.eq.s32.totalorder %s38, 2
      %p246 = por %p244, %p245
      %p247 = scmp.ne.s32.totalorder %s238, %s239
      %p248 = scmp.eq.s32.totalorder %s38, 0
      %p249 = por %p247, %p248
      %p250 = scmp.ne.s32.totalorder %s238, %s239
      %p251 = scmp.eq.s32.totalorder %s39, 2
      %p252 = por %p250, %p251
      %p254 = scmp.ne.s32.totalorder %s239, %s253
      %p255 = scmp.eq.s32.totalorder %s39, 0
      %p256 = por %p254, %p255
      %s258 = sadd.s32 %s257, 1
      %p261 = scmp.eq.s32.totalorder %s33, 2
      %p262 = scmp.ne.s32.totalorder %s257, %s259
      %p263 = scmp.eq.s32.totalorder %s33, 0
      %p264 = por %p262, %p263
      %p265 = scmp.ne.s32.totalorder %s257, %s259
      %p266 = scmp.eq.s32.totalorder %s38, 2
      %p267 = por %p265, %p266
      %p268 = scmp.ne.s32.totalorder %s259, %s260
      %p269 = scmp.eq.s32.totalorder %s38, 0
      %p270 = por %p268, %p269
      %p271 = scmp.ne.s32.totalorder %s259, %s260
      %p272 = scmp.eq.s32.totalorder %s39, 2
      %p273 = por %p271, %p272
      %p275 = scmp.ne.s32.totalorder %s260, %s274
      %p276 = scmp.eq.s32.totalorder %s39, 0
      %p277 = por %p275, %p276
      %s279 = sadd.s32 %s278, 1
      %p282 = scmp.eq.s32.totalorder %s33, 2
      %p283 = scmp.ne.s32.totalorder %s278, %s280
      %p284 = scmp.eq.s32.totalorder %s33, 0
      %p285 = por %p283, %p284
      %p286 = scmp.ne.s32.totalorder %s278, %s280
      %p287 = scmp.eq.s32.totalorder %s38, 2
      %p288 = por %p286, %p287
      %p289 = scmp.ne.s32.totalorder %s280, %s281
      %p290 = scmp.eq.s32.totalorder %s38, 0
      %p291 = por %p289, %p290
      %p292 = scmp.ne.s32.totalorder %s280, %s281
      %p293 = scmp.eq.s32.totalorder %s39, 2
      %p294 = por %p292, %p293
      %p296 = scmp.ne.s32.totalorder %s281, %s295
      %p297 = scmp.eq.s32.totalorder %s39, 0
      %p298 = por %p296, %p297
      %s300 = sadd.s32 %s299, 1
      %p303 = scmp.eq.s32.totalorder %s33, 2
      %p304 = scmp.ne.s32.totalorder %s299, %s301
      %p305 = scmp.eq.s32.totalorder %s33, 0
      %p306 = por %p304, %p305
      %p307 = scmp.ne.s32.totalorder %s299, %s301
      %p308 = scmp.eq.s32.totalorder %s38, 2
      %p309 = por %p307, %p308
      %p310 = scmp.ne.s32.totalorder %s301, %s302
      %p311 = scmp.eq.s32.totalorder %s38, 0
      %p312 = por %p310, %p311
      %p313 = scmp.ne.s32.totalorder %s301, %s302
      %p314 = scmp.eq.s32.totalorder %s39, 2
      %p315 = por %p313, %p314
      %p317 = scmp.ne.s32.totalorder %s302, %s316
      %p318 = scmp.eq.s32.totalorder %s39, 0
      %p319 = por %p317, %p318
      %s321 = sadd.s32 %s320, 1
      %p324 = scmp.eq.s32.totalorder %s33, 2
      %p325 = scmp.ne.s32.totalorder %s320, %s322
      %p326 = scmp.eq.s32.totalorder %s33, 0
      %p327 = por %p325, %p326
      %p328 = scmp.ne.s32.totalorder %s320, %s322
      %p329 = scmp.eq.s32.totalorder %s38, 2
      %p330 = por %p328, %p329
      %p331 = scmp.ne.s32.totalorder %s322, %s323
      %p332 = scmp.eq.s32.totalorder %s38, 0
      %p333 = por %p331, %p332
      %p334 = scmp.ne.s32.totalorder %s322, %s323
      %p335 = scmp.eq.s32.totalorder %s39, 2
      %p336 = por %p334, %p335
      %p338 = scmp.ne.s32.totalorder %s323, %s337
      %p339 = scmp.eq.s32.totalorder %s39, 0
      %p340 = por %p338, %p339
      %s342 = sadd.s32 %s341, 1
      %p345 = scmp.eq.s32.totalorder %s33, 2
      %p346 = scmp.ne.s32.totalorder %s341, %s343
      %p347 = scmp.eq.s32.totalorder %s33, 0
      %p348 = por %p346, %p347
      %p349 = scmp.ne.s32.totalorder %s341, %s343
      %p350 = scmp.eq.s32.totalorder %s38, 2
      %p351 = por %p349, %p350
      %p352 = scmp.ne.s32.totalorder %s343, %s344
      %p353 = scmp.eq.s32.totalorder %s38, 0
      %p354 = por %p352, %p353
      %p355 = scmp.ne.s32.totalorder %s343, %s344
      %p356 = scmp.eq.s32.totalorder %s39, 2
      %p357 = por %p355, %p356
      %p359 = scmp.ne.s32.totalorder %s344, %s358
      %p360 = scmp.eq.s32.totalorder %s39, 0
      %p361 = por %p359, %p360
      %s363 = sadd.s32 %s362, 1
      %p366 = scmp.eq.s32.totalorder %s33, 2
      %p367 = scmp.ne.s32.totalorder %s362, %s364
      %p368 = scmp.eq.s32.totalorder %s33, 0
      %p369 = por %p367, %p368
      %p370 = scmp.ne.s32.totalorder %s362, %s364
      %p371 = scmp.eq.s32.totalorder %s38, 2
      %p372 = por %p370, %p371
      %p373 = scmp.ne.s32.totalorder %s364, %s365
      %p374 = scmp.eq.s32.totalorder %s38, 0
      %p375 = por %p373, %p374
      %p376 = scmp.ne.s32.totalorder %s364, %s365
      %p377 = scmp.eq.s32.totalorder %s39, 2
      %p378 = por %p376, %p377
      %p380 = scmp.ne.s32.totalorder %s365, %s379
      %p381 = scmp.eq.s32.totalorder %s39, 0
      %p382 = por %p380, %p381
      %s384 = sadd.s32 %s383, 1
      %p387 = scmp.eq.s32.totalorder %s33, 2
      %p388 = scmp.ne.s32.totalorder %s383, %s385
      %p389 = scmp.eq.s32.totalorder %s33, 0
      %p390 = por %p388, %p389
      %p391 = scmp.ne.s32.totalorder %s383, %s385
      %p392 = scmp.eq.s32.totalorder %s38, 2
      %p393 = por %p391, %p392
      %p394 = scmp.ne.s32.totalorder %s385, %s386
      %p395 = scmp.eq.s32.totalorder %s38, 0
      %p396 = por %p394, %p395
      %p397 = scmp.ne.s32.totalorder %s385, %s386
      %p398 = scmp.eq.s32.totalorder %s39, 2
      %p399 = por %p397, %p398
      %p401 = scmp.ne.s32.totalorder %s386, %s400
      %p402 = scmp.eq.s32.totalorder %s39, 0
      %p403 = por %p401, %p402
      %s405 = sadd.s32 %s404, 1
      %p408 = scmp.eq.s32.totalorder %s33, 2
      %p409 = scmp.ne.s32.totalorder %s404, %s406
      %p410 = scmp.eq.s32.totalorder %s33, 0
      %p411 = por %p409, %p410
      %p412 = scmp.ne.s32.totalorder %s404, %s406
      %p413 = scmp.eq.s32.totalorder %s38, 2
      %p414 = por %p412, %p413
      %p415 = scmp.ne.s32.totalorder %s406, %s407
      %p416 = scmp.eq.s32.totalorder %s38, 0
      %p417 = por %p415, %p416
      %p418 = scmp.ne.s32.totalorder %s406, %s407
      %p419 = scmp.eq.s32.totalorder %s39, 2
      %p420 = por %p418, %p419
      %p422 = scmp.ne.s32.totalorder %s407, %s421
      %p423 = scmp.eq.s32.totalorder %s39, 0
      %p424 = por %p422, %p423
      %s426 = sadd.s32 %s425, 1
      %p429 = scmp.eq.s32.totalorder %s33, 2
      %p430 = scmp.ne.s32.totalorder %s425, %s427
      %p431 = scmp.eq.s32.totalorder %s33, 0
      %p432 = por %p430, %p431
      %p433 = scmp.ne.s32.totalorder %s425, %s427
      %p434 = scmp.eq.s32.totalorder %s38, 2
      %p435 = por %p433, %p434
      %p436 = scmp.ne.s32.totalorder %s427, %s428
      %p437 = scmp.eq.s32.totalorder %s38, 0
      %p438 = por %p436, %p437
      %p439 = scmp.ne.s32.totalorder %s427, %s428
      %p440 = scmp.eq.s32.totalorder %s39, 2
      %p441 = por %p439, %p440
      %p443 = scmp.ne.s32.totalorder %s428, %s442
      %p444 = scmp.eq.s32.totalorder %s39, 0
      %p445 = por %p443, %p444
      %s447 = sadd.s32 %s446, 1
      %p450 = scmp.eq.s32.totalorder %s33, 2
      %p451 = scmp.ne.s32.totalorder %s446, %s448
      %p452 = scmp.eq.s32.totalorder %s33, 0
      %p453 = por %p451, %p452
      %p454 = scmp.ne.s32.totalorder %s446, %s448
      %p455 = scmp.eq.s32.totalorder %s38, 2
      %p456 = por %p454, %p455
      %p457 = scmp.ne.s32.totalorder %s448, %s449
      %p458 = scmp.eq.s32.totalorder %s38, 0
      %p459 = por %p457, %p458
      %p460 = scmp.ne.s32.totalorder %s448, %s449
      %p461 = scmp.eq.s32.totalorder %s39, 2
      %p462 = por %p460, %p461
      %p464 = scmp.ne.s32.totalorder %s449, %s463
      %p465 = scmp.eq.s32.totalorder %s39, 0
      %p466 = por %p464, %p465
      %s468 = sadd.s32 %s467, 1
      %p471 = scmp.eq.s32.totalorder %s33, 2
      %p472 = scmp.ne.s32.totalorder %s467, %s469
      %p473 = scmp.eq.s32.totalorder %s33, 0
      %p474 = por %p472, %p473
      %p475 = scmp.ne.s32.totalorder %s467, %s469
      %p476 = scmp.eq.s32.totalorder %s38, 2
      %p477 = por %p475, %p476
      %p478 = scmp.ne.s32.totalorder %s469, %s470
      %p479 = scmp.eq.s32.totalorder %s38, 0
      %p480 = por %p478, %p479
      %p481 = scmp.ne.s32.totalorder %s469, %s470
      %p482 = scmp.eq.s32.totalorder %s39, 2
      %p483 = por %p481, %p482
      %p485 = scmp.ne.s32.totalorder %s470, %s484
      %p486 = scmp.eq.s32.totalorder %s39, 0
      %p487 = por %p485, %p486
      %s489 = sadd.s32 %s488, 1
      %p492 = scmp.eq.s32.totalorder %s33, 2
      %p493 = scmp.ne.s32.totalorder %s488, %s490
      %p494 = scmp.eq.s32.totalorder %s33, 0
      %p495 = por %p493, %p494
      %p496 = scmp.ne.s32.totalorder %s488, %s490
      %p497 = scmp.eq.s32.totalorder %s38, 2
      %p498 = por %p496, %p497
      %p499 = scmp.ne.s32.totalorder %s490, %s491
      %p500 = scmp.eq.s32.totalorder %s38, 0
      %p501 = por %p499, %p500
      %p502 = scmp.ne.s32.totalorder %s490, %s491
      %p503 = scmp.eq.s32.totalorder %s39, 2
      %p504 = por %p502, %p503
      %p506 = scmp.ne.s32.totalorder %s491, %s505
      %p507 = scmp.eq.s32.totalorder %s39, 0
      %p508 = por %p506, %p507
      %s510 = sadd.s32 %s509, 1
      %p513 = scmp.eq.s32.totalorder %s33, 2
      %p514 = scmp.ne.s32.totalorder %s509, %s511
      %p515 = scmp.eq.s32.totalorder %s33, 0
      %p516 = por %p514, %p515
      %p517 = scmp.ne.s32.totalorder %s509, %s511
      %p518 = scmp.eq.s32.totalorder %s38, 2
      %p519 = por %p517, %p518
      %p520 = scmp.ne.s32.totalorder %s511, %s512
      %p521 = scmp.eq.s32.totalorder %s38, 0
      %p522 = por %p520, %p521
      %p523 = scmp.ne.s32.totalorder %s511, %s512
      %p524 = scmp.eq.s32.totalorder %s39, 2
      %p525 = por %p523, %p524
      %p527 = scmp.ne.s32.totalorder %s512, %s526
      %p528 = scmp.eq.s32.totalorder %s39, 0
      %p529 = por %p527, %p528
      %s531 = sadd.s32 %s530, 1
      %p534 = scmp.eq.s32.totalorder %s33, 2
      %p535 = scmp.ne.s32.totalorder %s530, %s532
      %p536 = scmp.eq.s32.totalorder %s33, 0
      %p537 = por %p535, %p536
      %p538 = scmp.ne.s32.totalorder %s530, %s532
      %p539 = scmp.eq.s32.totalorder %s38, 2
      %p540 = por %p538, %p539
      %p541 = scmp.ne.s32.totalorder %s532, %s533
      %p542 = scmp.eq.s32.totalorder %s38, 0
      %p543 = por %p541, %p542
      %p544 = scmp.ne.s32.totalorder %s532, %s533
      %p545 = scmp.eq.s32.totalorder %s39, 2
      %p546 = por %p544, %p545
      %p548 = scmp.ne.s32.totalorder %s533, %s547
      %p549 = scmp.eq.s32.totalorder %s39, 0
      %p550 = por %p548, %p549
      %p551 = scmp.le.s32.totalorder 1, %s33
      %p552 = scmp.lt.s32.totalorder %s33, 4
      %p553 = pnand %p551, %p552
      %p554 = pneg %p553
      // Predicated region
      $region9: #{tpu_custom_call.1} parent=5 // pred_check
        _
      $region10: #{tpu_custom_call.1} parent=5 // pred_check_branch
        %556 = sbr.rel (%p553) target = $region12
      $region11: #{tpu_custom_call.1} parent=5 // pred_region
        %s557 = ssub.s32 %s33, 1
        // Predicated region
        $region13: #{tpu_custom_call.1} parent=11 // pred_check
          %p558 = pneg %p71
        $region14: #{tpu_custom_call.1} parent=11 // pred_check_branch
          %560 = sbr.rel (%p558) target = $region16
        $region15: #{tpu_custom_call.1} parent=11 // pred_region
          %p561 = scmp.lt.s32.totalorder %s43, 0
          %s562 = scalar_select %p561, %s43, 0
          %s563 = smul.addr %s562, 8
          %s564 = scalar_lea.vmem %s0, %s563
        $region16: #{tpu_custom_call.1} parent=11 // pred_fallthru
          _
        // Predicated region
        $region17: #{tpu_custom_call.1} parent=11 // pred_check
          %p565 = pneg %p97
        $region18: #{tpu_custom_call.1} parent=11 // pred_check_branch
          %567 = sbr.rel (%p565) target = $region20
        $region19: #{tpu_custom_call.1} parent=11 // pred_region
          %p568 = scmp.lt.s32.totalorder %s43, 0
          %s569 = scalar_select %p568, %s43, 0
          %s570 = smul.addr %s569, 8
          %s571 = scalar_lea.vmem %s1, %s570
        $region20: #{tpu_custom_call.1} parent=11 // pred_fallthru
          _
        // Predicated region
        $region21: #{tpu_custom_call.1} parent=11 // pred_check
          %p572 = pneg %p123
        $region22: #{tpu_custom_call.1} parent=11 // pred_check_branch
          %574 = sbr.rel (%p572) target = $region24
        $region23: #{tpu_custom_call.1} parent=11 // pred_region
          %s575 = smul.u32 4, %s43
          %p576 = scmp.lt.s32.totalorder %s575, 3
          %s577 = scalar_select %p576, %s575, 3
          %s578 = smul.addr %s577, 8
          %s579 = scalar_lea.vmem %s2, %s578
          %s580 = smul.u32 4, %s43
        $region24: #{tpu_custom_call.1} parent=11 // pred_fallthru
          _
        // Predicated region
        $region25: #{tpu_custom_call.1} parent=11 // pred_check
          %p581 = pneg %p144
        $region26: #{tpu_custom_call.1} parent=11 // pred_check_branch
          %583 = sbr.rel (%p581) target = $region28
        $region27: #{tpu_custom_call.1} parent=11 // pred_region
          _
        $region28: #{tpu_custom_call.1} parent=11 // pred_fallthru
          _
        // Predicated region
        $region29: #{tpu_custom_call.1} parent=11 // pred_check
          %p584 = pneg %p165
        $region30: #{tpu_custom_call.1} parent=11 // pred_check_branch
          %586 = sbr.rel (%p584) target = $region32
        $region31: #{tpu_custom_call.1} parent=11 // pred_region
          _
        $region32: #{tpu_custom_call.1} parent=11 // pred_fallthru
          _
        // Predicated region
        $region33: #{tpu_custom_call.1} parent=11 // pred_check
          %p587 = pneg %p186
        $region34: #{tpu_custom_call.1} parent=11 // pred_check_branch
          %589 = sbr.rel (%p587) target = $region36
        $region35: #{tpu_custom_call.1} parent=11 // pred_region
          _
        $region36: #{tpu_custom_call.1} parent=11 // pred_fallthru
          _
        // Predicated region
        $region37: #{tpu_custom_call.1} parent=11 // pred_check
          %p590 = pneg %p207
        $region38: #{tpu_custom_call.1} parent=11 // pred_check_branch
          %592 = sbr.rel (%p590) target = $region40
        $region39: #{tpu_custom_call.1} parent=11 // pred_region
          %s594 = ssub.s32 2048, 2048
          %595 = vsyncadd [#allocation5], %s594
          %s596 = sshll.u32 [#allocation4], 4
          %s597 = int_to_ptr.vmem [resolvable:$true] %s596
          %602 = dma.hbm_to_vmem [thread:$0]  %s6, 2048, %s597, [#allocation5], 128, 128, 8
        $region40: #{tpu_custom_call.1} parent=11 // pred_fallthru
          _
        // Predicated region
        $region41: #{tpu_custom_call.1} parent=11 // pred_check
          %p603 = pneg %p228
        $region42: #{tpu_custom_call.1} parent=11 // pred_check_branch
          %605 = sbr.rel (%p603) target = $region44
        $region43: #{tpu_custom_call.1} parent=11 // pred_region
          _
        $region44: #{tpu_custom_call.1} parent=11 // pred_fallthru
          _
        // Predicated region
        $region45: #{tpu_custom_call.1} parent=11 // pred_check
          %p606 = pneg %p249
        $region46: #{tpu_custom_call.1} parent=11 // pred_check_branch
          %608 = sbr.rel (%p606) target = $region48
        $region47: #{tpu_custom_call.1} parent=11 // pred_region
          %s610 = ssub.s32 2048, 2048
          %611 = vsyncadd [#allocation8], %s610
          %s612 = sshll.u32 [#allocation7], 4
          %s613 = int_to_ptr.vmem [resolvable:$true] %s612
          %618 = dma.hbm_to_vmem [thread:$0]  %s8, 2048, %s613, [#allocation8], 128, 128, 8
        $region48: #{tpu_custom_call.1} parent=11 // pred_fallthru
          _
        // Predicated region
        $region49: #{tpu_custom_call.1} parent=11 // pred_check
          %p619 = pneg %p270
        $region50: #{tpu_custom_call.1} parent=11 // pred_check_branch
          %621 = sbr.rel (%p619) target = $region52
        $region51: #{tpu_custom_call.1} parent=11 // pred_region
          _
        $region52: #{tpu_custom_call.1} parent=11 // pred_fallthru
          _
        // Predicated region
        $region53: #{tpu_custom_call.1} parent=11 // pred_check
          %p622 = pneg %p291
        $region54: #{tpu_custom_call.1} parent=11 // pred_check_branch
          %624 = sbr.rel (%p622) target = $region56
        $region55: #{tpu_custom_call.1} parent=11 // pred_region
          %s626 = ssub.s32 2048, 2048
          %627 = vsyncadd [#allocation8], %s626
          %s628 = sshll.u32 [#allocation9], 4
          %s629 = int_to_ptr.vmem [resolvable:$true] %s628
          %634 = dma.hbm_to_vmem [thread:$0]  %s10, 2048, %s629, [#allocation8], 128, 128, 8
        $region56: #{tpu_custom_call.1} parent=11 // pred_fallthru
          _
        // Predicated region
        $region57: #{tpu_custom_call.1} parent=11 // pred_check
          %p635 = pneg %p312
        $region58: #{tpu_custom_call.1} parent=11 // pred_check_branch
          %637 = sbr.rel (%p635) target = $region60
        $region59: #{tpu_custom_call.1} parent=11 // pred_region
          _
        $region60: #{tpu_custom_call.1} parent=11 // pred_fallthru
          _
        // Predicated region
        $region61: #{tpu_custom_call.1} parent=11 // pred_check
          %p638 = pneg %p333
        $region62: #{tpu_custom_call.1} parent=11 // pred_check_branch
          %640 = sbr.rel (%p638) target = $region64
        $region63: #{tpu_custom_call.1} parent=11 // pred_region
          %s642 = ssub.s32 2048, 2048
          %643 = vsyncadd [#allocation11], %s642
          %s644 = sshll.u32 [#allocation10], 4
          %s645 = int_to_ptr.vmem [resolvable:$true] %s644
          %650 = dma.hbm_to_vmem [thread:$0]  %s12, 2048, %s645, [#allocation11], 128, 128, 8
        $region64: #{tpu_custom_call.1} parent=11 // pred_fallthru
          _
        // Predicated region
        $region65: #{tpu_custom_call.1} parent=11 // pred_check
          %p651 = pneg %p354
        $region66: #{tpu_custom_call.1} parent=11 // pred_check_branch
          %653 = sbr.rel (%p651) target = $region68
        $region67: #{tpu_custom_call.1} parent=11 // pred_region
          _
        $region68: #{tpu_custom_call.1} parent=11 // pred_fallthru
          _
        // Predicated region
        $region69: #{tpu_custom_call.1} parent=11 // pred_check
          %p654 = pneg %p375
        $region70: #{tpu_custom_call.1} parent=11 // pred_check_branch
          %656 = sbr.rel (%p654) target = $region72
        $region71: #{tpu_custom_call.1} parent=11 // pred_region
          %s658 = ssub.s32 2048, 2048
          %659 = vsyncadd [#allocation11], %s658
          %s660 = sshll.u32 [#allocation12], 4
          %s661 = int_to_ptr.vmem [resolvable:$true] %s660
          %666 = dma.hbm_to_vmem [thread:$0]  %s14, 2048, %s661, [#allocation11], 128, 128, 8
        $region72: #{tpu_custom_call.1} parent=11 // pred_fallthru
          _
        // Predicated region
        $region73: #{tpu_custom_call.1} parent=11 // pred_check
          %p667 = pneg %p396
        $region74: #{tpu_custom_call.1} parent=11 // pred_check_branch
          %669 = sbr.rel (%p667) target = $region76
        $region75: #{tpu_custom_call.1} parent=11 // pred_region
          _
        $region76: #{tpu_custom_call.1} parent=11 // pred_fallthru
          _
        // Predicated region
        $region77: #{tpu_custom_call.1} parent=11 // pred_check
          %p670 = pneg %p417
        $region78: #{tpu_custom_call.1} parent=11 // pred_check_branch
          %672 = sbr.rel (%p670) target = $region80
        $region79: #{tpu_custom_call.1} parent=11 // pred_region
          %s674 = ssub.s32 2048, 2048
          %675 = vsyncadd [#allocation14], %s674
          %s676 = sshll.u32 [#allocation13], 4
          %s677 = int_to_ptr.vmem [resolvable:$true] %s676
          %682 = dma.hbm_to_vmem [thread:$0]  %s16, 2048, %s677, [#allocation14], 128, 128, 8
        $region80: #{tpu_custom_call.1} parent=11 // pred_fallthru
          _
        // Predicated region
        $region81: #{tpu_custom_call.1} parent=11 // pred_check
          %p683 = pneg %p438
        $region82: #{tpu_custom_call.1} parent=11 // pred_check_branch
          %685 = sbr.rel (%p683) target = $region84
        $region83: #{tpu_custom_call.1} parent=11 // pred_region
          _
        $region84: #{tpu_custom_call.1} parent=11 // pred_fallthru
          _
        // Predicated region
        $region85: #{tpu_custom_call.1} parent=11 // pred_check
          %p686 = pneg %p459
        $region86: #{tpu_custom_call.1} parent=11 // pred_check_branch
          %688 = sbr.rel (%p686) target = $region88
        $region87: #{tpu_custom_call.1} parent=11 // pred_region
          %s690 = ssub.s32 2048, 2048
          %691 = vsyncadd [#allocation14], %s690
          %s692 = sshll.u32 [#allocation15], 4
          %s693 = int_to_ptr.vmem [resolvable:$true] %s692
          %698 = dma.hbm_to_vmem [thread:$0]  %s18, 2048, %s693, [#allocation14], 128, 128, 8
        $region88: #{tpu_custom_call.1} parent=11 // pred_fallthru
          _
        // Predicated region
        $region89: #{tpu_custom_call.1} parent=11 // pred_check
          %p699 = pneg %p480
        $region90: #{tpu_custom_call.1} parent=11 // pred_check_branch
          %701 = sbr.rel (%p699) target = $region92
        $region91: #{tpu_custom_call.1} parent=11 // pred_region
          _
        $region92: #{tpu_custom_call.1} parent=11 // pred_fallthru
          _
        // Predicated region
        $region93: #{tpu_custom_call.1} parent=11 // pred_check
          %p702 = pneg %p501
        $region94: #{tpu_custom_call.1} parent=11 // pred_check_branch
          %704 = sbr.rel (%p702) target = $region96
        $region95: #{tpu_custom_call.1} parent=11 // pred_region
          _
        $region96: #{tpu_custom_call.1} parent=11 // pred_fallthru
          _
        // Predicated region
        $region97: #{tpu_custom_call.1} parent=11 // pred_check
          %p705 = pneg %p522
        $region98: #{tpu_custom_call.1} parent=11 // pred_check_branch
          %707 = sbr.rel (%p705) target = $region100
        $region99: #{tpu_custom_call.1} parent=11 // pred_region
          _
        $region100: #{tpu_custom_call.1} parent=11 // pred_fallthru
          _
      $region12: #{tpu_custom_call.1} parent=5 // pred_fallthru
        _
      %p708 = scmp.lt.s32.totalorder %s33, 3
      // Predicated region
      $region101: #{tpu_custom_call.1} parent=5 // pred_check
        %p709 = pneg %p708
      $region102: #{tpu_custom_call.1} parent=5 // pred_check_branch
        %711 = sbr.rel (%p709) target = $region104
      $region103: #{tpu_custom_call.1} parent=5 // pred_region
        _
      $region104: #{tpu_custom_call.1} parent=5 // pred_fallthru
        _
      %p712 = scmp.le.s32.totalorder 1, %s33
      %p713 = scmp.lt.s32.totalorder %s33, 4
      %p714 = pnand %p712, %p713
      %p715 = pneg %p714
      // Predicated region
      $region105: #{tpu_custom_call.1} parent=5 // pred_check
        _
      $region106: #{tpu_custom_call.1} parent=5 // pred_check_branch
        %717 = sbr.rel (%p714) target = $region108
      $region107: #{tpu_custom_call.1} parent=5 // pred_region
        %s718 = ssub.s32 %s33, 1
        // Predicated region
        $region109: #{tpu_custom_call.1} parent=107 // pred_check
          %p719 = pneg %p207
        $region110: #{tpu_custom_call.1} parent=107 // pred_check_branch
          %721 = sbr.rel (%p719) target = $region112
        $region111: #{tpu_custom_call.1} parent=107 // pred_region
          %722 = dma.done [#allocation5], 2048
        $region112: #{tpu_custom_call.1} parent=107 // pred_fallthru
          _
        // Predicated region
        $region113: #{tpu_custom_call.1} parent=107 // pred_check
          %p723 = pneg %p249
        $region114: #{tpu_custom_call.1} parent=107 // pred_check_branch
          %725 = sbr.rel (%p723) target = $region116
        $region115: #{tpu_custom_call.1} parent=107 // pred_region
          %726 = dma.done [#allocation8], 2048
        $region116: #{tpu_custom_call.1} parent=107 // pred_fallthru
          _
        // Predicated region
        $region117: #{tpu_custom_call.1} parent=107 // pred_check
          %p727 = pneg %p291
        $region118: #{tpu_custom_call.1} parent=107 // pred_check_branch
          %729 = sbr.rel (%p727) target = $region120
        $region119: #{tpu_custom_call.1} parent=107 // pred_region
          %730 = dma.done [#allocation8], 2048
        $region120: #{tpu_custom_call.1} parent=107 // pred_fallthru
          _
        // Predicated region
        $region121: #{tpu_custom_call.1} parent=107 // pred_check
          %p731 = pneg %p333
        $region122: #{tpu_custom_call.1} parent=107 // pred_check_branch
          %733 = sbr.rel (%p731) target = $region124
        $region123: #{tpu_custom_call.1} parent=107 // pred_region
          %734 = dma.done [#allocation11], 2048
        $region124: #{tpu_custom_call.1} parent=107 // pred_fallthru
          _
        // Predicated region
        $region125: #{tpu_custom_call.1} parent=107 // pred_check
          %p735 = pneg %p375
        $region126: #{tpu_custom_call.1} parent=107 // pred_check_branch
          %737 = sbr.rel (%p735) target = $region128
        $region127: #{tpu_custom_call.1} parent=107 // pred_region
          %738 = dma.done [#allocation11], 2048
        $region128: #{tpu_custom_call.1} parent=107 // pred_fallthru
          _
        // Predicated region
        $region129: #{tpu_custom_call.1} parent=107 // pred_check
          %p739 = pneg %p417
        $region130: #{tpu_custom_call.1} parent=107 // pred_check_branch
          %741 = sbr.rel (%p739) target = $region132
        $region131: #{tpu_custom_call.1} parent=107 // pred_region
          %742 = dma.done [#allocation14], 2048
        $region132: #{tpu_custom_call.1} parent=107 // pred_fallthru
          _
        // Predicated region
        $region133: #{tpu_custom_call.1} parent=107 // pred_check
          %p743 = pneg %p459
        $region134: #{tpu_custom_call.1} parent=107 // pred_check_branch
          %745 = sbr.rel (%p743) target = $region136
        $region135: #{tpu_custom_call.1} parent=107 // pred_region
          %746 = dma.done [#allocation14], 2048
        $region136: #{tpu_custom_call.1} parent=107 // pred_fallthru
          _
        %p747 = scmp.lt.s32.totalorder %s43, 0
        %s748 = scalar_select %p747, %s43, 0
        %s749 = smul.addr %s748, 8
        %s750 = scalar_lea.vmem %s0, %s749
        %p751 = pneg %p71
        %p752 = pneg %p68
        %p753 = scmp.lt.s32.totalorder %s43, 0
        %s754 = scalar_select %p753, %s43, 0
        %s755 = smul.addr %s754, 8
        %s756 = scalar_lea.vmem %s1, %s755
        %p757 = pneg %p97
        %p758 = pneg %p94
        %s759 = smul.u32 4, %s43
        %p760 = scmp.lt.s32.totalorder %s759, 3
        %s761 = scalar_select %p760, %s759, 3
        %s762 = smul.addr %s761, 8
        %s763 = scalar_lea.vmem %s2, %s762
        %p764 = pneg %p123
        %p765 = pneg %p120
        %p766 = pneg %p144
        %p767 = pneg %p141
        %p768 = pneg %p165
        %p769 = pneg %p162
        %p770 = pneg %p186
        %p771 = pneg %p183
        %p772 = pneg %p207
        %p773 = pneg %p204
        %p774 = pneg %p228
        %p775 = pneg %p225
        %p776 = pneg %p249
        %p777 = pneg %p246
        %p778 = pneg %p270
        %p779 = pneg %p267
        %p780 = pneg %p291
        %p781 = pneg %p288
        %p782 = pneg %p312
        %p783 = pneg %p309
        %p784 = pneg %p333
        %p785 = pneg %p330
        %p786 = pneg %p354
        %p787 = pneg %p351
        %p788 = pneg %p375
        %p789 = pneg %p372
        %p790 = pneg %p396
        %p791 = pneg %p393
        %p792 = pneg %p417
        %p793 = pneg %p414
        %p794 = pneg %p438
        %p795 = pneg %p435
        %p796 = pneg %p459
        %p797 = pneg %p456
        %p798 = pneg %p480
        %p799 = pneg %p477
        %p800 = pneg %p501
        %p801 = pneg %p498
        %p802 = pneg %p522
        %p803 = pneg %p519
        %p804 = pneg %p543
        %p805 = pneg %p540
        %p806 = scmp.lt.s32.totalorder %s43, 0
        %s807 = scalar_select %p806, %s43, 0
        %s808 = smul.addr %s807, 8
        %s809 = scalar_lea.vmem %s0, %s808
        %p810 = scmp.lt.s32.totalorder %s43, 0
        %s811 = scalar_select %p810, %s43, 0
        %s812 = smul.addr %s811, 8
        %s813 = scalar_lea.vmem %s1, %s812
        %s814 = smul.u32 4, %s43
        %p815 = scmp.lt.s32.totalorder %s814, 3
        %s816 = scalar_select %p815, %s814, 3
        %s817 = smul.addr %s816, 8
        %s818 = scalar_lea.vmem %s2, %s817
        %s819 = smul.u32 4, %s43
        %p820 = scmp.eq.s32.totalorder %s42, 0
        %p821 = scmp.eq.s32.totalorder %s43, 0
        %p822 = pnand %p820, %p821
        %p823 = pneg %p822
        // Predicated region
        $region137: #{tpu_custom_call.1} parent=107 // pred_check
          _
        $region138: #{tpu_custom_call.1} parent=107 // pred_check_branch
          %825 = sbr.rel (%p822) target = $region140
        $region139: #{tpu_custom_call.1} parent=107 // pred_region
          %826 = vst [vmem:[#allocation2] sm:$0xff] 0.0
          %827 = vst [vmem:[#allocation2 + $0x8] sm:$0xff] 0.0
          %828 = vst [vmem:[#allocation2 + $0x10] sm:$0xff] 0.0
          %829 = vst [vmem:[#allocation2 + $0x18] sm:$0xff] 0.0
          %830 = vst [vmem:[#allocation2 + $0x20] sm:$0xff] 0.0
          %831 = vst [vmem:[#allocation2 + $0x28] sm:$0xff] 0.0
          %832 = vst [vmem:[#allocation2 + $0x30] sm:$0xff] 0.0
          %833 = vst [vmem:[#allocation2 + $0x38] sm:$0xff] 0.0
          %834 = vst [vmem:[#allocation2 + $0x40] sm:$0xff] 0.0
          %835 = vst [vmem:[#allocation2 + $0x48] sm:$0xff] 0.0
          %836 = vst [vmem:[#allocation2 + $0x50] sm:$0xff] 0.0
          %837 = vst [vmem:[#allocation2 + $0x58] sm:$0xff] 0.0
          %838 = vst [vmem:[#allocation2 + $0x60] sm:$0xff] 0.0
          %839 = vst [vmem:[#allocation2 + $0x68] sm:$0xff] 0.0
          %840 = vst [vmem:[#allocation2 + $0x70] sm:$0xff] 0.0
          %841 = vst [vmem:[#allocation2 + $0x78] sm:$0xff] 0.0
          %842 = vst [vmem:[#allocation3] sm:$0xff] 0.0
          %843 = vst [vmem:[#allocation3 + $0x8] sm:$0xff] 0.0
          %844 = vst [vmem:[#allocation3 + $0x10] sm:$0xff] 0.0
          %845 = vst [vmem:[#allocation3 + $0x18] sm:$0xff] 0.0
          %846 = vst [vmem:[#allocation3 + $0x20] sm:$0xff] 0.0
          %847 = vst [vmem:[#allocation3 + $0x28] sm:$0xff] 0.0
          %848 = vst [vmem:[#allocation3 + $0x30] sm:$0xff] 0.0
          %849 = vst [vmem:[#allocation3 + $0x38] sm:$0xff] 0.0
          %850 = vst [vmem:[#allocation3 + $0x40] sm:$0xff] 0.0
          %851 = vst [vmem:[#allocation3 + $0x48] sm:$0xff] 0.0
          %852 = vst [vmem:[#allocation3 + $0x50] sm:$0xff] 0.0
          %853 = vst [vmem:[#allocation3 + $0x58] sm:$0xff] 0.0
          %854 = vst [vmem:[#allocation3 + $0x60] sm:$0xff] 0.0
          %855 = vst [vmem:[#allocation3 + $0x68] sm:$0xff] 0.0
          %856 = vst [vmem:[#allocation3 + $0x70] sm:$0xff] 0.0
          %857 = vst [vmem:[#allocation3 + $0x78] sm:$0xff] 0.0
          %vm858 = vcmask 9216
          %859 = vst.msk [vmem:[#allocation16] sm:$0x3] %vm858, 0.0
        $region140: #{tpu_custom_call.1} parent=107 // pred_fallthru
          _
        %p860 = scmp.gt.s32.totalorder %s42, 0
        %p861 = pnand %p860, %p821
        %p862 = pneg %p861
        // Predicated region
        $region141: #{tpu_custom_call.1} parent=107 // pred_check
          _
        $region142: #{tpu_custom_call.1} parent=107 // pred_check_branch
          %864 = sbr.rel (%p861) target = $region144
        $region143: #{tpu_custom_call.1} parent=107 // pred_region
          %v865 = vld [vmem:[#allocation2] sm:$0xff]
          %v866 = vld [vmem:[#allocation2 + $0x8] sm:$0xff]
          %v867 = vld [vmem:[#allocation2 + $0x10] sm:$0xff]
          %v868 = vld [vmem:[#allocation2 + $0x18] sm:$0xff]
          %v869 = vld [vmem:[#allocation2 + $0x20] sm:$0xff]
          %v870 = vld [vmem:[#allocation2 + $0x28] sm:$0xff]
          %v871 = vld [vmem:[#allocation2 + $0x30] sm:$0xff]
          %v872 = vld [vmem:[#allocation2 + $0x38] sm:$0xff]
          %v873 = vld [vmem:[#allocation2 + $0x40] sm:$0xff]
          %v874 = vld [vmem:[#allocation2 + $0x48] sm:$0xff]
          %v875 = vld [vmem:[#allocation2 + $0x50] sm:$0xff]
          %v876 = vld [vmem:[#allocation2 + $0x58] sm:$0xff]
          %v877 = vld [vmem:[#allocation2 + $0x60] sm:$0xff]
          %v878 = vld [vmem:[#allocation2 + $0x68] sm:$0xff]
          %v879 = vld [vmem:[#allocation2 + $0x70] sm:$0xff]
          %v880 = vld [vmem:[#allocation2 + $0x78] sm:$0xff]
          %v881 = vld [vmem:[#allocation3] sm:$0xff]
          %v882 = vld [vmem:[#allocation3 + $0x8] sm:$0xff]
          %v883 = vld [vmem:[#allocation3 + $0x10] sm:$0xff]
          %v884 = vld [vmem:[#allocation3 + $0x18] sm:$0xff]
          %v885 = vld [vmem:[#allocation3 + $0x20] sm:$0xff]
          %v886 = vld [vmem:[#allocation3 + $0x28] sm:$0xff]
          %v887 = vld [vmem:[#allocation3 + $0x30] sm:$0xff]
          %v888 = vld [vmem:[#allocation3 + $0x38] sm:$0xff]
          %v889 = vld [vmem:[#allocation3 + $0x40] sm:$0xff]
          %v890 = vld [vmem:[#allocation3 + $0x48] sm:$0xff]
          %v891 = vld [vmem:[#allocation3 + $0x50] sm:$0xff]
          %v892 = vld [vmem:[#allocation3 + $0x58] sm:$0xff]
          %v893 = vld [vmem:[#allocation3 + $0x60] sm:$0xff]
          %v894 = vld [vmem:[#allocation3 + $0x68] sm:$0xff]
          %v895 = vld [vmem:[#allocation3 + $0x70] sm:$0xff]
          %v896 = vld [vmem:[#allocation3 + $0x78] sm:$0xff]
          %v897 = vadd.f32 %v865, %v881
          %v898 = vadd.f32 %v866, %v882
          %v899 = vadd.f32 %v867, %v883
          %v900 = vadd.f32 %v868, %v884
          %v901 = vadd.f32 %v869, %v885
          %v902 = vadd.f32 %v870, %v886
          %v903 = vadd.f32 %v871, %v887
          %v904 = vadd.f32 %v872, %v888
          %v905 = vadd.f32 %v873, %v889
          %v906 = vadd.f32 %v874, %v890
          %v907 = vadd.f32 %v875, %v891
          %v908 = vadd.f32 %v876, %v892
          %v909 = vadd.f32 %v877, %v893
          %v910 = vadd.f32 %v878, %v894
          %v911 = vadd.f32 %v879, %v895
          %v912 = vadd.f32 %v880, %v896
          %913 = vst [vmem:[#allocation2] sm:$0xff] %v897
          %914 = vst [vmem:[#allocation2 + $0x8] sm:$0xff] %v898
          %915 = vst [vmem:[#allocation2 + $0x10] sm:$0xff] %v899
          %916 = vst [vmem:[#allocation2 + $0x18] sm:$0xff] %v900
          %917 = vst [vmem:[#allocation2 + $0x20] sm:$0xff] %v901
          %918 = vst [vmem:[#allocation2 + $0x28] sm:$0xff] %v902
          %919 = vst [vmem:[#allocation2 + $0x30] sm:$0xff] %v903
          %920 = vst [vmem:[#allocation2 + $0x38] sm:$0xff] %v904
          %921 = vst [vmem:[#allocation2 + $0x40] sm:$0xff] %v905
          %922 = vst [vmem:[#allocation2 + $0x48] sm:$0xff] %v906
          %923 = vst [vmem:[#allocation2 + $0x50] sm:$0xff] %v907
          %924 = vst [vmem:[#allocation2 + $0x58] sm:$0xff] %v908
          %925 = vst [vmem:[#allocation2 + $0x60] sm:$0xff] %v909
          %926 = vst [vmem:[#allocation2 + $0x68] sm:$0xff] %v910
          %927 = vst [vmem:[#allocation2 + $0x70] sm:$0xff] %v911
          %928 = vst [vmem:[#allocation2 + $0x78] sm:$0xff] %v912
          %929 = vst [vmem:[#allocation3] sm:$0xff] 0.0
          %930 = vst [vmem:[#allocation3 + $0x8] sm:$0xff] 0.0
          %931 = vst [vmem:[#allocation3 + $0x10] sm:$0xff] 0.0
          %932 = vst [vmem:[#allocation3 + $0x18] sm:$0xff] 0.0
          %933 = vst [vmem:[#allocation3 + $0x20] sm:$0xff] 0.0
          %934 = vst [vmem:[#allocation3 + $0x28] sm:$0xff] 0.0
          %935 = vst [vmem:[#allocation3 + $0x30] sm:$0xff] 0.0
          %936 = vst [vmem:[#allocation3 + $0x38] sm:$0xff] 0.0
          %937 = vst [vmem:[#allocation3 + $0x40] sm:$0xff] 0.0
          %938 = vst [vmem:[#allocation3 + $0x48] sm:$0xff] 0.0
          %939 = vst [vmem:[#allocation3 + $0x50] sm:$0xff] 0.0
          %940 = vst [vmem:[#allocation3 + $0x58] sm:$0xff] 0.0
          %941 = vst [vmem:[#allocation3 + $0x60] sm:$0xff] 0.0
          %942 = vst [vmem:[#allocation3 + $0x68] sm:$0xff] 0.0
          %943 = vst [vmem:[#allocation3 + $0x70] sm:$0xff] 0.0
          %944 = vst [vmem:[#allocation3 + $0x78] sm:$0xff] 0.0
        $region144: #{tpu_custom_call.1} parent=107 // pred_fallthru
          _
        %v945 = vld [vmem:[%s809] sm:$0xff]
        %v946 = vunpack.c.0.s8 %v945
        %v947 = vunpack.c.1.s8 %v945
        %v948 = vunpack.c.2.s8 %v945
        %v949 = vunpack.c.3.s8 %v945
        %v950 = vcvt.s32.f32 %v946
        %v951 = vcvt.s32.f32 %v947
        %v952 = vcvt.s32.f32 %v948
        %v953 = vcvt.s32.f32 %v949
        %v954 = vld [vmem:[%s813] sm:$0xff]
        %v955 = vunpack.c.0.s8 %v954
        %v956 = vunpack.c.1.s8 %v954
        %v957 = vunpack.c.2.s8 %v954
        %v958 = vunpack.c.3.s8 %v954
        %v959 = vcvt.s32.f32 %v955
        %v960 = vcvt.s32.f32 %v956
        %v961 = vcvt.s32.f32 %v957
        %v962 = vcvt.s32.f32 %v958
        %v963 = vld [vmem:[#allocation2] sm:$0xff]
        %v964 = vld [vmem:[#allocation2 + $0x8] sm:$0xff]
        %v965 = vld [vmem:[#allocation2 + $0x10] sm:$0xff]
        %v966 = vld [vmem:[#allocation2 + $0x18] sm:$0xff]
        %v967 = vld [vmem:[#allocation2 + $0x20] sm:$0xff]
        %v968 = vld [vmem:[#allocation2 + $0x28] sm:$0xff]
        %v969 = vld [vmem:[#allocation2 + $0x30] sm:$0xff]
        %v970 = vld [vmem:[#allocation2 + $0x38] sm:$0xff]
        %v971 = vld [vmem:[#allocation2 + $0x40] sm:$0xff]
        %v972 = vld [vmem:[#allocation2 + $0x48] sm:$0xff]
        %v973 = vld [vmem:[#allocation2 + $0x50] sm:$0xff]
        %v974 = vld [vmem:[#allocation2 + $0x58] sm:$0xff]
        %v975 = vld [vmem:[#allocation2 + $0x60] sm:$0xff]
        %v976 = vld [vmem:[#allocation2 + $0x68] sm:$0xff]
        %v977 = vld [vmem:[#allocation2 + $0x70] sm:$0xff]
        %v978 = vld [vmem:[#allocation2 + $0x78] sm:$0xff]
        %979 = vmatprep.subr.mxu0 0.0
        %980 = vmatpush1.msra.mxu0 %v963
        %981 = vmatprep.subr.mxu0 0.0
        %982 = vmatpush1.msra.mxu0 %v964
        %983 = vmatprep.subr.mxu0 0.0
        %984 = vmatpush1.msra.mxu0 %v965
        %985 = vmatprep.subr.mxu0 0.0
        %986 = vmatpush1.msra.mxu0 %v966
        %987 = vmatprep.subr.mxu0 0.0
        %988 = vmatpush1.msra.mxu0 %v967
        %989 = vmatprep.subr.mxu0 0.0
        %990 = vmatpush1.msra.mxu0 %v968
        %991 = vmatprep.subr.mxu0 0.0
        %992 = vmatpush1.msra.mxu0 %v969
        %993 = vmatprep.subr.mxu0 0.0
        %994 = vmatpush1.msra.mxu0 %v970
        %995 = vmatprep.subr.mxu0 0.0
        %996 = vmatpush1.msra.mxu0 %v971
        %997 = vmatprep.subr.mxu0 0.0
        %998 = vmatpush1.msra.mxu0 %v972
        %999 = vmatprep.subr.mxu0 0.0
        %1000 = vmatpush1.msra.mxu0 %v973
        %1001 = vmatprep.subr.mxu0 0.0
        %1002 = vmatpush1.msra.mxu0 %v974
        %1003 = vmatprep.subr.mxu0 0.0
        %1004 = vmatpush1.msra.mxu0 %v975
        %1005 = vmatprep.subr.mxu0 0.0
        %1006 = vmatpush1.msra.mxu0 %v976
        %1007 = vmatprep.subr.mxu0 0.0
        %1008 = vmatpush1.msra.mxu0 %v977
        %1009 = vmatprep.subr.mxu0 0.0
        %1010 = vmatpush1.msra.mxu0 %v978
        %1011 = vmatprep.subr.mxu0 0.0
        %1012 = vmatpush1.msra.mxu0 0.0
        %1013 = vmatprep.subr.mxu0 0.0
        %1014 = vmatpush1.msra.mxu0 0.0
        %1015 = vmatprep.subr.mxu0 0.0
        %1016 = vmatpush1.msra.mxu0 0.0
        %1017 = vmatprep.subr.mxu0 0.0
        %1018 = vmatpush1.msra.mxu0 0.0
        %1019 = vmatprep.subr.mxu0 0.0
        %1020 = vmatpush1.msra.mxu0 0.0
        %1021 = vmatprep.subr.mxu0 0.0
        %1022 = vmatpush1.msra.mxu0 0.0
        %1023 = vmatprep.subr.mxu0 0.0
        %1024 = vmatpush1.msra.mxu0 0.0
        %1025 = vmatprep.subr.mxu0 0.0
        %1026 = vmatpush1.msra.mxu0 0.0
        %1027 = vmatprep.subr.mxu0 0.0
        %1028 = vmatpush1.msra.mxu0 0.0
        %1029 = vmatprep.subr.mxu0 0.0
        %1030 = vmatpush1.msra.mxu0 0.0
        %1031 = vmatprep.subr.mxu0 0.0
        %1032 = vmatpush1.msra.mxu0 0.0
        %1033 = vmatprep.subr.mxu0 0.0
        %1034 = vmatpush1.msra.mxu0 0.0
        %1035 = vmatprep.subr.mxu0 0.0
        %1036 = vmatpush1.msra.mxu0 0.0
        %1037 = vmatprep.subr.mxu0 0.0
        %1038 = vmatpush1.msra.mxu0 0.0
        %1039 = vmatprep.subr.mxu0 0.0
        %1040 = vmatpush1.msra.mxu0 0.0
        %1041 = vmatprep.subr.mxu0 0.0
        %1042 = vmatpush1.msra.mxu0 0.0
        %1043 = vmatprep.mubr.f32.mxu0 0.0
        %1044 = vmatmul.mubr.f32.gmra.mrb[0].mxu0 %v950
        %v1045 = vpop.f32.mrb[0].mxu0
        %v1046 = vadd.f32 0.0, %v1045
        %v1047 = vpop.f32.mrb[0].mxu0
        %1048 = vmatprep.mubr.f32.mxu0 0.0
        %1049 = vmatmul.mubr.f32.gmra.mrb[0].mxu0 %v951
        %v1050 = vpop.f32.mrb[0].mxu0
        %v1051 = vadd.f32 0.0, %v1050
        %v1052 = vpop.f32.mrb[0].mxu0
        %1053 = vmatprep.mubr.f32.mxu0 0.0
        %1054 = vmatmul.mubr.f32.gmra.mrb[0].mxu0 %v952
        %v1055 = vpop.f32.mrb[0].mxu0
        %v1056 = vadd.f32 0.0, %v1055
        %v1057 = vpop.f32.mrb[0].mxu0
        %1058 = vmatprep.mubr.f32.mxu0 0.0
        %1059 = vmatmul.mubr.f32.gmra.mrb[0].mxu0 %v953
        %v1060 = vpop.f32.mrb[0].mxu0
        %v1061 = vadd.f32 0.0, %v1060
        %v1062 = vpop.f32.mrb[0].mxu0
        %1063 = vdwg.mxu0
        %v1064 = vld [vmem:[%s818] sm:$0xff]
        %v1065 = vld [vmem:[%s818 + $0x8] sm:$0xff]
        %v1066 = vld [vmem:[%s818 + $0x10] sm:$0xff]
        %v1067 = vld [vmem:[%s818 + $0x18] sm:$0xff]
        %v1068 = vld [vmem:[%s5] sm:$0xf]
        %vm1069 = vcmask 31744
        %v1071 = vsel %vm1069, %v1064, 0
        %v1074 = vsel %vm1069, %v1065, 0
        %v1077 = vsel %vm1069, %v1066, 0
        %v1080 = vsel %vm1069, %v1067, 0
        %vm1082 = vcmask 1043456
        %v1084 = vsel %vm1082, %v1068, 0
        %1086 = vmatprep.subr.mxu0 0.0
        %1087 = vmatpush1.msra.mxu0 %v1084
        %1088 = vmatprep.subr.mxu0 0.0
        %1089 = vmatpush1.msra.mxu0 0.0
        %1090 = vmatprep.subr.mxu0 0.0
        %1091 = vmatpush1.msra.mxu0 0.0
        %1092 = vmatprep.subr.mxu0 0.0
        %1093 = vmatpush1.msra.mxu0 0.0
        %1094 = vmatprep.subr.mxu0 0.0
        %1095 = vmatpush1.msra.mxu0 0.0
        %1096 = vmatprep.subr.mxu0 0.0
        %1097 = vmatpush1.msra.mxu0 0.0
        %1098 = vmatprep.subr.mxu0 0.0
        %1099 = vmatpush1.msra.mxu0 0.0
        %1100 = vmatprep.subr.mxu0 0.0
        %1101 = vmatpush1.msra.mxu0 0.0
        %1102 = vmatprep.subr.mxu0 0.0
        %1103 = vmatpush1.msra.mxu0 0.0
        %1104 = vmatprep.subr.mxu0 0.0
        %1105 = vmatpush1.msra.mxu0 0.0
        %1106 = vmatprep.subr.mxu0 0.0
        %1107 = vmatpush1.msra.mxu0 0.0
        %1108 = vmatprep.subr.mxu0 0.0
        %1109 = vmatpush1.msra.mxu0 0.0
        %1110 = vmatprep.subr.mxu0 0.0
        %1111 = vmatpush1.msra.mxu0 0.0
        %1112 = vmatprep.subr.mxu0 0.0
        %1113 = vmatpush1.msra.mxu0 0.0
        %1114 = vmatprep.subr.mxu0 0.0
        %1115 = vmatpush1.msra.mxu0 0.0
        %1116 = vmatprep.subr.mxu0 0.0
        %1117 = vmatpush1.msra.mxu0 0.0
        %1118 = vmatprep.subr.mxu0 0.0
        %1119 = vmatpush1.msra.mxu0 0.0
        %1120 = vmatprep.subr.mxu0 0.0
        %1121 = vmatpush1.msra.mxu0 0.0
        %1122 = vmatprep.subr.mxu0 0.0
        %1123 = vmatpush1.msra.mxu0 0.0
        %1124 = vmatprep.subr.mxu0 0.0
        %1125 = vmatpush1.msra.mxu0 0.0
        %1126 = vmatprep.subr.mxu0 0.0
        %1127 = vmatpush1.msra.mxu0 0.0
        %1128 = vmatprep.subr.mxu0 0.0
        %1129 = vmatpush1.msra.mxu0 0.0
        %1130 = vmatprep.subr.mxu0 0.0
        %1131 = vmatpush1.msra.mxu0 0.0
        %1132 = vmatprep.subr.mxu0 0.0
        %1133 = vmatpush1.msra.mxu0 0.0
        %1134 = vmatprep.subr.mxu0 0.0
        %1135 = vmatpush1.msra.mxu0 0.0
        %1136 = vmatprep.subr.mxu0 0.0
        %1137 = vmatpush1.msra.mxu0 0.0
        %1138 = vmatprep.subr.mxu0 0.0
        %1139 = vmatpush1.msra.mxu0 0.0
        %1140 = vmatprep.subr.mxu0 0.0
        %1141 = vmatpush1.msra.mxu0 0.0
        %1142 = vmatprep.subr.mxu0 0.0
        %1143 = vmatpush1.msra.mxu0 0.0
        %1144 = vmatprep.subr.mxu0 0.0
        %1145 = vmatpush1.msra.mxu0 0.0
        %1146 = vmatprep.subr.mxu0 0.0
        %1147 = vmatpush1.msra.mxu0 0.0
        %1148 = vmatprep.subr.mxu0 0.0
        %1149 = vmatpush1.msra.mxu0 0.0
        %1150 = vmatprep.mubr.f32.mxu0 0.0
        %1151 = vmatmul.mubr.f32.gmra.mrb[0].mxu0 %v1071
        %v1152 = vpop.f32.mrb[0].mxu0
        %v1153 = vadd.f32 0.0, %v1152
        %v1154 = vpop.f32.mrb[0].mxu0
        %1155 = vmatprep.mubr.f32.mxu0 0.0
        %1156 = vmatmul.mubr.f32.gmra.mrb[0].mxu0 %v1074
        %v1157 = vpop.f32.mrb[0].mxu0
        %v1158 = vadd.f32 0.0, %v1157
        %v1159 = vpop.f32.mrb[0].mxu0
        %1160 = vmatprep.mubr.f32.mxu0 0.0
        %1161 = vmatmul.mubr.f32.gmra.mrb[0].mxu0 %v1077
        %v1162 = vpop.f32.mrb[0].mxu0
        %v1163 = vadd.f32 0.0, %v1162
        %v1164 = vpop.f32.mrb[0].mxu0
        %1165 = vmatprep.mubr.f32.mxu0 0.0
        %1166 = vmatmul.mubr.f32.gmra.mrb[0].mxu0 %v1080
        %v1167 = vpop.f32.mrb[0].mxu0
        %v1168 = vadd.f32 0.0, %v1167
        %v1169 = vpop.f32.mrb[0].mxu0
        %1170 = vdwg.mxu0
        %v1171 = vld [vmem:[%s4] sm:$0xff]
        %v1172 = vld [vmem:[%s4 + $0x8] sm:$0xff]
        %v1173 = vld [vmem:[%s4 + $0x10] sm:$0xff]
        %v1174 = vld [vmem:[%s4 + $0x18] sm:$0xff]
        %v1175 = vld [vmem:[%s4 + $0x20] sm:$0xff]
        %v1176 = vld [vmem:[%s4 + $0x28] sm:$0xff]
        %v1177 = vld [vmem:[%s4 + $0x30] sm:$0xff]
        %v1178 = vld [vmem:[%s4 + $0x38] sm:$0xff]
        %v1179 = vld [vmem:[%s4 + $0x40] sm:$0xff]
        %v1180 = vld [vmem:[%s4 + $0x48] sm:$0xff]
        %v1181 = vld [vmem:[%s4 + $0x50] sm:$0xff]
        %v1182 = vld [vmem:[%s4 + $0x58] sm:$0xff]
        %v1183 = vld [vmem:[%s4 + $0x60] sm:$0xff]
        %v1184 = vld [vmem:[%s4 + $0x68] sm:$0xff]
        %v1185 = vld [vmem:[%s4 + $0x70] sm:$0xff]
        %v1186 = vld [vmem:[%s4 + $0x78] sm:$0xff]
        %1187 = vmatprep.subr.mxu0 0.0
        %1188 = vmatpush1.msra.mxu0 %v1171
        %1189 = vmatprep.subr.mxu0 0.0
        %1190 = vmatpush1.msra.mxu0 %v1172
        %1191 = vmatprep.subr.mxu0 0.0
        %1192 = vmatpush1.msra.mxu0 %v1173
        %1193 = vmatprep.subr.mxu0 0.0
        %1194 = vmatpush1.msra.mxu0 %v1174
        %1195 = vmatprep.subr.mxu0 0.0
        %1196 = vmatpush1.msra.mxu0 %v1175
        %1197 = vmatprep.subr.mxu0 0.0
        %1198 = vmatpush1.msra.mxu0 %v1176
        %1199 = vmatprep.subr.mxu0 0.0
        %1200 = vmatpush1.msra.mxu0 %v1177
        %1201 = vmatprep.subr.mxu0 0.0
        %1202 = vmatpush1.msra.mxu0 %v1178
        %1203 = vmatprep.subr.mxu0 0.0
        %1204 = vmatpush1.msra.mxu0 %v1179
        %1205 = vmatprep.subr.mxu0 0.0
        %1206 = vmatpush1.msra.mxu0 %v1180
        %1207 = vmatprep.subr.mxu0 0.0
        %1208 = vmatpush1.msra.mxu0 %v1181
        %1209 = vmatprep.subr.mxu0 0.0
        %1210 = vmatpush1.msra.mxu0 %v1182
        %1211 = vmatprep.subr.mxu0 0.0
        %1212 = vmatpush1.msra.mxu0 %v1183
        %1213 = vmatprep.subr.mxu0 0.0
        %1214 = vmatpush1.msra.mxu0 %v1184
        %1215 = vmatprep.subr.mxu0 0.0
        %1216 = vmatpush1.msra.mxu0 %v1185
        %1217 = vmatprep.subr.mxu0 0.0
        %1218 = vmatpush1.msra.mxu0 %v1186
        %1219 = vmatprep.subr.mxu0 0.0
        %1220 = vmatpush1.msra.mxu0 0.0
        %1221 = vmatprep.subr.mxu0 0.0
        %1222 = vmatpush1.msra.mxu0 0.0
        %1223 = vmatprep.subr.mxu0 0.0
        %1224 = vmatpush1.msra.mxu0 0.0
        %1225 = vmatprep.subr.mxu0 0.0
        %1226 = vmatpush1.msra.mxu0 0.0
        %1227 = vmatprep.subr.mxu0 0.0
        %1228 = vmatpush1.msra.mxu0 0.0
        %1229 = vmatprep.subr.mxu0 0.0
        %1230 = vmatpush1.msra.mxu0 0.0
        %1231 = vmatprep.subr.mxu0 0.0
        %1232 = vmatpush1.msra.mxu0 0.0
        %1233 = vmatprep.subr.mxu0 0.0
        %1234 = vmatpush1.msra.mxu0 0.0
        %1235 = vmatprep.subr.mxu0 0.0
        %1236 = vmatpush1.msra.mxu0 0.0
        %1237 = vmatprep.subr.mxu0 0.0
        %1238 = vmatpush1.msra.mxu0 0.0
        %1239 = vmatprep.subr.mxu0 0.0
        %1240 = vmatpush1.msra.mxu0 0.0
        %1241 = vmatprep.subr.mxu0 0.0
        %1242 = vmatpush1.msra.mxu0 0.0
        %1243 = vmatprep.subr.mxu0 0.0
        %1244 = vmatpush1.msra.mxu0 0.0
        %1245 = vmatprep.subr.mxu0 0.0
        %1246 = vmatpush1.msra.mxu0 0.0
        %1247 = vmatprep.subr.mxu0 0.0
        %1248 = vmatpush1.msra.mxu0 0.0
        %1249 = vmatprep.subr.mxu0 0.0
        %1250 = vmatpush1.msra.mxu0 0.0
        %1251 = vmatprep.mubr.f32.mxu0 0.0
        %1252 = vmatmul.mubr.f32.gmra.mrb[0].mxu0 %v1046
        %v1253 = vpop.f32.mrb[0].mxu0
        %v1254 = vadd.f32 %v1153, %v1253
        %v1255 = vpop.f32.mrb[0].mxu0
        %1256 = vmatprep.mubr.f32.mxu0 0.0
        %1257 = vmatmul.mubr.f32.gmra.mrb[0].mxu0 %v1051
        %v1258 = vpop.f32.mrb[0].mxu0
        %v1259 = vadd.f32 %v1158, %v1258
        %v1260 = vpop.f32.mrb[0].mxu0
        %1261 = vmatprep.mubr.f32.mxu0 0.0
        %1262 = vmatmul.mubr.f32.gmra.mrb[0].mxu0 %v1056
        %v1263 = vpop.f32.mrb[0].mxu0
        %v1264 = vadd.f32 %v1163, %v1263
        %v1265 = vpop.f32.mrb[0].mxu0
        %1266 = vmatprep.mubr.f32.mxu0 0.0
        %1267 = vmatmul.mubr.f32.gmra.mrb[0].mxu0 %v1061
        %v1268 = vpop.f32.mrb[0].mxu0
        %v1269 = vadd.f32 %v1168, %v1268
        %v1270 = vpop.f32.mrb[0].mxu0
        %1271 = vdwg.mxu0
        %v1272 = vmax.f32 %v1254, 0.0
        %v1273 = vmax.f32 %v1259, 0.0
        %v1274 = vmax.f32 %v1264, 0.0
        %v1275 = vmax.f32 %v1269, 0.0
        %v1276 = vld [vmem:[#allocation4] sm:$0xff]
        %v1277 = vld [vmem:[#allocation4 + $0x8] sm:$0xff]
        %v1278 = vld [vmem:[#allocation4 + $0x10] sm:$0xff]
        %v1279 = vld [vmem:[#allocation4 + $0x18] sm:$0xff]
        %v1280 = vld [vmem:[#allocation4 + $0x20] sm:$0xff]
        %v1281 = vld [vmem:[#allocation4 + $0x28] sm:$0xff]
        %v1282 = vld [vmem:[#allocation4 + $0x30] sm:$0xff]
        %v1283 = vld [vmem:[#allocation4 + $0x38] sm:$0xff]
        %v1284 = vld [vmem:[#allocation4 + $0x40] sm:$0xff]
        %v1285 = vld [vmem:[#allocation4 + $0x48] sm:$0xff]
        %v1286 = vld [vmem:[#allocation4 + $0x50] sm:$0xff]
        %v1287 = vld [vmem:[#allocation4 + $0x58] sm:$0xff]
        %v1288 = vld [vmem:[#allocation4 + $0x60] sm:$0xff]
        %v1289 = vld [vmem:[#allocation4 + $0x68] sm:$0xff]
        %v1290 = vld [vmem:[#allocation4 + $0x70] sm:$0xff]
        %v1291 = vld [vmem:[#allocation4 + $0x78] sm:$0xff]
        %v1292 = vld [vmem:[%s7] sm:$0x1]
        %v1294 = vlaneseq
        %v1295 = vshrl.u32 %v1294, 7
        %v1296 = vsub.s32 0, %v1295
        %v1297 = vrot.slane %v1292, %v1296
        %1299 = vmatprep.subr.mxu0 0.0
        %1300 = vmatpush1.msra.mxu0 %v1276
        %1301 = vmatprep.subr.mxu0 0.0
        %1302 = vmatpush1.msra.mxu0 %v1277
        %1303 = vmatprep.subr.mxu0 0.0
        %1304 = vmatpush1.msra.mxu0 %v1278
        %1305 = vmatprep.subr.mxu0 0.0
        %1306 = vmatpush1.msra.mxu0 %v1279
        %1307 = vmatprep.subr.mxu0 0.0
        %1308 = vmatpush1.msra.mxu0 %v1280
        %1309 = vmatprep.subr.mxu0 0.0
        %1310 = vmatpush1.msra.mxu0 %v1281
        %1311 = vmatprep.subr.mxu0 0.0
        %1312 = vmatpush1.msra.mxu0 %v1282
        %1313 = vmatprep.subr.mxu0 0.0
        %1314 = vmatpush1.msra.mxu0 %v1283
        %1315 = vmatprep.subr.mxu0 0.0
        %1316 = vmatpush1.msra.mxu0 %v1284
        %1317 = vmatprep.subr.mxu0 0.0
        %1318 = vmatpush1.msra.mxu0 %v1285
        %1319 = vmatprep.subr.mxu0 0.0
        %1320 = vmatpush1.msra.mxu0 %v1286
        %1321 = vmatprep.subr.mxu0 0.0
        %1322 = vmatpush1.msra.mxu0 %v1287
        %1323 = vmatprep.subr.mxu0 0.0
        %1324 = vmatpush1.msra.mxu0 %v1288
        %1325 = vmatprep.subr.mxu0 0.0
        %1326 = vmatpush1.msra.mxu0 %v1289
        %1327 = vmatprep.subr.mxu0 0.0
        %1328 = vmatpush1.msra.mxu0 %v1290
        %1329 = vmatprep.subr.mxu0 0.0
        %1330 = vmatpush1.msra.mxu0 %v1291
        %1331 = vmatprep.subr.mxu0 0.0
        %1332 = vmatpush1.msra.mxu0 0.0
        %1333 = vmatprep.subr.mxu0 0.0
        %1334 = vmatpush1.msra.mxu0 0.0
        %1335 = vmatprep.subr.mxu0 0.0
        %1336 = vmatpush1.msra.mxu0 0.0
        %1337 = vmatprep.subr.mxu0 0.0
        %1338 = vmatpush1.msra.mxu0 0.0
        %1339 = vmatprep.subr.mxu0 0.0
        %1340 = vmatpush1.msra.mxu0 0.0
        %1341 = vmatprep.subr.mxu0 0.0
        %1342 = vmatpush1.msra.mxu0 0.0
        %1343 = vmatprep.subr.mxu0 0.0
        %1344 = vmatpush1.msra.mxu0 0.0
        %1345 = vmatprep.subr.mxu0 0.0
        %1346 = vmatpush1.msra.mxu0 0.0
        %1347 = vmatprep.subr.mxu0 0.0
        %1348 = vmatpush1.msra.mxu0 0.0
        %1349 = vmatprep.subr.mxu0 0.0
        %1350 = vmatpush1.msra.mxu0 0.0
        %1351 = vmatprep.subr.mxu0 0.0
        %1352 = vmatpush1.msra.mxu0 0.0
        %1353 = vmatprep.subr.mxu0 0.0
        %1354 = vmatpush1.msra.mxu0 0.0
        %1355 = vmatprep.subr.mxu0 0.0
        %1356 = vmatpush1.msra.mxu0 0.0
        %1357 = vmatprep.subr.mxu0 0.0
        %1358 = vmatpush1.msra.mxu0 0.0
        %1359 = vmatprep.subr.mxu0 0.0
        %1360 = vmatpush1.msra.mxu0 0.0
        %1361 = vmatprep.subr.mxu0 0.0
        %1362 = vmatpush1.msra.mxu0 0.0
        %1363 = vmatprep.mubr.f32.mxu0 0.0
        %1364 = vmatmul.mubr.f32.gmra.mrb[0].mxu0 %v1272
        %v1365 = vpop.f32.mrb[0].mxu0
        %v1366 = vadd.f32 %v1297, %v1365
        %v1367 = vpop.f32.mrb[0].mxu0
        %1368 = vmatprep.mubr.f32.mxu0 0.0
        %1369 = vmatmul.mubr.f32.gmra.mrb[0].mxu0 %v1273
        %v1370 = vpop.f32.mrb[0].mxu0
        %v1371 = vadd.f32 %v1297, %v1370
        %v1372 = vpop.f32.mrb[0].mxu0
        %1373 = vmatprep.mubr.f32.mxu0 0.0
        %1374 = vmatmul.mubr.f32.gmra.mrb[0].mxu0 %v1274
        %v1375 = vpop.f32.mrb[0].mxu0
        %v1376 = vadd.f32 %v1297, %v1375
        %v1377 = vpop.f32.mrb[0].mxu0
        %1378 = vmatprep.mubr.f32.mxu0 0.0
        %1379 = vmatmul.mubr.f32.gmra.mrb[0].mxu0 %v1275
        %v1380 = vpop.f32.mrb[0].mxu0
        %v1381 = vadd.f32 %v1297, %v1380
        %v1382 = vpop.f32.mrb[0].mxu0
        %1383 = vdwg.mxu0
        %v1384 = vmax.f32 %v1366, 0.0
        %v1385 = vmax.f32 %v1371, 0.0
        %v1386 = vmax.f32 %v1376, 0.0
        %v1387 = vmax.f32 %v1381, 0.0
        %v1388 = vld [vmem:[#allocation7] sm:$0xff]
        %v1389 = vld [vmem:[#allocation7 + $0x8] sm:$0xff]
        %v1390 = vld [vmem:[#allocation7 + $0x10] sm:$0xff]
        %v1391 = vld [vmem:[#allocation7 + $0x18] sm:$0xff]
        %v1392 = vld [vmem:[#allocation7 + $0x20] sm:$0xff]
        %v1393 = vld [vmem:[#allocation7 + $0x28] sm:$0xff]
        %v1394 = vld [vmem:[#allocation7 + $0x30] sm:$0xff]
        %v1395 = vld [vmem:[#allocation7 + $0x38] sm:$0xff]
        %v1396 = vld [vmem:[#allocation7 + $0x40] sm:$0xff]
        %v1397 = vld [vmem:[#allocation7 + $0x48] sm:$0xff]
        %v1398 = vld [vmem:[#allocation7 + $0x50] sm:$0xff]
        %v1399 = vld [vmem:[#allocation7 + $0x58] sm:$0xff]
        %v1400 = vld [vmem:[#allocation7 + $0x60] sm:$0xff]
        %v1401 = vld [vmem:[#allocation7 + $0x68] sm:$0xff]
        %v1402 = vld [vmem:[#allocation7 + $0x70] sm:$0xff]
        %v1403 = vld [vmem:[#allocation7 + $0x78] sm:$0xff]
        %v1404 = vld [vmem:[%s9] sm:$0x1]
        %v1406 = vlaneseq
        %v1407 = vshrl.u32 %v1406, 7
        %v1408 = vsub.s32 0, %v1407
        %v1409 = vrot.slane %v1404, %v1408
        %1411 = vmatprep.subr.mxu0 0.0
        %1412 = vmatpush1.msra.mxu0 %v1388
        %1413 = vmatprep.subr.mxu0 0.0
        %1414 = vmatpush1.msra.mxu0 %v1389
        %1415 = vmatprep.subr.mxu0 0.0
        %1416 = vmatpush1.msra.mxu0 %v1390
        %1417 = vmatprep.subr.mxu0 0.0
        %1418 = vmatpush1.msra.mxu0 %v1391
        %1419 = vmatprep.subr.mxu0 0.0
        %1420 = vmatpush1.msra.mxu0 %v1392
        %1421 = vmatprep.subr.mxu0 0.0
        %1422 = vmatpush1.msra.mxu0 %v1393
        %1423 = vmatprep.subr.mxu0 0.0
        %1424 = vmatpush1.msra.mxu0 %v1394
        %1425 = vmatprep.subr.mxu0 0.0
        %1426 = vmatpush1.msra.mxu0 %v1395
        %1427 = vmatprep.subr.mxu0 0.0
        %1428 = vmatpush1.msra.mxu0 %v1396
        %1429 = vmatprep.subr.mxu0 0.0
        %1430 = vmatpush1.msra.mxu0 %v1397
        %1431 = vmatprep.subr.mxu0 0.0
        %1432 = vmatpush1.msra.mxu0 %v1398
        %1433 = vmatprep.subr.mxu0 0.0
        %1434 = vmatpush1.msra.mxu0 %v1399
        %1435 = vmatprep.subr.mxu0 0.0
        %1436 = vmatpush1.msra.mxu0 %v1400
        %1437 = vmatprep.subr.mxu0 0.0
        %1438 = vmatpush1.msra.mxu0 %v1401
        %1439 = vmatprep.subr.mxu0 0.0
        %1440 = vmatpush1.msra.mxu0 %v1402
        %1441 = vmatprep.subr.mxu0 0.0
        %1442 = vmatpush1.msra.mxu0 %v1403
        %1443 = vmatprep.subr.mxu0 0.0
        %1444 = vmatpush1.msra.mxu0 0.0
        %1445 = vmatprep.subr.mxu0 0.0
        %1446 = vmatpush1.msra.mxu0 0.0
        %1447 = vmatprep.subr.mxu0 0.0
        %1448 = vmatpush1.msra.mxu0 0.0
        %1449 = vmatprep.subr.mxu0 0.0
        %1450 = vmatpush1.msra.mxu0 0.0
        %1451 = vmatprep.subr.mxu0 0.0
        %1452 = vmatpush1.msra.mxu0 0.0
        %1453 = vmatprep.subr.mxu0 0.0
        %1454 = vmatpush1.msra.mxu0 0.0
        %1455 = vmatprep.subr.mxu0 0.0
        %1456 = vmatpush1.msra.mxu0 0.0
        %1457 = vmatprep.subr.mxu0 0.0
        %1458 = vmatpush1.msra.mxu0 0.0
        %1459 = vmatprep.subr.mxu0 0.0
        %1460 = vmatpush1.msra.mxu0 0.0
        %1461 = vmatprep.subr.mxu0 0.0
        %1462 = vmatpush1.msra.mxu0 0.0
        %1463 = vmatprep.subr.mxu0 0.0
        %1464 = vmatpush1.msra.mxu0 0.0
        %1465 = vmatprep.subr.mxu0 0.0
        %1466 = vmatpush1.msra.mxu0 0.0
        %1467 = vmatprep.subr.mxu0 0.0
        %1468 = vmatpush1.msra.mxu0 0.0
        %1469 = vmatprep.subr.mxu0 0.0
        %1470 = vmatpush1.msra.mxu0 0.0
        %1471 = vmatprep.subr.mxu0 0.0
        %1472 = vmatpush1.msra.mxu0 0.0
        %1473 = vmatprep.subr.mxu0 0.0
        %1474 = vmatpush1.msra.mxu0 0.0
        %1475 = vmatprep.mubr.f32.mxu0 0.0
        %1476 = vmatmul.mubr.f32.gmra.mrb[0].mxu0 %v1384
        %v1477 = vpop.f32.mrb[0].mxu0
        %v1478 = vadd.f32 %v1409, %v1477
        %v1479 = vpop.f32.mrb[0].mxu0
        %1480 = vmatprep.mubr.f32.mxu0 0.0
        %1481 = vmatmul.mubr.f32.gmra.mrb[0].mxu0 %v1385
        %v1482 = vpop.f32.mrb[0].mxu0
        %v1483 = vadd.f32 %v1409, %v1482
        %v1484 = vpop.f32.mrb[0].mxu0
        %1485 = vmatprep.mubr.f32.mxu0 0.0
        %1486 = vmatmul.mubr.f32.gmra.mrb[0].mxu0 %v1386
        %v1487 = vpop.f32.mrb[0].mxu0
        %v1488 = vadd.f32 %v1409, %v1487
        %v1489 = vpop.f32.mrb[0].mxu0
        %1490 = vmatprep.mubr.f32.mxu0 0.0
        %1491 = vmatmul.mubr.f32.gmra.mrb[0].mxu0 %v1387
        %v1492 = vpop.f32.mrb[0].mxu0
        %v1493 = vadd.f32 %v1409, %v1492
        %v1494 = vpop.f32.mrb[0].mxu0
        %1495 = vdwg.mxu0
        %v1496 = vmax.f32 %v1478, 0.0
        %v1497 = vmax.f32 %v1483, 0.0
        %v1498 = vmax.f32 %v1488, 0.0
        %v1499 = vmax.f32 %v1493, 0.0
        %v1500 = vld [vmem:[#allocation9] sm:$0xff]
        %v1501 = vld [vmem:[#allocation9 + $0x8] sm:$0xff]
        %v1502 = vld [vmem:[#allocation9 + $0x10] sm:$0xff]
        %v1503 = vld [vmem:[#allocation9 + $0x18] sm:$0xff]
        %v1504 = vld [vmem:[#allocation9 + $0x20] sm:$0xff]
        %v1505 = vld [vmem:[#allocation9 + $0x28] sm:$0xff]
        %v1506 = vld [vmem:[#allocation9 + $0x30] sm:$0xff]
        %v1507 = vld [vmem:[#allocation9 + $0x38] sm:$0xff]
        %v1508 = vld [vmem:[#allocation9 + $0x40] sm:$0xff]
        %v1509 = vld [vmem:[#allocation9 + $0x48] sm:$0xff]
        %v1510 = vld [vmem:[#allocation9 + $0x50] sm:$0xff]
        %v1511 = vld [vmem:[#allocation9 + $0x58] sm:$0xff]
        %v1512 = vld [vmem:[#allocation9 + $0x60] sm:$0xff]
        %v1513 = vld [vmem:[#allocation9 + $0x68] sm:$0xff]
        %v1514 = vld [vmem:[#allocation9 + $0x70] sm:$0xff]
        %v1515 = vld [vmem:[#allocation9 + $0x78] sm:$0xff]
        %v1516 = vld [vmem:[%s11] sm:$0x1]
        %v1518 = vlaneseq
        %v1519 = vshrl.u32 %v1518, 7
        %v1520 = vsub.s32 0, %v1519
        %v1521 = vrot.slane %v1516, %v1520
        %1523 = vmatprep.subr.mxu0 0.0
        %1524 = vmatpush1.msra.mxu0 %v1500
        %1525 = vmatprep.subr.mxu0 0.0
        %1526 = vmatpush1.msra.mxu0 %v1501
        %1527 = vmatprep.subr.mxu0 0.0
        %1528 = vmatpush1.msra.mxu0 %v1502
        %1529 = vmatprep.subr.mxu0 0.0
        %1530 = vmatpush1.msra.mxu0 %v1503
        %1531 = vmatprep.subr.mxu0 0.0
        %1532 = vmatpush1.msra.mxu0 %v1504
        %1533 = vmatprep.subr.mxu0 0.0
        %1534 = vmatpush1.msra.mxu0 %v1505
        %1535 = vmatprep.subr.mxu0 0.0
        %1536 = vmatpush1.msra.mxu0 %v1506
        %1537 = vmatprep.subr.mxu0 0.0
        %1538 = vmatpush1.msra.mxu0 %v1507
        %1539 = vmatprep.subr.mxu0 0.0
        %1540 = vmatpush1.msra.mxu0 %v1508
        %1541 = vmatprep.subr.mxu0 0.0
        %1542 = vmatpush1.msra.mxu0 %v1509
        %1543 = vmatprep.subr.mxu0 0.0
        %1544 = vmatpush1.msra.mxu0 %v1510
        %1545 = vmatprep.subr.mxu0 0.0
        %1546 = vmatpush1.msra.mxu0 %v1511
        %1547 = vmatprep.subr.mxu0 0.0
        %1548 = vmatpush1.msra.mxu0 %v1512
        %1549 = vmatprep.subr.mxu0 0.0
        %1550 = vmatpush1.msra.mxu0 %v1513
        %1551 = vmatprep.subr.mxu0 0.0
        %1552 = vmatpush1.msra.mxu0 %v1514
        %1553 = vmatprep.subr.mxu0 0.0
        %1554 = vmatpush1.msra.mxu0 %v1515
        %1555 = vmatprep.subr.mxu0 0.0
        %1556 = vmatpush1.msra.mxu0 0.0
        %1557 = vmatprep.subr.mxu0 0.0
        %1558 = vmatpush1.msra.mxu0 0.0
        %1559 = vmatprep.subr.mxu0 0.0
        %1560 = vmatpush1.msra.mxu0 0.0
        %1561 = vmatprep.subr.mxu0 0.0
        %1562 = vmatpush1.msra.mxu0 0.0
        %1563 = vmatprep.subr.mxu0 0.0
        %1564 = vmatpush1.msra.mxu0 0.0
        %1565 = vmatprep.subr.mxu0 0.0
        %1566 = vmatpush1.msra.mxu0 0.0
        %1567 = vmatprep.subr.mxu0 0.0
        %1568 = vmatpush1.msra.mxu0 0.0
        %1569 = vmatprep.subr.mxu0 0.0
        %1570 = vmatpush1.msra.mxu0 0.0
        %1571 = vmatprep.subr.mxu0 0.0
        %1572 = vmatpush1.msra.mxu0 0.0
        %1573 = vmatprep.subr.mxu0 0.0
        %1574 = vmatpush1.msra.mxu0 0.0
        %1575 = vmatprep.subr.mxu0 0.0
        %1576 = vmatpush1.msra.mxu0 0.0
        %1577 = vmatprep.subr.mxu0 0.0
        %1578 = vmatpush1.msra.mxu0 0.0
        %1579 = vmatprep.subr.mxu0 0.0
        %1580 = vmatpush1.msra.mxu0 0.0
        %1581 = vmatprep.subr.mxu0 0.0
        %1582 = vmatpush1.msra.mxu0 0.0
        %1583 = vmatprep.subr.mxu0 0.0
        %1584 = vmatpush1.msra.mxu0 0.0
        %1585 = vmatprep.subr.mxu0 0.0
        %1586 = vmatpush1.msra.mxu0 0.0
        %1587 = vmatprep.mubr.f32.mxu0 0.0
        %1588 = vmatmul.mubr.f32.gmra.mrb[0].mxu0 %v1496
        %v1589 = vpop.f32.mrb[0].mxu0
        %v1590 = vadd.f32 %v1521, %v1589
        %v1591 = vpop.f32.mrb[0].mxu0
        %1592 = vmatprep.mubr.f32.mxu0 0.0
        %1593 = vmatmul.mubr.f32.gmra.mrb[0].mxu0 %v1497
        %v1594 = vpop.f32.mrb[0].mxu0
        %v1595 = vadd.f32 %v1521, %v1594
        %v1596 = vpop.f32.mrb[0].mxu0
        %1597 = vmatprep.mubr.f32.mxu0 0.0
        %1598 = vmatmul.mubr.f32.gmra.mrb[0].mxu0 %v1498
        %v1599 = vpop.f32.mrb[0].mxu0
        %v1600 = vadd.f32 %v1521, %v1599
        %v1601 = vpop.f32.mrb[0].mxu0
        %1602 = vmatprep.mubr.f32.mxu0 0.0
        %1603 = vmatmul.mubr.f32.gmra.mrb[0].mxu0 %v1499
        %v1604 = vpop.f32.mrb[0].mxu0
        %v1605 = vadd.f32 %v1521, %v1604
        %v1606 = vpop.f32.mrb[0].mxu0
        %1607 = vdwg.mxu0
        %v1608 = vld [vmem:[#allocation3] sm:$0xff]
        %v1609 = vld [vmem:[#allocation3 + $0x8] sm:$0xff]
        %v1610 = vld [vmem:[#allocation3 + $0x10] sm:$0xff]
        %v1611 = vld [vmem:[#allocation3 + $0x18] sm:$0xff]
        %v1612 = vld [vmem:[#allocation3 + $0x20] sm:$0xff]
        %v1613 = vld [vmem:[#allocation3 + $0x28] sm:$0xff]
        %v1614 = vld [vmem:[#allocation3 + $0x30] sm:$0xff]
        %v1615 = vld [vmem:[#allocation3 + $0x38] sm:$0xff]
        %v1616 = vld [vmem:[#allocation3 + $0x40] sm:$0xff]
        %v1617 = vld [vmem:[#allocation3 + $0x48] sm:$0xff]
        %v1618 = vld [vmem:[#allocation3 + $0x50] sm:$0xff]
        %v1619 = vld [vmem:[#allocation3 + $0x58] sm:$0xff]
        %v1620 = vld [vmem:[#allocation3 + $0x60] sm:$0xff]
        %v1621 = vld [vmem:[#allocation3 + $0x68] sm:$0xff]
        %v1622 = vld [vmem:[#allocation3 + $0x70] sm:$0xff]
        %v1623 = vld [vmem:[#allocation3 + $0x78] sm:$0xff]
        %1624 = vxpose.xlu0.b32.start [1/16] %v959, 128
        %1625 = vxpose.xlu0.b32.cont [2/16] %v960, 128
        %1626 = vxpose.xlu0.b32.cont [3/16] %v961, 128
        %1627 = vxpose.xlu0.b32.cont [4/16] %v962, 128
        %1628 = vxpose.xlu0.b32.cont [5/16] 0.0, 128
        %1629 = vxpose.xlu0.b32.cont [6/16] 0.0, 128
        %1630 = vxpose.xlu0.b32.cont [7/16] 0.0, 128
        %1631 = vxpose.xlu0.b32.cont [8/16] 0.0, 128
        %1632 = vxpose.xlu0.b32.cont [9/16] 0.0, 128
        %1633 = vxpose.xlu0.b32.cont [10/16] 0.0, 128
        %1634 = vxpose.xlu0.b32.cont [11/16] 0.0, 128
        %1635 = vxpose.xlu0.b32.cont [12/16] 0.0, 128
        %1636 = vxpose.xlu0.b32.cont [13/16] 0.0, 128
        %1637 = vxpose.xlu0.b32.cont [14/16] 0.0, 128
        %1638 = vxpose.xlu0.b32.cont [15/16] 0.0, 128
        %1639 = vxpose.xlu0.b32.end [16/16] 0.0, 128
        %v1640 = vpop.trf.xlu0
        %v1641 = vpop.trf.xlu0
        %v1642 = vpop.trf.xlu0
        %v1643 = vpop.trf.xlu0
        %v1644 = vpop.trf.xlu0
        %v1645 = vpop.trf.xlu0
        %v1646 = vpop.trf.xlu0
        %v1647 = vpop.trf.xlu0
        %v1648 = vpop.trf.xlu0
        %v1649 = vpop.trf.xlu0
        %v1650 = vpop.trf.xlu0
        %v1651 = vpop.trf.xlu0
        %v1652 = vpop.trf.xlu0
        %v1653 = vpop.trf.xlu0
        %v1654 = vpop.trf.xlu0
        %v1655 = vpop.trf.xlu0
        %vm1656 = vcmask 261120
        %v1658 = vsel %vm1656, %v1640, 0
        %v1661 = vsel %vm1656, %v1641, 0
        %v1664 = vsel %vm1656, %v1642, 0
        %v1667 = vsel %vm1656, %v1643, 0
        %v1670 = vsel %vm1656, %v1644, 0
        %v1673 = vsel %vm1656, %v1645, 0
        %v1676 = vsel %vm1656, %v1646, 0
        %v1679 = vsel %vm1656, %v1647, 0
        %v1682 = vsel %vm1656, %v1648, 0
        %v1685 = vsel %vm1656, %v1649, 0
        %v1688 = vsel %vm1656, %v1650, 0
        %v1691 = vsel %vm1656, %v1651, 0
        %v1694 = vsel %vm1656, %v1652, 0
        %v1697 = vsel %vm1656, %v1653, 0
        %v1700 = vsel %vm1656, %v1654, 0
        %v1703 = vsel %vm1656, %v1655, 0
        %1705 = vmatprep.subr.mxu0 0.0
        %1706 = vmatpush1.msra.mxu0 %v1590
        %1707 = vmatprep.subr.mxu0 0.0
        %1708 = vmatpush1.msra.mxu0 %v1595
        %1709 = vmatprep.subr.mxu0 0.0
        %1710 = vmatpush1.msra.mxu0 %v1600
        %1711 = vmatprep.subr.mxu0 0.0
        %1712 = vmatpush1.msra.mxu0 %v1605
        %1713 = vmatprep.subr.mxu0 0.0
        %1714 = vmatpush1.msra.mxu0 0.0
        %1715 = vmatprep.subr.mxu0 0.0
        %1716 = vmatpush1.msra.mxu0 0.0
        %1717 = vmatprep.subr.mxu0 0.0
        %1718 = vmatpush1.msra.mxu0 0.0
        %1719 = vmatprep.subr.mxu0 0.0
        %1720 = vmatpush1.msra.mxu0 0.0
        %1721 = vmatprep.subr.mxu0 0.0
        %1722 = vmatpush1.msra.mxu0 0.0
        %1723 = vmatprep.subr.mxu0 0.0
        %1724 = vmatpush1.msra.mxu0 0.0
        %1725 = vmatprep.subr.mxu0 0.0
        %1726 = vmatpush1.msra.mxu0 0.0
        %1727 = vmatprep.subr.mxu0 0.0
        %1728 = vmatpush1.msra.mxu0 0.0
        %1729 = vmatprep.subr.mxu0 0.0
        %1730 = vmatpush1.msra.mxu0 0.0
        %1731 = vmatprep.subr.mxu0 0.0
        %1732 = vmatpush1.msra.mxu0 0.0
        %1733 = vmatprep.subr.mxu0 0.0
        %1734 = vmatpush1.msra.mxu0 0.0
        %1735 = vmatprep.subr.mxu0 0.0
        %1736 = vmatpush1.msra.mxu0 0.0
        %1737 = vmatprep.subr.mxu0 0.0
        %1738 = vmatpush1.msra.mxu0 0.0
        %1739 = vmatprep.subr.mxu0 0.0
        %1740 = vmatpush1.msra.mxu0 0.0
        %1741 = vmatprep.subr.mxu0 0.0
        %1742 = vmatpush1.msra.mxu0 0.0
        %1743 = vmatprep.subr.mxu0 0.0
        %1744 = vmatpush1.msra.mxu0 0.0
        %1745 = vmatprep.subr.mxu0 0.0
        %1746 = vmatpush1.msra.mxu0 0.0
        %1747 = vmatprep.subr.mxu0 0.0
        %1748 = vmatpush1.msra.mxu0 0.0
        %1749 = vmatprep.subr.mxu0 0.0
        %1750 = vmatpush1.msra.mxu0 0.0
        %1751 = vmatprep.subr.mxu0 0.0
        %1752 = vmatpush1.msra.mxu0 0.0
        %1753 = vmatprep.subr.mxu0 0.0
        %1754 = vmatpush1.msra.mxu0 0.0
        %1755 = vmatprep.subr.mxu0 0.0
        %1756 = vmatpush1.msra.mxu0 0.0
        %1757 = vmatprep.subr.mxu0 0.0
        %1758 = vmatpush1.msra.mxu0 0.0
        %1759 = vmatprep.subr.mxu0 0.0
        %1760 = vmatpush1.msra.mxu0 0.0
        %1761 = vmatprep.subr.mxu0 0.0
        %1762 = vmatpush1.msra.mxu0 0.0
        %1763 = vmatprep.subr.mxu0 0.0
        %1764 = vmatpush1.msra.mxu0 0.0
        %1765 = vmatprep.subr.mxu0 0.0
        %1766 = vmatpush1.msra.mxu0 0.0
        %1767 = vmatprep.subr.mxu0 0.0
        %1768 = vmatpush1.msra.mxu0 0.0
        %1769 = vmatprep.mubr.f32.mxu0 0.0
        %1770 = vmatmul.mubr.f32.gmra.mrb[0].mxu0 %v1658
        %v1771 = vpop.f32.mrb[0].mxu0
        %v1772 = vadd.f32 0.0, %v1771
        %v1773 = vpop.f32.mrb[0].mxu0
        %1774 = vmatprep.mubr.f32.mxu0 0.0
        %1775 = vmatmul.mubr.f32.gmra.mrb[0].mxu0 %v1661
        %v1776 = vpop.f32.mrb[0].mxu0
        %v1777 = vadd.f32 0.0, %v1776
        %v1778 = vpop.f32.mrb[0].mxu0
        %1779 = vmatprep.mubr.f32.mxu0 0.0
        %1780 = vmatmul.mubr.f32.gmra.mrb[0].mxu0 %v1664
        %v1781 = vpop.f32.mrb[0].mxu0
        %v1782 = vadd.f32 0.0, %v1781
        %v1783 = vpop.f32.mrb[0].mxu0
        %1784 = vmatprep.mubr.f32.mxu0 0.0
        %1785 = vmatmul.mubr.f32.gmra.mrb[0].mxu0 %v1667
        %v1786 = vpop.f32.mrb[0].mxu0
        %v1787 = vadd.f32 0.0, %v1786
        %v1788 = vpop.f32.mrb[0].mxu0
        %1789 = vmatprep.mubr.f32.mxu0 0.0
        %1790 = vmatmul.mubr.f32.gmra.mrb[0].mxu0 %v1670
        %v1791 = vpop.f32.mrb[0].mxu0
        %v1792 = vadd.f32 0.0, %v1791
        %v1793 = vpop.f32.mrb[0].mxu0
        %1794 = vmatprep.mubr.f32.mxu0 0.0
        %1795 = vmatmul.mubr.f32.gmra.mrb[0].mxu0 %v1673
        %v1796 = vpop.f32.mrb[0].mxu0
        %v1797 = vadd.f32 0.0, %v1796
        %v1798 = vpop.f32.mrb[0].mxu0
        %1799 = vmatprep.mubr.f32.mxu0 0.0
        %1800 = vmatmul.mubr.f32.gmra.mrb[0].mxu0 %v1676
        %v1801 = vpop.f32.mrb[0].mxu0
        %v1802 = vadd.f32 0.0, %v1801
        %v1803 = vpop.f32.mrb[0].mxu0
        %1804 = vmatprep.mubr.f32.mxu0 0.0
        %1805 = vmatmul.mubr.f32.gmra.mrb[0].mxu0 %v1679
        %v1806 = vpop.f32.mrb[0].mxu0
        %v1807 = vadd.f32 0.0, %v1806
        %v1808 = vpop.f32.mrb[0].mxu0
        %1809 = vmatprep.mubr.f32.mxu0 0.0
        %1810 = vmatmul.mubr.f32.gmra.mrb[0].mxu0 %v1682
        %v1811 = vpop.f32.mrb[0].mxu0
        %v1812 = vadd.f32 0.0, %v1811
        %v1813 = vpop.f32.mrb[0].mxu0
        %1814 = vmatprep.mubr.f32.mxu0 0.0
        %1815 = vmatmul.mubr.f32.gmra.mrb[0].mxu0 %v1685
        %v1816 = vpop.f32.mrb[0].mxu0
        %v1817 = vadd.f32 0.0, %v1816
        %v1818 = vpop.f32.mrb[0].mxu0
        %1819 = vmatprep.mubr.f32.mxu0 0.0
        %1820 = vmatmul.mubr.f32.gmra.mrb[0].mxu0 %v1688
        %v1821 = vpop.f32.mrb[0].mxu0
        %v1822 = vadd.f32 0.0, %v1821
        %v1823 = vpop.f32.mrb[0].mxu0
        %1824 = vmatprep.mubr.f32.mxu0 0.0
        %1825 = vmatmul.mubr.f32.gmra.mrb[0].mxu0 %v1691
        %v1826 = vpop.f32.mrb[0].mxu0
        %v1827 = vadd.f32 0.0, %v1826
        %v1828 = vpop.f32.mrb[0].mxu0
        %1829 = vmatprep.mubr.f32.mxu0 0.0
        %1830 = vmatmul.mubr.f32.gmra.mrb[0].mxu0 %v1694
        %v1831 = vpop.f32.mrb[0].mxu0
        %v1832 = vadd.f32 0.0, %v1831
        %v1833 = vpop.f32.mrb[0].mxu0
        %1834 = vmatprep.mubr.f32.mxu0 0.0
        %1835 = vmatmul.mubr.f32.gmra.mrb[0].mxu0 %v1697
        %v1836 = vpop.f32.mrb[0].mxu0
        %v1837 = vadd.f32 0.0, %v1836
        %v1838 = vpop.f32.mrb[0].mxu0
        %1839 = vmatprep.mubr.f32.mxu0 0.0
        %1840 = vmatmul.mubr.f32.gmra.mrb[0].mxu0 %v1700
        %v1841 = vpop.f32.mrb[0].mxu0
        %v1842 = vadd.f32 0.0, %v1841
        %v1843 = vpop.f32.mrb[0].mxu0
        %1844 = vmatprep.mubr.f32.mxu0 0.0
        %1845 = vmatmul.mubr.f32.gmra.mrb[0].mxu0 %v1703
        %v1846 = vpop.f32.mrb[0].mxu0
        %v1847 = vadd.f32 0.0, %v1846
        %v1848 = vpop.f32.mrb[0].mxu0
        %1849 = vdwg.mxu0
        %v1850 = vadd.f32 %v1608, %v1772
        %v1851 = vadd.f32 %v1609, %v1777
        %v1852 = vadd.f32 %v1610, %v1782
        %v1853 = vadd.f32 %v1611, %v1787
        %v1854 = vadd.f32 %v1612, %v1792
        %v1855 = vadd.f32 %v1613, %v1797
        %v1856 = vadd.f32 %v1614, %v1802
        %v1857 = vadd.f32 %v1615, %v1807
        %v1858 = vadd.f32 %v1616, %v1812
        %v1859 = vadd.f32 %v1617, %v1817
        %v1860 = vadd.f32 %v1618, %v1822
        %v1861 = vadd.f32 %v1619, %v1827
        %v1862 = vadd.f32 %v1620, %v1832
        %v1863 = vadd.f32 %v1621, %v1837
        %v1864 = vadd.f32 %v1622, %v1842
        %v1865 = vadd.f32 %v1623, %v1847
        %1866 = vst [vmem:[#allocation3] sm:$0xff] %v1850
        %1867 = vst [vmem:[#allocation3 + $0x8] sm:$0xff] %v1851
        %1868 = vst [vmem:[#allocation3 + $0x10] sm:$0xff] %v1852
        %1869 = vst [vmem:[#allocation3 + $0x18] sm:$0xff] %v1853
        %1870 = vst [vmem:[#allocation3 + $0x20] sm:$0xff] %v1854
        %1871 = vst [vmem:[#allocation3 + $0x28] sm:$0xff] %v1855
        %1872 = vst [vmem:[#allocation3 + $0x30] sm:$0xff] %v1856
        %1873 = vst [vmem:[#allocation3 + $0x38] sm:$0xff] %v1857
        %1874 = vst [vmem:[#allocation3 + $0x40] sm:$0xff] %v1858
        %1875 = vst [vmem:[#allocation3 + $0x48] sm:$0xff] %v1859
        %1876 = vst [vmem:[#allocation3 + $0x50] sm:$0xff] %v1860
        %1877 = vst [vmem:[#allocation3 + $0x58] sm:$0xff] %v1861
        %1878 = vst [vmem:[#allocation3 + $0x60] sm:$0xff] %v1862
        %1879 = vst [vmem:[#allocation3 + $0x68] sm:$0xff] %v1863
        %1880 = vst [vmem:[#allocation3 + $0x70] sm:$0xff] %v1864
        %1881 = vst [vmem:[#allocation3 + $0x78] sm:$0xff] %v1865
        %p1882 = scmp.eq.s32.totalorder %s42, 2
        %p1883 = pnand %p1882, %p821
        %p1884 = pneg %p1883
        // Predicated region
        $region145: #{tpu_custom_call.1} parent=107 // pred_check
          _
        $region146: #{tpu_custom_call.1} parent=107 // pred_check_branch
          %1886 = sbr.rel (%p1883) target = $region148
        $region147: #{tpu_custom_call.1} parent=107 // pred_region
          %v1887 = vld [vmem:[#allocation2] sm:$0xff]
          %v1888 = vld [vmem:[#allocation2 + $0x8] sm:$0xff]
          %v1889 = vld [vmem:[#allocation2 + $0x10] sm:$0xff]
          %v1890 = vld [vmem:[#allocation2 + $0x18] sm:$0xff]
          %v1891 = vld [vmem:[#allocation2 + $0x20] sm:$0xff]
          %v1892 = vld [vmem:[#allocation2 + $0x28] sm:$0xff]
          %v1893 = vld [vmem:[#allocation2 + $0x30] sm:$0xff]
          %v1894 = vld [vmem:[#allocation2 + $0x38] sm:$0xff]
          %v1895 = vld [vmem:[#allocation2 + $0x40] sm:$0xff]
          %v1896 = vld [vmem:[#allocation2 + $0x48] sm:$0xff]
          %v1897 = vld [vmem:[#allocation2 + $0x50] sm:$0xff]
          %v1898 = vld [vmem:[#allocation2 + $0x58] sm:$0xff]
          %v1899 = vld [vmem:[#allocation2 + $0x60] sm:$0xff]
          %v1900 = vld [vmem:[#allocation2 + $0x68] sm:$0xff]
          %v1901 = vld [vmem:[#allocation2 + $0x70] sm:$0xff]
          %v1902 = vld [vmem:[#allocation2 + $0x78] sm:$0xff]
          %v1903 = vld [vmem:[#allocation3] sm:$0xff]
          %v1904 = vld [vmem:[#allocation3 + $0x8] sm:$0xff]
          %v1905 = vld [vmem:[#allocation3 + $0x10] sm:$0xff]
          %v1906 = vld [vmem:[#allocation3 + $0x18] sm:$0xff]
          %v1907 = vld [vmem:[#allocation3 + $0x20] sm:$0xff]
          %v1908 = vld [vmem:[#allocation3 + $0x28] sm:$0xff]
          %v1909 = vld [vmem:[#allocation3 + $0x30] sm:$0xff]
          %v1910 = vld [vmem:[#allocation3 + $0x38] sm:$0xff]
          %v1911 = vld [vmem:[#allocation3 + $0x40] sm:$0xff]
          %v1912 = vld [vmem:[#allocation3 + $0x48] sm:$0xff]
          %v1913 = vld [vmem:[#allocation3 + $0x50] sm:$0xff]
          %v1914 = vld [vmem:[#allocation3 + $0x58] sm:$0xff]
          %v1915 = vld [vmem:[#allocation3 + $0x60] sm:$0xff]
          %v1916 = vld [vmem:[#allocation3 + $0x68] sm:$0xff]
          %v1917 = vld [vmem:[#allocation3 + $0x70] sm:$0xff]
          %v1918 = vld [vmem:[#allocation3 + $0x78] sm:$0xff]
          %v1919 = vadd.f32 %v1887, %v1903
          %v1920 = vadd.f32 %v1888, %v1904
          %v1921 = vadd.f32 %v1889, %v1905
          %v1922 = vadd.f32 %v1890, %v1906
          %v1923 = vadd.f32 %v1891, %v1907
          %v1924 = vadd.f32 %v1892, %v1908
          %v1925 = vadd.f32 %v1893, %v1909
          %v1926 = vadd.f32 %v1894, %v1910
          %v1927 = vadd.f32 %v1895, %v1911
          %v1928 = vadd.f32 %v1896, %v1912
          %v1929 = vadd.f32 %v1897, %v1913
          %v1930 = vadd.f32 %v1898, %v1914
          %v1931 = vadd.f32 %v1899, %v1915
          %v1932 = vadd.f32 %v1900, %v1916
          %v1933 = vadd.f32 %v1901, %v1917
          %v1934 = vadd.f32 %v1902, %v1918
          %v1935 = vld [vmem:[%s3] sm:$0x1]
          %v1936 = vunpack.c.l.bf16 %v1935
          %1937 = vmatprep.subr.mxu0 0.0
          %1938 = vmatpush1.msra.mxu0 %v1919
          %1939 = vmatprep.subr.mxu0 0.0
          %1940 = vmatpush1.msra.mxu0 %v1920
          %1941 = vmatprep.subr.mxu0 0.0
          %1942 = vmatpush1.msra.mxu0 %v1921
          %1943 = vmatprep.subr.mxu0 0.0
          %1944 = vmatpush1.msra.mxu0 %v1922
          %1945 = vmatprep.subr.mxu0 0.0
          %1946 = vmatpush1.msra.mxu0 %v1923
          %1947 = vmatprep.subr.mxu0 0.0
          %1948 = vmatpush1.msra.mxu0 %v1924
          %1949 = vmatprep.subr.mxu0 0.0
          %1950 = vmatpush1.msra.mxu0 %v1925
          %1951 = vmatprep.subr.mxu0 0.0
          %1952 = vmatpush1.msra.mxu0 %v1926
          %1953 = vmatprep.subr.mxu0 0.0
          %1954 = vmatpush1.msra.mxu0 %v1927
          %1955 = vmatprep.subr.mxu0 0.0
          %1956 = vmatpush1.msra.mxu0 %v1928
          %1957 = vmatprep.subr.mxu0 0.0
          %1958 = vmatpush1.msra.mxu0 %v1929
          %1959 = vmatprep.subr.mxu0 0.0
          %1960 = vmatpush1.msra.mxu0 %v1930
          %1961 = vmatprep.subr.mxu0 0.0
          %1962 = vmatpush1.msra.mxu0 %v1931
          %1963 = vmatprep.subr.mxu0 0.0
          %1964 = vmatpush1.msra.mxu0 %v1932
          %1965 = vmatprep.subr.mxu0 0.0
          %1966 = vmatpush1.msra.mxu0 %v1933
          %1967 = vmatprep.subr.mxu0 0.0
          %1968 = vmatpush1.msra.mxu0 %v1934
          %1969 = vmatprep.subr.mxu0 0.0
          %1970 = vmatpush1.msra.mxu0 0.0
          %1971 = vmatprep.subr.mxu0 0.0
          %1972 = vmatpush1.msra.mxu0 0.0
          %1973 = vmatprep.subr.mxu0 0.0
          %1974 = vmatpush1.msra.mxu0 0.0
          %1975 = vmatprep.subr.mxu0 0.0
          %1976 = vmatpush1.msra.mxu0 0.0
          %1977 = vmatprep.subr.mxu0 0.0
          %1978 = vmatpush1.msra.mxu0 0.0
          %1979 = vmatprep.subr.mxu0 0.0
          %1980 = vmatpush1.msra.mxu0 0.0
          %1981 = vmatprep.subr.mxu0 0.0
          %1982 = vmatpush1.msra.mxu0 0.0
          %1983 = vmatprep.subr.mxu0 0.0
          %1984 = vmatpush1.msra.mxu0 0.0
          %1985 = vmatprep.subr.mxu0 0.0
          %1986 = vmatpush1.msra.mxu0 0.0
          %1987 = vmatprep.subr.mxu0 0.0
          %1988 = vmatpush1.msra.mxu0 0.0
          %1989 = vmatprep.subr.mxu0 0.0
          %1990 = vmatpush1.msra.mxu0 0.0
          %1991 = vmatprep.subr.mxu0 0.0
          %1992 = vmatpush1.msra.mxu0 0.0
          %1993 = vmatprep.subr.mxu0 0.0
          %1994 = vmatpush1.msra.mxu0 0.0
          %1995 = vmatprep.subr.mxu0 0.0
          %1996 = vmatpush1.msra.mxu0 0.0
          %1997 = vmatprep.subr.mxu0 0.0
          %1998 = vmatpush1.msra.mxu0 0.0
          %1999 = vmatprep.subr.mxu0 0.0
          %2000 = vmatpush1.msra.mxu0 0.0
          %2001 = vmatprep.mubr.f32.mxu0 0.0
          %2002 = vmatmul.mubr.f32.gmra.mrb[0].mxu0 %v1936
          %v2003 = vpop.f32.mrb[0].mxu0
          %v2004 = vadd.f32 0.0, %v2003
          %v2005 = vpop.f32.mrb[0].mxu0
          %2006 = vdwg.mxu0
          %v2007 = vld [vmem:[#allocation10] sm:$0xff]
          %v2008 = vld [vmem:[#allocation10 + $0x8] sm:$0xff]
          %v2009 = vld [vmem:[#allocation10 + $0x10] sm:$0xff]
          %v2010 = vld [vmem:[#allocation10 + $0x18] sm:$0xff]
          %v2011 = vld [vmem:[#allocation10 + $0x20] sm:$0xff]
          %v2012 = vld [vmem:[#allocation10 + $0x28] sm:$0xff]
          %v2013 = vld [vmem:[#allocation10 + $0x30] sm:$0xff]
          %v2014 = vld [vmem:[#allocation10 + $0x38] sm:$0xff]
          %v2015 = vld [vmem:[#allocation10 + $0x40] sm:$0xff]
          %v2016 = vld [vmem:[#allocation10 + $0x48] sm:$0xff]
          %v2017 = vld [vmem:[#allocation10 + $0x50] sm:$0xff]
          %v2018 = vld [vmem:[#allocation10 + $0x58] sm:$0xff]
          %v2019 = vld [vmem:[#allocation10 + $0x60] sm:$0xff]
          %v2020 = vld [vmem:[#allocation10 + $0x68] sm:$0xff]
          %v2021 = vld [vmem:[#allocation10 + $0x70] sm:$0xff]
          %v2022 = vld [vmem:[#allocation10 + $0x78] sm:$0xff]
          %v2023 = vld [vmem:[%s13] sm:$0x1]
          %v2025 = vlaneseq
          %v2026 = vshrl.u32 %v2025, 7
          %v2027 = vsub.s32 0, %v2026
          %v2028 = vrot.slane %v2023, %v2027
          %2030 = vmatprep.subr.mxu0 0.0
          %2031 = vmatpush1.msra.mxu0 %v2007
          %2032 = vmatprep.subr.mxu0 0.0
          %2033 = vmatpush1.msra.mxu0 %v2008
          %2034 = vmatprep.subr.mxu0 0.0
          %2035 = vmatpush1.msra.mxu0 %v2009
          %2036 = vmatprep.subr.mxu0 0.0
          %2037 = vmatpush1.msra.mxu0 %v2010
          %2038 = vmatprep.subr.mxu0 0.0
          %2039 = vmatpush1.msra.mxu0 %v2011
          %2040 = vmatprep.subr.mxu0 0.0
          %2041 = vmatpush1.msra.mxu0 %v2012
          %2042 = vmatprep.subr.mxu0 0.0
          %2043 = vmatpush1.msra.mxu0 %v2013
          %2044 = vmatprep.subr.mxu0 0.0
          %2045 = vmatpush1.msra.mxu0 %v2014
          %2046 = vmatprep.subr.mxu0 0.0
          %2047 = vmatpush1.msra.mxu0 %v2015
          %2048 = vmatprep.subr.mxu0 0.0
          %2049 = vmatpush1.msra.mxu0 %v2016
          %2050 = vmatprep.subr.mxu0 0.0
          %2051 = vmatpush1.msra.mxu0 %v2017
          %2052 = vmatprep.subr.mxu0 0.0
          %2053 = vmatpush1.msra.mxu0 %v2018
          %2054 = vmatprep.subr.mxu0 0.0
          %2055 = vmatpush1.msra.mxu0 %v2019
          %2056 = vmatprep.subr.mxu0 0.0
          %2057 = vmatpush1.msra.mxu0 %v2020
          %2058 = vmatprep.subr.mxu0 0.0
          %2059 = vmatpush1.msra.mxu0 %v2021
          %2060 = vmatprep.subr.mxu0 0.0
          %2061 = vmatpush1.msra.mxu0 %v2022
          %2062 = vmatprep.subr.mxu0 0.0
          %2063 = vmatpush1.msra.mxu0 0.0
          %2064 = vmatprep.subr.mxu0 0.0
          %2065 = vmatpush1.msra.mxu0 0.0
          %2066 = vmatprep.subr.mxu0 0.0
          %2067 = vmatpush1.msra.mxu0 0.0
          %2068 = vmatprep.subr.mxu0 0.0
          %2069 = vmatpush1.msra.mxu0 0.0
          %2070 = vmatprep.subr.mxu0 0.0
          %2071 = vmatpush1.msra.mxu0 0.0
          %2072 = vmatprep.subr.mxu0 0.0
          %2073 = vmatpush1.msra.mxu0 0.0
          %2074 = vmatprep.subr.mxu0 0.0
          %2075 = vmatpush1.msra.mxu0 0.0
          %2076 = vmatprep.subr.mxu0 0.0
          %2077 = vmatpush1.msra.mxu0 0.0
          %2078 = vmatprep.subr.mxu0 0.0
          %2079 = vmatpush1.msra.mxu0 0.0
          %2080 = vmatprep.subr.mxu0 0.0
          %2081 = vmatpush1.msra.mxu0 0.0
          %2082 = vmatprep.subr.mxu0 0.0
          %2083 = vmatpush1.msra.mxu0 0.0
          %2084 = vmatprep.subr.mxu0 0.0
          %2085 = vmatpush1.msra.mxu0 0.0
          %2086 = vmatprep.subr.mxu0 0.0
          %2087 = vmatpush1.msra.mxu0 0.0
          %2088 = vmatprep.subr.mxu0 0.0
          %2089 = vmatpush1.msra.mxu0 0.0
          %2090 = vmatprep.subr.mxu0 0.0
          %2091 = vmatpush1.msra.mxu0 0.0
          %2092 = vmatprep.subr.mxu0 0.0
          %2093 = vmatpush1.msra.mxu0 0.0
          %2094 = vmatprep.mubr.f32.mxu0 0.0
          %2095 = vmatmul.mubr.f32.gmra.mrb[0].mxu0 %v2004
          %v2096 = vpop.f32.mrb[0].mxu0
          %v2097 = vadd.f32 %v2028, %v2096
          %v2098 = vpop.f32.mrb[0].mxu0
          %2099 = vdwg.mxu0
          %v2100 = vmax.f32 %v2097, 0.0
          %v2101 = vld [vmem:[#allocation12] sm:$0xff]
          %v2102 = vld [vmem:[#allocation12 + $0x8] sm:$0xff]
          %v2103 = vld [vmem:[#allocation12 + $0x10] sm:$0xff]
          %v2104 = vld [vmem:[#allocation12 + $0x18] sm:$0xff]
          %v2105 = vld [vmem:[#allocation12 + $0x20] sm:$0xff]
          %v2106 = vld [vmem:[#allocation12 + $0x28] sm:$0xff]
          %v2107 = vld [vmem:[#allocation12 + $0x30] sm:$0xff]
          %v2108 = vld [vmem:[#allocation12 + $0x38] sm:$0xff]
          %v2109 = vld [vmem:[#allocation12 + $0x40] sm:$0xff]
          %v2110 = vld [vmem:[#allocation12 + $0x48] sm:$0xff]
          %v2111 = vld [vmem:[#allocation12 + $0x50] sm:$0xff]
          %v2112 = vld [vmem:[#allocation12 + $0x58] sm:$0xff]
          %v2113 = vld [vmem:[#allocation12 + $0x60] sm:$0xff]
          %v2114 = vld [vmem:[#allocation12 + $0x68] sm:$0xff]
          %v2115 = vld [vmem:[#allocation12 + $0x70] sm:$0xff]
          %v2116 = vld [vmem:[#allocation12 + $0x78] sm:$0xff]
          %v2117 = vld [vmem:[%s15] sm:$0x1]
          %v2119 = vlaneseq
          %v2120 = vshrl.u32 %v2119, 7
          %v2121 = vsub.s32 0, %v2120
          %v2122 = vrot.slane %v2117, %v2121
          %2124 = vmatprep.subr.mxu0 0.0
          %2125 = vmatpush1.msra.mxu0 %v2101
          %2126 = vmatprep.subr.mxu0 0.0
          %2127 = vmatpush1.msra.mxu0 %v2102
          %2128 = vmatprep.subr.mxu0 0.0
          %2129 = vmatpush1.msra.mxu0 %v2103
          %2130 = vmatprep.subr.mxu0 0.0
          %2131 = vmatpush1.msra.mxu0 %v2104
          %2132 = vmatprep.subr.mxu0 0.0
          %2133 = vmatpush1.msra.mxu0 %v2105
          %2134 = vmatprep.subr.mxu0 0.0
          %2135 = vmatpush1.msra.mxu0 %v2106
          %2136 = vmatprep.subr.mxu0 0.0
          %2137 = vmatpush1.msra.mxu0 %v2107
          %2138 = vmatprep.subr.mxu0 0.0
          %2139 = vmatpush1.msra.mxu0 %v2108
          %2140 = vmatprep.subr.mxu0 0.0
          %2141 = vmatpush1.msra.mxu0 %v2109
          %2142 = vmatprep.subr.mxu0 0.0
          %2143 = vmatpush1.msra.mxu0 %v2110
          %2144 = vmatprep.subr.mxu0 0.0
          %2145 = vmatpush1.msra.mxu0 %v2111
          %2146 = vmatprep.subr.mxu0 0.0
          %2147 = vmatpush1.msra.mxu0 %v2112
          %2148 = vmatprep.subr.mxu0 0.0
          %2149 = vmatpush1.msra.mxu0 %v2113
          %2150 = vmatprep.subr.mxu0 0.0
          %2151 = vmatpush1.msra.mxu0 %v2114
          %2152 = vmatprep.subr.mxu0 0.0
          %2153 = vmatpush1.msra.mxu0 %v2115
          %2154 = vmatprep.subr.mxu0 0.0
          %2155 = vmatpush1.msra.mxu0 %v2116
          %2156 = vmatprep.subr.mxu0 0.0
          %2157 = vmatpush1.msra.mxu0 0.0
          %2158 = vmatprep.subr.mxu0 0.0
          %2159 = vmatpush1.msra.mxu0 0.0
          %2160 = vmatprep.subr.mxu0 0.0
          %2161 = vmatpush1.msra.mxu0 0.0
          %2162 = vmatprep.subr.mxu0 0.0
          %2163 = vmatpush1.msra.mxu0 0.0
          %2164 = vmatprep.subr.mxu0 0.0
          %2165 = vmatpush1.msra.mxu0 0.0
          %2166 = vmatprep.subr.mxu0 0.0
          %2167 = vmatpush1.msra.mxu0 0.0
          %2168 = vmatprep.subr.mxu0 0.0
          %2169 = vmatpush1.msra.mxu0 0.0
          %2170 = vmatprep.subr.mxu0 0.0
          %2171 = vmatpush1.msra.mxu0 0.0
          %2172 = vmatprep.subr.mxu0 0.0
          %2173 = vmatpush1.msra.mxu0 0.0
          %2174 = vmatprep.subr.mxu0 0.0
          %2175 = vmatpush1.msra.mxu0 0.0
          %2176 = vmatprep.subr.mxu0 0.0
          %2177 = vmatpush1.msra.mxu0 0.0
          %2178 = vmatprep.subr.mxu0 0.0
          %2179 = vmatpush1.msra.mxu0 0.0
          %2180 = vmatprep.subr.mxu0 0.0
          %2181 = vmatpush1.msra.mxu0 0.0
          %2182 = vmatprep.subr.mxu0 0.0
          %2183 = vmatpush1.msra.mxu0 0.0
          %2184 = vmatprep.subr.mxu0 0.0
          %2185 = vmatpush1.msra.mxu0 0.0
          %2186 = vmatprep.subr.mxu0 0.0
          %2187 = vmatpush1.msra.mxu0 0.0
          %2188 = vmatprep.mubr.f32.mxu0 0.0
          %2189 = vmatmul.mubr.f32.gmra.mrb[0].mxu0 %v2100
          %v2190 = vpop.f32.mrb[0].mxu0
          %v2191 = vadd.f32 %v2122, %v2190
          %v2192 = vpop.f32.mrb[0].mxu0
          %2193 = vdwg.mxu0
          %v2194 = vmax.f32 %v2191, 0.0
          %v2195 = vld [vmem:[#allocation13] sm:$0xff]
          %v2196 = vld [vmem:[#allocation13 + $0x8] sm:$0xff]
          %v2197 = vld [vmem:[#allocation13 + $0x10] sm:$0xff]
          %v2198 = vld [vmem:[#allocation13 + $0x18] sm:$0xff]
          %v2199 = vld [vmem:[#allocation13 + $0x20] sm:$0xff]
          %v2200 = vld [vmem:[#allocation13 + $0x28] sm:$0xff]
          %v2201 = vld [vmem:[#allocation13 + $0x30] sm:$0xff]
          %v2202 = vld [vmem:[#allocation13 + $0x38] sm:$0xff]
          %v2203 = vld [vmem:[#allocation13 + $0x40] sm:$0xff]
          %v2204 = vld [vmem:[#allocation13 + $0x48] sm:$0xff]
          %v2205 = vld [vmem:[#allocation13 + $0x50] sm:$0xff]
          %v2206 = vld [vmem:[#allocation13 + $0x58] sm:$0xff]
          %v2207 = vld [vmem:[#allocation13 + $0x60] sm:$0xff]
          %v2208 = vld [vmem:[#allocation13 + $0x68] sm:$0xff]
          %v2209 = vld [vmem:[#allocation13 + $0x70] sm:$0xff]
          %v2210 = vld [vmem:[#allocation13 + $0x78] sm:$0xff]
          %v2211 = vld [vmem:[%s17] sm:$0x1]
          %v2213 = vlaneseq
          %v2214 = vshrl.u32 %v2213, 7
          %v2215 = vsub.s32 0, %v2214
          %v2216 = vrot.slane %v2211, %v2215
          %2218 = vmatprep.subr.mxu0 0.0
          %2219 = vmatpush1.msra.mxu0 %v2195
          %2220 = vmatprep.subr.mxu0 0.0
          %2221 = vmatpush1.msra.mxu0 %v2196
          %2222 = vmatprep.subr.mxu0 0.0
          %2223 = vmatpush1.msra.mxu0 %v2197
          %2224 = vmatprep.subr.mxu0 0.0
          %2225 = vmatpush1.msra.mxu0 %v2198
          %2226 = vmatprep.subr.mxu0 0.0
          %2227 = vmatpush1.msra.mxu0 %v2199
          %2228 = vmatprep.subr.mxu0 0.0
          %2229 = vmatpush1.msra.mxu0 %v2200
          %2230 = vmatprep.subr.mxu0 0.0
          %2231 = vmatpush1.msra.mxu0 %v2201
          %2232 = vmatprep.subr.mxu0 0.0
          %2233 = vmatpush1.msra.mxu0 %v2202
          %2234 = vmatprep.subr.mxu0 0.0
          %2235 = vmatpush1.msra.mxu0 %v2203
          %2236 = vmatprep.subr.mxu0 0.0
          %2237 = vmatpush1.msra.mxu0 %v2204
          %2238 = vmatprep.subr.mxu0 0.0
          %2239 = vmatpush1.msra.mxu0 %v2205
          %2240 = vmatprep.subr.mxu0 0.0
          %2241 = vmatpush1.msra.mxu0 %v2206
          %2242 = vmatprep.subr.mxu0 0.0
          %2243 = vmatpush1.msra.mxu0 %v2207
          %2244 = vmatprep.subr.mxu0 0.0
          %2245 = vmatpush1.msra.mxu0 %v2208
          %2246 = vmatprep.subr.mxu0 0.0
          %2247 = vmatpush1.msra.mxu0 %v2209
          %2248 = vmatprep.subr.mxu0 0.0
          %2249 = vmatpush1.msra.mxu0 %v2210
          %2250 = vmatprep.subr.mxu0 0.0
          %2251 = vmatpush1.msra.mxu0 0.0
          %2252 = vmatprep.subr.mxu0 0.0
          %2253 = vmatpush1.msra.mxu0 0.0
          %2254 = vmatprep.subr.mxu0 0.0
          %2255 = vmatpush1.msra.mxu0 0.0
          %2256 = vmatprep.subr.mxu0 0.0
          %2257 = vmatpush1.msra.mxu0 0.0
          %2258 = vmatprep.subr.mxu0 0.0
          %2259 = vmatpush1.msra.mxu0 0.0
          %2260 = vmatprep.subr.mxu0 0.0
          %2261 = vmatpush1.msra.mxu0 0.0
          %2262 = vmatprep.subr.mxu0 0.0
          %2263 = vmatpush1.msra.mxu0 0.0
          %2264 = vmatprep.subr.mxu0 0.0
          %2265 = vmatpush1.msra.mxu0 0.0
          %2266 = vmatprep.subr.mxu0 0.0
          %2267 = vmatpush1.msra.mxu0 0.0
          %2268 = vmatprep.subr.mxu0 0.0
          %2269 = vmatpush1.msra.mxu0 0.0
          %2270 = vmatprep.subr.mxu0 0.0
          %2271 = vmatpush1.msra.mxu0 0.0
          %2272 = vmatprep.subr.mxu0 0.0
          %2273 = vmatpush1.msra.mxu0 0.0
          %2274 = vmatprep.subr.mxu0 0.0
          %2275 = vmatpush1.msra.mxu0 0.0
          %2276 = vmatprep.subr.mxu0 0.0
          %2277 = vmatpush1.msra.mxu0 0.0
          %2278 = vmatprep.subr.mxu0 0.0
          %2279 = vmatpush1.msra.mxu0 0.0
          %2280 = vmatprep.subr.mxu0 0.0
          %2281 = vmatpush1.msra.mxu0 0.0
          %2282 = vmatprep.mubr.f32.mxu0 0.0
          %2283 = vmatmul.mubr.f32.gmra.mrb[0].mxu0 %v2194
          %v2284 = vpop.f32.mrb[0].mxu0
          %v2285 = vadd.f32 %v2216, %v2284
          %v2286 = vpop.f32.mrb[0].mxu0
          %2287 = vdwg.mxu0
          %v2288 = vmax.f32 %v2285, 0.0
          %v2289 = vld [vmem:[#allocation15] sm:$0xff]
          %v2290 = vld [vmem:[#allocation15 + $0x8] sm:$0xff]
          %v2291 = vld [vmem:[#allocation15 + $0x10] sm:$0xff]
          %v2292 = vld [vmem:[#allocation15 + $0x18] sm:$0xff]
          %v2293 = vld [vmem:[#allocation15 + $0x20] sm:$0xff]
          %v2294 = vld [vmem:[#allocation15 + $0x28] sm:$0xff]
          %v2295 = vld [vmem:[#allocation15 + $0x30] sm:$0xff]
          %v2296 = vld [vmem:[#allocation15 + $0x38] sm:$0xff]
          %v2297 = vld [vmem:[#allocation15 + $0x40] sm:$0xff]
          %v2298 = vld [vmem:[#allocation15 + $0x48] sm:$0xff]
          %v2299 = vld [vmem:[#allocation15 + $0x50] sm:$0xff]
          %v2300 = vld [vmem:[#allocation15 + $0x58] sm:$0xff]
          %v2301 = vld [vmem:[#allocation15 + $0x60] sm:$0xff]
          %v2302 = vld [vmem:[#allocation15 + $0x68] sm:$0xff]
          %v2303 = vld [vmem:[#allocation15 + $0x70] sm:$0xff]
          %v2304 = vld [vmem:[#allocation15 + $0x78] sm:$0xff]
          %v2305 = vld [vmem:[%s19] sm:$0x1]
          %v2307 = vlaneseq
          %v2308 = vshrl.u32 %v2307, 7
          %v2309 = vsub.s32 0, %v2308
          %v2310 = vrot.slane %v2305, %v2309
          %2312 = vmatprep.subr.mxu0 0.0
          %2313 = vmatpush1.msra.mxu0 %v2289
          %2314 = vmatprep.subr.mxu0 0.0
          %2315 = vmatpush1.msra.mxu0 %v2290
          %2316 = vmatprep.subr.mxu0 0.0
          %2317 = vmatpush1.msra.mxu0 %v2291
          %2318 = vmatprep.subr.mxu0 0.0
          %2319 = vmatpush1.msra.mxu0 %v2292
          %2320 = vmatprep.subr.mxu0 0.0
          %2321 = vmatpush1.msra.mxu0 %v2293
          %2322 = vmatprep.subr.mxu0 0.0
          %2323 = vmatpush1.msra.mxu0 %v2294
          %2324 = vmatprep.subr.mxu0 0.0
          %2325 = vmatpush1.msra.mxu0 %v2295
          %2326 = vmatprep.subr.mxu0 0.0
          %2327 = vmatpush1.msra.mxu0 %v2296
          %2328 = vmatprep.subr.mxu0 0.0
          %2329 = vmatpush1.msra.mxu0 %v2297
          %2330 = vmatprep.subr.mxu0 0.0
          %2331 = vmatpush1.msra.mxu0 %v2298
          %2332 = vmatprep.subr.mxu0 0.0
          %2333 = vmatpush1.msra.mxu0 %v2299
          %2334 = vmatprep.subr.mxu0 0.0
          %2335 = vmatpush1.msra.mxu0 %v2300
          %2336 = vmatprep.subr.mxu0 0.0
          %2337 = vmatpush1.msra.mxu0 %v2301
          %2338 = vmatprep.subr.mxu0 0.0
          %2339 = vmatpush1.msra.mxu0 %v2302
          %2340 = vmatprep.subr.mxu0 0.0
          %2341 = vmatpush1.msra.mxu0 %v2303
          %2342 = vmatprep.subr.mxu0 0.0
          %2343 = vmatpush1.msra.mxu0 %v2304
          %2344 = vmatprep.subr.mxu0 0.0
          %2345 = vmatpush1.msra.mxu0 0.0
          %2346 = vmatprep.subr.mxu0 0.0
          %2347 = vmatpush1.msra.mxu0 0.0
          %2348 = vmatprep.subr.mxu0 0.0
          %2349 = vmatpush1.msra.mxu0 0.0
          %2350 = vmatprep.subr.mxu0 0.0
          %2351 = vmatpush1.msra.mxu0 0.0
          %2352 = vmatprep.subr.mxu0 0.0
          %2353 = vmatpush1.msra.mxu0 0.0
          %2354 = vmatprep.subr.mxu0 0.0
          %2355 = vmatpush1.msra.mxu0 0.0
          %2356 = vmatprep.subr.mxu0 0.0
          %2357 = vmatpush1.msra.mxu0 0.0
          %2358 = vmatprep.subr.mxu0 0.0
          %2359 = vmatpush1.msra.mxu0 0.0
          %2360 = vmatprep.subr.mxu0 0.0
          %2361 = vmatpush1.msra.mxu0 0.0
          %2362 = vmatprep.subr.mxu0 0.0
          %2363 = vmatpush1.msra.mxu0 0.0
          %2364 = vmatprep.subr.mxu0 0.0
          %2365 = vmatpush1.msra.mxu0 0.0
          %2366 = vmatprep.subr.mxu0 0.0
          %2367 = vmatpush1.msra.mxu0 0.0
          %2368 = vmatprep.subr.mxu0 0.0
          %2369 = vmatpush1.msra.mxu0 0.0
          %2370 = vmatprep.subr.mxu0 0.0
          %2371 = vmatpush1.msra.mxu0 0.0
          %2372 = vmatprep.subr.mxu0 0.0
          %2373 = vmatpush1.msra.mxu0 0.0
          %2374 = vmatprep.subr.mxu0 0.0
          %2375 = vmatpush1.msra.mxu0 0.0
          %2376 = vmatprep.mubr.f32.mxu0 0.0
          %2377 = vmatmul.mubr.f32.gmra.mrb[0].mxu0 %v2288
          %v2378 = vpop.f32.mrb[0].mxu0
          %v2379 = vadd.f32 %v2310, %v2378
          %v2380 = vpop.f32.mrb[0].mxu0
          %2381 = vdwg.mxu0
          %v2382 = vmax.f32 %v2379, 0.0
          %v2383 = vld [vmem:[%s20] sm:$0xff]
          %v2384 = vld [vmem:[%s20 + $0x8] sm:$0xff]
          %v2385 = vld [vmem:[%s20 + $0x10] sm:$0xff]
          %v2386 = vld [vmem:[%s20 + $0x18] sm:$0xff]
          %v2387 = vld [vmem:[%s20 + $0x20] sm:$0xff]
          %v2388 = vld [vmem:[%s20 + $0x28] sm:$0xff]
          %v2389 = vld [vmem:[%s20 + $0x30] sm:$0xff]
          %v2390 = vld [vmem:[%s20 + $0x38] sm:$0xff]
          %v2391 = vld [vmem:[%s20 + $0x40] sm:$0xff]
          %v2392 = vld [vmem:[%s20 + $0x48] sm:$0xff]
          %v2393 = vld [vmem:[%s20 + $0x50] sm:$0xff]
          %v2394 = vld [vmem:[%s20 + $0x58] sm:$0xff]
          %v2395 = vld [vmem:[%s20 + $0x60] sm:$0xff]
          %v2396 = vld [vmem:[%s20 + $0x68] sm:$0xff]
          %v2397 = vld [vmem:[%s20 + $0x70] sm:$0xff]
          %v2398 = vld [vmem:[%s20 + $0x78] sm:$0xff]
          %v2399 = vld [vmem:[%s21] sm:$0x1]
          %v2401 = vlaneseq
          %v2402 = vshrl.u32 %v2401, 7
          %v2403 = vsub.s32 0, %v2402
          %v2404 = vrot.slane %v2399, %v2403
          %2406 = vmatprep.subr.mxu0 0.0
          %2407 = vmatpush1.msra.mxu0 %v2383
          %2408 = vmatprep.subr.mxu0 0.0
          %2409 = vmatpush1.msra.mxu0 %v2384
          %2410 = vmatprep.subr.mxu0 0.0
          %2411 = vmatpush1.msra.mxu0 %v2385
          %2412 = vmatprep.subr.mxu0 0.0
          %2413 = vmatpush1.msra.mxu0 %v2386
          %2414 = vmatprep.subr.mxu0 0.0
          %2415 = vmatpush1.msra.mxu0 %v2387
          %2416 = vmatprep.subr.mxu0 0.0
          %2417 = vmatpush1.msra.mxu0 %v2388
          %2418 = vmatprep.subr.mxu0 0.0
          %2419 = vmatpush1.msra.mxu0 %v2389
          %2420 = vmatprep.subr.mxu0 0.0
          %2421 = vmatpush1.msra.mxu0 %v2390
          %2422 = vmatprep.subr.mxu0 0.0
          %2423 = vmatpush1.msra.mxu0 %v2391
          %2424 = vmatprep.subr.mxu0 0.0
          %2425 = vmatpush1.msra.mxu0 %v2392
          %2426 = vmatprep.subr.mxu0 0.0
          %2427 = vmatpush1.msra.mxu0 %v2393
          %2428 = vmatprep.subr.mxu0 0.0
          %2429 = vmatpush1.msra.mxu0 %v2394
          %2430 = vmatprep.subr.mxu0 0.0
          %2431 = vmatpush1.msra.mxu0 %v2395
          %2432 = vmatprep.subr.mxu0 0.0
          %2433 = vmatpush1.msra.mxu0 %v2396
          %2434 = vmatprep.subr.mxu0 0.0
          %2435 = vmatpush1.msra.mxu0 %v2397
          %2436 = vmatprep.subr.mxu0 0.0
          %2437 = vmatpush1.msra.mxu0 %v2398
          %2438 = vmatprep.subr.mxu0 0.0
          %2439 = vmatpush1.msra.mxu0 0.0
          %2440 = vmatprep.subr.mxu0 0.0
          %2441 = vmatpush1.msra.mxu0 0.0
          %2442 = vmatprep.subr.mxu0 0.0
          %2443 = vmatpush1.msra.mxu0 0.0
          %2444 = vmatprep.subr.mxu0 0.0
          %2445 = vmatpush1.msra.mxu0 0.0
          %2446 = vmatprep.subr.mxu0 0.0
          %2447 = vmatpush1.msra.mxu0 0.0
          %2448 = vmatprep.subr.mxu0 0.0
          %2449 = vmatpush1.msra.mxu0 0.0
          %2450 = vmatprep.subr.mxu0 0.0
          %2451 = vmatpush1.msra.mxu0 0.0
          %2452 = vmatprep.subr.mxu0 0.0
          %2453 = vmatpush1.msra.mxu0 0.0
          %2454 = vmatprep.subr.mxu0 0.0
          %2455 = vmatpush1.msra.mxu0 0.0
          %2456 = vmatprep.subr.mxu0 0.0
          %2457 = vmatpush1.msra.mxu0 0.0
          %2458 = vmatprep.subr.mxu0 0.0
          %2459 = vmatpush1.msra.mxu0 0.0
          %2460 = vmatprep.subr.mxu0 0.0
          %2461 = vmatpush1.msra.mxu0 0.0
          %2462 = vmatprep.subr.mxu0 0.0
          %2463 = vmatpush1.msra.mxu0 0.0
          %2464 = vmatprep.subr.mxu0 0.0
          %2465 = vmatpush1.msra.mxu0 0.0
          %2466 = vmatprep.subr.mxu0 0.0
          %2467 = vmatpush1.msra.mxu0 0.0
          %2468 = vmatprep.subr.mxu0 0.0
          %2469 = vmatpush1.msra.mxu0 0.0
          %2470 = vmatprep.mubr.f32.mxu0 0.0
          %2471 = vmatmul.mubr.f32.gmra.mrb[0].mxu0 %v2382
          %v2472 = vpop.f32.mrb[0].mxu0
          %v2473 = vadd.f32 %v2404, %v2472
          %v2474 = vpop.f32.mrb[0].mxu0
          %2475 = vdwg.mxu0
          %v2476 = vlaneseq
          %v2477 = vand.u32 %v2476, 127
          %vm2478 = vcmp.lt.s32.totalorder %v2477, 1
          %v2479 = vmin.f32 %v2473, 20.0
          %v2480 = vmul.f32 %v2479, 1.442695
          %v2481 = vpow.pop %v2480
          %v2482 = vadd.f32 %v2481, 1.0
          %vm2483 = vcmp.eq.f32.partialorder %v2482, 1.0
          %v2484 = vsub.f32 %v2482, 1.0
          %v2485 = vsel %vm2483, 1.0, %v2484
          %v2486 = vlog2.pop %v2482
          %v2487 = vmul.f32 %v2486, 0.6931472
          %v2488 = vrcp.pop %v2485
          %v2489 = vmul.f32 %v2481, %v2488
          %v2490 = vmul.f32 %v2487, %v2489
          %v2491 = vsel %vm2483, %v2481, %v2490
          %vm2492 = vcmp.gt.f32.partialorder %v2473, 20.0
          %v2493 = vsel %vm2492, %v2473, %v2491
          %v2494 = vsel %vm2478, %v2473, %v2493
          %vm2495 = vcmask 9216
          %2496 = vst.msk [vmem:[#allocation16] sm:$0x3] %vm2495, %v2494
        $region148: #{tpu_custom_call.1} parent=107 // pred_fallthru
          _
        // Predicated region
        $region149: #{tpu_custom_call.1} parent=107 // pred_check
          %p2497 = pneg %p540
        $region150: #{tpu_custom_call.1} parent=107 // pred_check_branch
          %2499 = sbr.rel (%p2497) target = $region152
        $region151: #{tpu_custom_call.1} parent=107 // pred_region
          %s2501 = ssub.s32 32, 32
          %2502 = vsyncadd [#allocation6], %s2501
          %s2504 = sshll.u32 [#allocation16], 4
          %s2505 = int_to_ptr.vmem [resolvable:$true] %s2504
          %2507 = dma.vmem_to_hbm [thread:$0]  %s2505, 32, %s22, [#allocation6]
        $region152: #{tpu_custom_call.1} parent=107 // pred_fallthru
          _
        // Predicated region
        $region153: #{tpu_custom_call.1} parent=107 // pred_check
          %p2508 = pneg %p540
        $region154: #{tpu_custom_call.1} parent=107 // pred_check_branch
          %2510 = sbr.rel (%p2508) target = $region156
        $region155: #{tpu_custom_call.1} parent=107 // pred_region
          %2511 = dma.done [#allocation6], 32
        $region156: #{tpu_custom_call.1} parent=107 // pred_fallthru
          _
      $region108: #{tpu_custom_call.1} parent=5 // pred_fallthru
        _
      %p2512 = scmp.le.s32.totalorder 2, %s33
      // Predicated region
      $region157: #{tpu_custom_call.1} parent=5 // pred_check
        %p2513 = pneg %p2512
      $region158: #{tpu_custom_call.1} parent=5 // pred_check_branch
        %2515 = sbr.rel (%p2513) target = $region160
      $region159: #{tpu_custom_call.1} parent=5 // pred_region
        %s2516 = ssub.s32 %s33, 2
      $region160: #{tpu_custom_call.1} parent=5 // pred_fallthru
        _
    $region6: #{tpu_custom_call.1} parent=1 // loop_footer
      %s37 = sadd.s32 1, %s33
    $region7: #{tpu_custom_call.1} parent=1 // loop_footer_branch
      %32 = sbr.rel target = $region3
    $region8: #{tpu_custom_call.1} parent=1 // loop_exit
      _
    %2517 = vsyncpa [#allocation5], 1
    %s2518 = scalar_lea.sflag [#allocation5], 1
    %2519 = vsyncpa %s2518, 1
    %2520 = vsyncpa [#allocation8], 1
    %2521 = vsyncpa [#allocation11], 1
    %2522 = vsyncpa [#allocation14], 1
    %2523 = vsyncpa [#allocation6], 1
    %s2524 = scalar_lea.sflag [#allocation6], 1
    %2525 = vsyncpa %s2524, 1

</llo_original>
